<compile_context>
chip_gen: v7x
topology: tpu7x:2x2x1
jax: 0.10.0
libtpu: 0.0.40
codegen_flags: <defaults>
</compile_context>

<pallas_src>
import functools

import jax
import jax.numpy as jnp
from jax.experimental import pallas as pl
from jax.experimental.pallas import tpu as pltpu

_NEG_INF = -1e30  # finite "minus infinity": exp underflows to exactly 0, no NaNs


def _masked_softmax_last(s):
    m = jnp.max(s, axis=-1, keepdims=True)
    e = jnp.exp(s - m)
    denom = jnp.sum(e, axis=-1, keepdims=True)
    # exact reciprocal (approx=True could exceed the 1e-4 check tolerance)
    return e * pl.reciprocal(denom, approx=False)


def _kendalltau_gate_kernel(h, w, c, z_ref, y_ref, wqkv_ref, bias_ref, mask_ref,
                            o_ref):
    # z_ref / y_ref : (b, c, h*w)   channels-major, flat pixel (lane) axis
    # wqkv_ref      : (2, 3c, c)    packed [wq; wk; wv] per RowAttention module
    # bias_ref      : (2, 3c, 1)    packed [bq; bk; bv] per module (column vector)
    # mask_ref      : (h*w, h*w)    0 on per-row diagonal 16x16 blocks, -1e30 else
    # o_ref         : (b, c, h*w)   lane-dense output (h*w = 128 lanes)
    hw = h * w
    mask = mask_ref[...]
    nb = z_ref.shape[0]

    for bb in range(nb):                      # 2 batches, unrolled
        out1_cm = jnp.zeros((c, hw), jnp.float32)   # branch-1 accum, channels-major
        g_tot = jnp.zeros((c, hw), jnp.float32)     # branch-2 accum, layout [i,(row,cc)]

        for m, x_ref in enumerate((z_ref, y_ref)):  # RowAttention1(z), RowAttention2(y)
            x_cm = x_ref[bb]                                        # (c, hw)
            # fused Q/K/V 1x1-conv projection, channels-major: one MXU matmul
            p_cm = jnp.dot(wqkv_ref[m], x_cm,
                           preferred_element_type=jnp.float32) + bias_ref[m]  # (3c, hw)
            # sublane-aligned split (offsets 0 / c / 2c are multiples of 8)
            q_cm = p_cm[0:c, :]                                     # (c, hw)
            k_cm = p_cm[c:2 * c, :]                                 # (c, hw)
            v_cm = p_cm[2 * c:3 * c, :]                             # (c, hw)
            q_pm = q_cm.T                                           # (hw, c) pixel-major

            # --- branch 1: per-row attn = softmax(Q^T K); out1 = V @ attn^T ---
            # block-diagonal mask restricts attention to each image row.
            s1 = jnp.dot(q_pm, k_cm, preferred_element_type=jnp.float32) + mask
            a1 = _masked_softmax_last(s1)                           # (hw, hw)
            # out1_cm[cc, i] += sum_j v_cm[cc, j] * a1[i, j]
            out1_cm = out1_cm + jax.lax.dot_general(
                v_cm, a1, (((1,), (1,)), ((), ())),
                preferred_element_type=jnp.float32)                 # (c, hw)

            # --- branch 2: attn2 = softmax(Q^T V); out2 = attn2^T @ Q^T (.view'd) ---
            s2 = jnp.dot(q_pm, v_cm, preferred_element_type=jnp.float32) + mask
            a2 = _masked_softmax_last(s2)                           # (hw, hw)
            # g[i, row*w + cc] = sum_k q_cm[i, row*w + k] * a2[row*w + k, row*w + cc]
            g_tot = g_tot + jnp.dot(q_cm, a2,
                                    preferred_element_type=jnp.float32)  # (c, hw)

        # branch-2 relabel forced by torch's raw `.view(b, h, -1, w)` with
        # q_k_dim == width: g_tot is laid out [i, (row, cc)]; convert it to the
        # channels-major [cc, (row, i)] layout of branch 1 (two tiny transposes
        # + one minor-dim swap per batch; done once after summing both modules).
        u2 = g_tot.T.reshape(h, w, c)          # [row, cc, i]   (w == c)
        u2 = jnp.swapaxes(u2, 1, 2)            # [row, i, cc]
        out2_cm = u2.reshape(hw, c).T          # (c, hw) = [cc, (row, i)]

        o_ref[bb] = out1_cm + out2_cm          # lane-dense (c, 128) store


def kendalltau_gate(z, y, params):
    b, c, h, w = z.shape
    qk = params["wq1"].shape[0]
    if qk != c or qk != w:
        # torch's raw `.view(b, h, -1, w)` on the second attention branch is only
        # an index relabeling when q_k_dim == in_dim == width; fail loudly for
        # other shapes instead of silently producing wrong results.
        raise NotImplementedError(
            "kendalltau_gate kernel requires q_k_dim == in_dim == width "
            f"(got q_k_dim={qk}, in_dim={c}, width={w})")
    hw = h * w

    # free (layout-preserving) reshapes only — no wrapper transposes
    z2 = z.reshape(b, c, hw)
    y2 = y.reshape(b, c, hw)

    # pack the 12 weight/bias arrays into 2 kernel inputs
    def _pack(mod):
        wcat = jnp.concatenate(
            [params["wq" + mod], params["wk" + mod], params["wv" + mod]],
            axis=0)                                       # (3c, c)
        bcat = jnp.concatenate(
            [params["bq" + mod].reshape(-1, 1),
             params["bk" + mod].reshape(-1, 1),
             params["bv" + mod].reshape(-1, 1)], axis=0)  # (3c, 1)
        return wcat, bcat

    wm1, bm1 = _pack("1")
    wm2, bm2 = _pack("2")
    w_all = jnp.stack([wm1, wm2])                         # (2, 3c, c)
    b_all = jnp.stack([bm1, bm2])                         # (2, 3c, 1)

    # additive block-diagonal mask: pixels attend only within their own image row
    blk = jnp.arange(hw, dtype=jnp.int32) // w
    mask = jnp.where(blk[:, None] == blk[None, :], 0.0,
                     _NEG_INF).astype(jnp.float32)        # (hw, hw)

    kernel = functools.partial(_kendalltau_gate_kernel, h, w, c)

    out = pl.pallas_call(
        kernel,
        out_shape=jax.ShapeDtypeStruct((b, c, hw), jnp.float32),
        grid_spec=pltpu.PrefetchScalarGridSpec(
            num_scalar_prefetch=0,
            grid=(1,),                                    # single step: no per-step
            in_specs=[                                    # pipeline overhead on v5e/v6e
                pl.BlockSpec((b, c, hw), lambda i: (0, 0, 0)),
                pl.BlockSpec((b, c, hw), lambda i: (0, 0, 0)),
                pl.BlockSpec((2, 3 * c, c), lambda i: (0, 0, 0)),
                pl.BlockSpec((2, 3 * c, 1), lambda i: (0, 0, 0)),
                pl.BlockSpec((hw, hw), lambda i: (0, 0)),
            ],
            out_specs=pl.BlockSpec((b, c, hw), lambda i: (0, 0, 0)),
        ),
        compiler_params=pltpu.CompilerParams(
            dimension_semantics=("arbitrary",)),
    )(z2, y2, w_all, b_all, mask)

    return out.reshape(b, c, h, w)


# ----------------------- pure-JAX reference (for checking) -----------------------
def _row_attention_ref(x, wq, bq, wk, bk, wv, bv):
    b, c, h, w = x.shape
    qk = wq.shape[0]
    Q = jnp.einsum('bchw,qc->bqhw', x, wq) + bq[None, :, None, None]
    K = jnp.einsum('bchw,qc->bqhw', x, wk) + bk[None, :, None, None]
    V = jnp.einsum('bchw,qc->bqhw', x, wv) + bv[None, :, None, None]
    Qr = jnp.transpose(Q, (0, 2, 1, 3)).reshape(b * h, qk, w).transpose(0, 2, 1)
    Kr = jnp.transpose(K, (0, 2, 1, 3)).reshape(b * h, qk, w)
    Vr = jnp.transpose(V, (0, 2, 1, 3)).reshape(b * h, c, w)
    attn = jax.nn.softmax(jnp.matmul(Qr, Kr), axis=2)
    out = jnp.matmul(Vr, jnp.transpose(attn, (0, 2, 1)))
    out = jnp.transpose(out.reshape(b, h, c, w), (0, 2, 1, 3))
    attn2 = jax.nn.softmax(jnp.matmul(Qr, Vr), axis=2)
    out2 = jnp.matmul(jnp.transpose(attn2, (0, 2, 1)), Qr)
    out2 = jnp.transpose(out2.reshape(b, h, -1, w), (0, 2, 1, 3))
    return out + out2


def kendalltau_gate_ref(z, y, p):
    rz = _row_attention_ref(z, p["wq1"], p["bq1"][0], p["wk1"], p["bk1"][0],
                            p["wv1"], p["bv1"][0])
    ry = _row_attention_ref(y, p["wq2"], p["bq2"][0], p["wk2"], p["bk2"][0],
                            p["wv2"], p["bv2"][0])
    return rz + ry


if __name__ == "__main__":
    # Small shapes: inchannel == q_k_dim == width == 16 (required for the torch
    # .view raw-reshape to be a pure relabeling), height 8, batch 2.
    B, C, H, W = 2, 16, 8, 16
    QK = C  # RowAttention(inchannel, inchannel)

    key = jax.random.PRNGKey(0)
    ks = jax.random.split(key, 16)
    z = jax.random.normal(ks[0], (B, C, H, W), dtype=jnp.float32)
    y = jax.random.normal(ks[1], (B, C, H, W), dtype=jnp.float32)

    def mk_w(k, shape, scale=0.1):
        return scale * jax.random.normal(k, shape, dtype=jnp.float32)

    params = {
        # RowAttention 1
        "wq1": mk_w(ks[2], (QK, C)), "bq1": mk_w(ks[3], (1, QK)),
        "wk1": mk_w(ks[4], (QK, C)), "bk1": mk_w(ks[5], (1, QK)),
        "wv1": mk_w(ks[6], (C, C)),  "bv1": mk_w(ks[7], (1, C)),
        # RowAttention 2
        "wq2": mk_w(ks[8], (QK, C)),  "bq2": mk_w(ks[9], (1, QK)),
        "wk2": mk_w(ks[10], (QK, C)), "bk2": mk_w(ks[11], (1, QK)),
        "wv2": mk_w(ks[12], (C, C)),  "bv2": mk_w(ks[13], (1, C)),
    }

    out = kendalltau_gate(z, y, params)
    out = jax.block_until_ready(out)

    ref = kendalltau_gate_ref(z, y, params)
    assert out.shape == (B, C, H, W), out.shape
    assert jnp.allclose(out, ref, rtol=1e-4, atol=1e-4), \
        float(jnp.max(jnp.abs(out - ref)))

    print("KERNEL_OK")
</pallas_src>

<mosaic_0001>
module attributes {stable_mosaic.version = 11 : i64} {
  func.func @_kendalltau_gate_kernel(%arg0: i32, %arg1: memref<2x16x128xf32, #tpu.memory_space<vmem>>, %arg2: memref<2x16x128xf32, #tpu.memory_space<vmem>>, %arg3: memref<2x48x16xf32, #tpu.memory_space<vmem>>, %arg4: memref<2x48x1xf32, #tpu.memory_space<vmem>>, %arg5: memref<128x128xf32, #tpu.memory_space<vmem>>, %arg6: memref<2x16x128xf32, #tpu.memory_space<vmem>>) attributes {dimension_semantics = [#tpu.dimension_semantics<arbitrary>], iteration_bounds = array<i64: 1>, scalar_prefetch = 0 : i64, scratch_operands = 0 : i64, tpu.core_type = #tpu.core_type<tc>, window_params = [{pipeline_mode = #tpu.pipeline_mode<synchronous>, transform_indices = @transform_0, window_bounds = array<i64: 2, 16, 128>}, {pipeline_mode = #tpu.pipeline_mode<synchronous>, transform_indices = @transform_1, window_bounds = array<i64: 2, 16, 128>}, {pipeline_mode = #tpu.pipeline_mode<synchronous>, transform_indices = @transform_2, window_bounds = array<i64: 2, 48, 16>}, {pipeline_mode = #tpu.pipeline_mode<synchronous>, transform_indices = @transform_3, window_bounds = array<i64: 2, 48, 1>}, {pipeline_mode = #tpu.pipeline_mode<synchronous>, transform_indices = @transform_4, window_bounds = array<i64: 128, 128>}, {pipeline_mode = #tpu.pipeline_mode<synchronous>, transform_indices = @transform_5, window_bounds = array<i64: 2, 16, 128>}]} {
    %c0 = arith.constant 0 : index
    %c0_0 = arith.constant 0 : index
    %0 = vector.load %arg5[%c0, %c0_0] : memref<128x128xf32, #tpu.memory_space<vmem>>, vector<128x128xf32>
    %cst = arith.constant 0.000000e+00 : f32
    %1 = vector.broadcast %cst : f32 to vector<16x128xf32>
    %cst_1 = arith.constant 0.000000e+00 : f32
    %2 = vector.broadcast %cst_1 : f32 to vector<16x128xf32>
    %c0_2 = arith.constant 0 : index
    %c0_3 = arith.constant 0 : index
    %c0_4 = arith.constant 0 : index
    %3 = vector.load %arg1[%c0_2, %c0_3, %c0_4] : memref<2x16x128xf32, #tpu.memory_space<vmem>>, vector<1x16x128xf32>
    %4 = vector.shape_cast %3 : vector<1x16x128xf32> to vector<16x128xf32>
    %c0_5 = arith.constant 0 : index
    %c0_6 = arith.constant 0 : index
    %c0_7 = arith.constant 0 : index
    %5 = vector.load %arg3[%c0_5, %c0_6, %c0_7] : memref<2x48x16xf32, #tpu.memory_space<vmem>>, vector<1x48x16xf32>
    %6 = vector.shape_cast %5 : vector<1x48x16xf32> to vector<48x16xf32>
    %cst_8 = arith.constant dense<0.000000e+00> : vector<48x128xf32>
    %7 = tpu.matmul %6, %4, %cst_8 {dimension_numbers = #tpu.dot_dimension_numbers<[1], [0], [0], [1], [0, 0, 1, 1], [], []>} : vector<48x16xf32>, vector<16x128xf32>, vector<48x128xf32> -> vector<48x128xf32>
    %c0_9 = arith.constant 0 : index
    %c0_10 = arith.constant 0 : index
    %c0_11 = arith.constant 0 : index
    %8 = vector.load %arg4[%c0_9, %c0_10, %c0_11] : memref<2x48x1xf32, #tpu.memory_space<vmem>>, vector<1x48x1xf32>
    %9 = vector.shape_cast %8 : vector<1x48x1xf32> to vector<48x1xf32>
    %10 = vector.broadcast %9 : vector<48x1xf32> to vector<48x128xf32>
    %11 = arith.addf %7, %10 : vector<48x128xf32>
    %12 = vector.extract_strided_slice %11 {offsets = [0, 0], sizes = [16, 128], strides = [1, 1]} : vector<48x128xf32> to vector<16x128xf32>
    %13 = vector.extract_strided_slice %11 {offsets = [16, 0], sizes = [16, 128], strides = [1, 1]} : vector<48x128xf32> to vector<16x128xf32>
    %14 = vector.extract_strided_slice %11 {offsets = [32, 0], sizes = [16, 128], strides = [1, 1]} : vector<48x128xf32> to vector<16x128xf32>
    %15 = tpu.transpose %12, [1, 0] : vector<16x128xf32> -> vector<128x16xf32>
    %cst_12 = arith.constant dense<0.000000e+00> : vector<128x128xf32>
    %16 = tpu.matmul %15, %13, %cst_12 {dimension_numbers = #tpu.dot_dimension_numbers<[1], [0], [0], [1], [0, 0, 1, 1], [], []>} : vector<128x16xf32>, vector<16x128xf32>, vector<128x128xf32> -> vector<128x128xf32>
    %17 = arith.addf %16, %0 : vector<128x128xf32>
    %cst_13 = arith.constant dense<0xFF800000> : vector<128xf32>
    %18 = vector.multi_reduction <maximumf>, %17, %cst_13 [1] : vector<128x128xf32> to vector<128xf32>
    %19 = vector.shape_cast %18 : vector<128xf32> to vector<128x1xf32>
    %20 = vector.broadcast %19 : vector<128x1xf32> to vector<128x128xf32>
    %21 = arith.subf %17, %20 : vector<128x128xf32>
    %22 = math.exp %21 : vector<128x128xf32>
    %cst_14 = arith.constant dense<0.000000e+00> : vector<128xf32>
    %23 = vector.multi_reduction <add>, %22, %cst_14 [1] : vector<128x128xf32> to vector<128xf32>
    %24 = vector.shape_cast %23 : vector<128xf32> to vector<128x1xf32>
    %25 = tpu.reciprocal %24 : vector<128x1xf32> -> vector<128x1xf32>
    %26 = vector.broadcast %25 : vector<128x1xf32> to vector<128x128xf32>
    %27 = arith.mulf %22, %26 : vector<128x128xf32>
    %cst_15 = arith.constant dense<0.000000e+00> : vector<16x128xf32>
    %28 = tpu.matmul %14, %27, %cst_15 {dimension_numbers = #tpu.dot_dimension_numbers<[1], [1], [0], [0], [0, 0, 1, 0], [], []>} : vector<16x128xf32>, vector<128x128xf32>, vector<16x128xf32> -> vector<16x128xf32>
    %29 = arith.addf %1, %28 : vector<16x128xf32>
    %cst_16 = arith.constant dense<0.000000e+00> : vector<128x128xf32>
    %30 = tpu.matmul %15, %14, %cst_16 {dimension_numbers = #tpu.dot_dimension_numbers<[1], [0], [0], [1], [0, 0, 1, 1], [], []>} : vector<128x16xf32>, vector<16x128xf32>, vector<128x128xf32> -> vector<128x128xf32>
    %31 = arith.addf %30, %0 : vector<128x128xf32>
    %cst_17 = arith.constant dense<0xFF800000> : vector<128xf32>
    %32 = vector.multi_reduction <maximumf>, %31, %cst_17 [1] : vector<128x128xf32> to vector<128xf32>
    %33 = vector.shape_cast %32 : vector<128xf32> to vector<128x1xf32>
    %34 = vector.broadcast %33 : vector<128x1xf32> to vector<128x128xf32>
    %35 = arith.subf %31, %34 : vector<128x128xf32>
    %36 = math.exp %35 : vector<128x128xf32>
    %cst_18 = arith.constant dense<0.000000e+00> : vector<128xf32>
    %37 = vector.multi_reduction <add>, %36, %cst_18 [1] : vector<128x128xf32> to vector<128xf32>
    %38 = vector.shape_cast %37 : vector<128xf32> to vector<128x1xf32>
    %39 = tpu.reciprocal %38 : vector<128x1xf32> -> vector<128x1xf32>
    %40 = vector.broadcast %39 : vector<128x1xf32> to vector<128x128xf32>
    %41 = arith.mulf %36, %40 : vector<128x128xf32>
    %cst_19 = arith.constant dense<0.000000e+00> : vector<16x128xf32>
    %42 = tpu.matmul %12, %41, %cst_19 {dimension_numbers = #tpu.dot_dimension_numbers<[1], [0], [0], [1], [0, 0, 1, 1], [], []>} : vector<16x128xf32>, vector<128x128xf32>, vector<16x128xf32> -> vector<16x128xf32>
    %43 = arith.addf %2, %42 : vector<16x128xf32>
    %c0_20 = arith.constant 0 : index
    %c0_21 = arith.constant 0 : index
    %c0_22 = arith.constant 0 : index
    %44 = vector.load %arg2[%c0_20, %c0_21, %c0_22] : memref<2x16x128xf32, #tpu.memory_space<vmem>>, vector<1x16x128xf32>
    %45 = vector.shape_cast %44 : vector<1x16x128xf32> to vector<16x128xf32>
    %c1 = arith.constant 1 : index
    %c0_23 = arith.constant 0 : index
    %c0_24 = arith.constant 0 : index
    %46 = vector.load %arg3[%c1, %c0_23, %c0_24] : memref<2x48x16xf32, #tpu.memory_space<vmem>>, vector<1x48x16xf32>
    %47 = vector.shape_cast %46 : vector<1x48x16xf32> to vector<48x16xf32>
    %cst_25 = arith.constant dense<0.000000e+00> : vector<48x128xf32>
    %48 = tpu.matmul %47, %45, %cst_25 {dimension_numbers = #tpu.dot_dimension_numbers<[1], [0], [0], [1], [0, 0, 1, 1], [], []>} : vector<48x16xf32>, vector<16x128xf32>, vector<48x128xf32> -> vector<48x128xf32>
    %c1_26 = arith.constant 1 : index
    %c0_27 = arith.constant 0 : index
    %c0_28 = arith.constant 0 : index
    %49 = vector.load %arg4[%c1_26, %c0_27, %c0_28] : memref<2x48x1xf32, #tpu.memory_space<vmem>>, vector<1x48x1xf32>
    %50 = vector.shape_cast %49 : vector<1x48x1xf32> to vector<48x1xf32>
    %51 = vector.broadcast %50 : vector<48x1xf32> to vector<48x128xf32>
    %52 = arith.addf %48, %51 : vector<48x128xf32>
    %53 = vector.extract_strided_slice %52 {offsets = [0, 0], sizes = [16, 128], strides = [1, 1]} : vector<48x128xf32> to vector<16x128xf32>
    %54 = vector.extract_strided_slice %52 {offsets = [16, 0], sizes = [16, 128], strides = [1, 1]} : vector<48x128xf32> to vector<16x128xf32>
    %55 = vector.extract_strided_slice %52 {offsets = [32, 0], sizes = [16, 128], strides = [1, 1]} : vector<48x128xf32> to vector<16x128xf32>
    %56 = tpu.transpose %53, [1, 0] : vector<16x128xf32> -> vector<128x16xf32>
    %cst_29 = arith.constant dense<0.000000e+00> : vector<128x128xf32>
    %57 = tpu.matmul %56, %54, %cst_29 {dimension_numbers = #tpu.dot_dimension_numbers<[1], [0], [0], [1], [0, 0, 1, 1], [], []>} : vector<128x16xf32>, vector<16x128xf32>, vector<128x128xf32> -> vector<128x128xf32>
    %58 = arith.addf %57, %0 : vector<128x128xf32>
    %cst_30 = arith.constant dense<0xFF800000> : vector<128xf32>
    %59 = vector.multi_reduction <maximumf>, %58, %cst_30 [1] : vector<128x128xf32> to vector<128xf32>
    %60 = vector.shape_cast %59 : vector<128xf32> to vector<128x1xf32>
    %61 = vector.broadcast %60 : vector<128x1xf32> to vector<128x128xf32>
    %62 = arith.subf %58, %61 : vector<128x128xf32>
    %63 = math.exp %62 : vector<128x128xf32>
    %cst_31 = arith.constant dense<0.000000e+00> : vector<128xf32>
    %64 = vector.multi_reduction <add>, %63, %cst_31 [1] : vector<128x128xf32> to vector<128xf32>
    %65 = vector.shape_cast %64 : vector<128xf32> to vector<128x1xf32>
    %66 = tpu.reciprocal %65 : vector<128x1xf32> -> vector<128x1xf32>
    %67 = vector.broadcast %66 : vector<128x1xf32> to vector<128x128xf32>
    %68 = arith.mulf %63, %67 : vector<128x128xf32>
    %cst_32 = arith.constant dense<0.000000e+00> : vector<16x128xf32>
    %69 = tpu.matmul %55, %68, %cst_32 {dimension_numbers = #tpu.dot_dimension_numbers<[1], [1], [0], [0], [0, 0, 1, 0], [], []>} : vector<16x128xf32>, vector<128x128xf32>, vector<16x128xf32> -> vector<16x128xf32>
    %70 = arith.addf %29, %69 : vector<16x128xf32>
    %cst_33 = arith.constant dense<0.000000e+00> : vector<128x128xf32>
    %71 = tpu.matmul %56, %55, %cst_33 {dimension_numbers = #tpu.dot_dimension_numbers<[1], [0], [0], [1], [0, 0, 1, 1], [], []>} : vector<128x16xf32>, vector<16x128xf32>, vector<128x128xf32> -> vector<128x128xf32>
    %72 = arith.addf %71, %0 : vector<128x128xf32>
    %cst_34 = arith.constant dense<0xFF800000> : vector<128xf32>
    %73 = vector.multi_reduction <maximumf>, %72, %cst_34 [1] : vector<128x128xf32> to vector<128xf32>
    %74 = vector.shape_cast %73 : vector<128xf32> to vector<128x1xf32>
    %75 = vector.broadcast %74 : vector<128x1xf32> to vector<128x128xf32>
    %76 = arith.subf %72, %75 : vector<128x128xf32>
    %77 = math.exp %76 : vector<128x128xf32>
    %cst_35 = arith.constant dense<0.000000e+00> : vector<128xf32>
    %78 = vector.multi_reduction <add>, %77, %cst_35 [1] : vector<128x128xf32> to vector<128xf32>
    %79 = vector.shape_cast %78 : vector<128xf32> to vector<128x1xf32>
    %80 = tpu.reciprocal %79 : vector<128x1xf32> -> vector<128x1xf32>
    %81 = vector.broadcast %80 : vector<128x1xf32> to vector<128x128xf32>
    %82 = arith.mulf %77, %81 : vector<128x128xf32>
    %cst_36 = arith.constant dense<0.000000e+00> : vector<16x128xf32>
    %83 = tpu.matmul %53, %82, %cst_36 {dimension_numbers = #tpu.dot_dimension_numbers<[1], [0], [0], [1], [0, 0, 1, 1], [], []>} : vector<16x128xf32>, vector<128x128xf32>, vector<16x128xf32> -> vector<16x128xf32>
    %84 = arith.addf %43, %83 : vector<16x128xf32>
    %85 = tpu.transpose %84, [1, 0] : vector<16x128xf32> -> vector<128x16xf32>
    %86 = vector.shape_cast %85 : vector<128x16xf32> to vector<8x16x16xf32>
    %87 = tpu.transpose %86, [0, 2, 1] : vector<8x16x16xf32> -> vector<8x16x16xf32>
    %88 = vector.shape_cast %87 : vector<8x16x16xf32> to vector<128x16xf32>
    %89 = tpu.transpose %88, [1, 0] : vector<128x16xf32> -> vector<16x128xf32>
    %90 = arith.addf %70, %89 : vector<16x128xf32>
    %c0_37 = arith.constant 0 : index
    %c0_38 = arith.constant 0 : index
    %c0_39 = arith.constant 0 : index
    %91 = vector.load %arg6[%c0_37, %c0_38, %c0_39] : memref<2x16x128xf32, #tpu.memory_space<vmem>>, vector<1x16x128xf32>
    %92 = vector.shape_cast %91 : vector<1x16x128xf32> to vector<16x128xf32>
    %93 = vector.shape_cast %90 : vector<16x128xf32> to vector<1x16x128xf32>
    tpu.vector_store %arg6[%c0_37, %c0_38, %c0_39], %93 {strides = array<i32>} : memref<2x16x128xf32, #tpu.memory_space<vmem>>, vector<1x16x128xf32>,
    %cst_40 = arith.constant 0.000000e+00 : f32
    %94 = vector.broadcast %cst_40 : f32 to vector<16x128xf32>
    %cst_41 = arith.constant 0.000000e+00 : f32
    %95 = vector.broadcast %cst_41 : f32 to vector<16x128xf32>
    %c1_42 = arith.constant 1 : index
    %c0_43 = arith.constant 0 : index
    %c0_44 = arith.constant 0 : index
    %96 = vector.load %arg1[%c1_42, %c0_43, %c0_44] : memref<2x16x128xf32, #tpu.memory_space<vmem>>, vector<1x16x128xf32>
    %97 = vector.shape_cast %96 : vector<1x16x128xf32> to vector<16x128xf32>
    %c0_45 = arith.constant 0 : index
    %c0_46 = arith.constant 0 : index
    %c0_47 = arith.constant 0 : index
    %98 = vector.load %arg3[%c0_45, %c0_46, %c0_47] : memref<2x48x16xf32, #tpu.memory_space<vmem>>, vector<1x48x16xf32>
    %99 = vector.shape_cast %98 : vector<1x48x16xf32> to vector<48x16xf32>
    %cst_48 = arith.constant dense<0.000000e+00> : vector<48x128xf32>
    %100 = tpu.matmul %99, %97, %cst_48 {dimension_numbers = #tpu.dot_dimension_numbers<[1], [0], [0], [1], [0, 0, 1, 1], [], []>} : vector<48x16xf32>, vector<16x128xf32>, vector<48x128xf32> -> vector<48x128xf32>
    %c0_49 = arith.constant 0 : index
    %c0_50 = arith.constant 0 : index
    %c0_51 = arith.constant 0 : index
    %101 = vector.load %arg4[%c0_49, %c0_50, %c0_51] : memref<2x48x1xf32, #tpu.memory_space<vmem>>, vector<1x48x1xf32>
    %102 = vector.shape_cast %101 : vector<1x48x1xf32> to vector<48x1xf32>
    %103 = vector.broadcast %102 : vector<48x1xf32> to vector<48x128xf32>
    %104 = arith.addf %100, %103 : vector<48x128xf32>
    %105 = vector.extract_strided_slice %104 {offsets = [0, 0], sizes = [16, 128], strides = [1, 1]} : vector<48x128xf32> to vector<16x128xf32>
    %106 = vector.extract_strided_slice %104 {offsets = [16, 0], sizes = [16, 128], strides = [1, 1]} : vector<48x128xf32> to vector<16x128xf32>
    %107 = vector.extract_strided_slice %104 {offsets = [32, 0], sizes = [16, 128], strides = [1, 1]} : vector<48x128xf32> to vector<16x128xf32>
    %108 = tpu.transpose %105, [1, 0] : vector<16x128xf32> -> vector<128x16xf32>
    %cst_52 = arith.constant dense<0.000000e+00> : vector<128x128xf32>
    %109 = tpu.matmul %108, %106, %cst_52 {dimension_numbers = #tpu.dot_dimension_numbers<[1], [0], [0], [1], [0, 0, 1, 1], [], []>} : vector<128x16xf32>, vector<16x128xf32>, vector<128x128xf32> -> vector<128x128xf32>
    %110 = arith.addf %109, %0 : vector<128x128xf32>
    %cst_53 = arith.constant dense<0xFF800000> : vector<128xf32>
    %111 = vector.multi_reduction <maximumf>, %110, %cst_53 [1] : vector<128x128xf32> to vector<128xf32>
    %112 = vector.shape_cast %111 : vector<128xf32> to vector<128x1xf32>
    %113 = vector.broadcast %112 : vector<128x1xf32> to vector<128x128xf32>
    %114 = arith.subf %110, %113 : vector<128x128xf32>
    %115 = math.exp %114 : vector<128x128xf32>
    %cst_54 = arith.constant dense<0.000000e+00> : vector<128xf32>
    %116 = vector.multi_reduction <add>, %115, %cst_54 [1] : vector<128x128xf32> to vector<128xf32>
    %117 = vector.shape_cast %116 : vector<128xf32> to vector<128x1xf32>
    %118 = tpu.reciprocal %117 : vector<128x1xf32> -> vector<128x1xf32>
    %119 = vector.broadcast %118 : vector<128x1xf32> to vector<128x128xf32>
    %120 = arith.mulf %115, %119 : vector<128x128xf32>
    %cst_55 = arith.constant dense<0.000000e+00> : vector<16x128xf32>
    %121 = tpu.matmul %107, %120, %cst_55 {dimension_numbers = #tpu.dot_dimension_numbers<[1], [1], [0], [0], [0, 0, 1, 0], [], []>} : vector<16x128xf32>, vector<128x128xf32>, vector<16x128xf32> -> vector<16x128xf32>
    %122 = arith.addf %94, %121 : vector<16x128xf32>
    %cst_56 = arith.constant dense<0.000000e+00> : vector<128x128xf32>
    %123 = tpu.matmul %108, %107, %cst_56 {dimension_numbers = #tpu.dot_dimension_numbers<[1], [0], [0], [1], [0, 0, 1, 1], [], []>} : vector<128x16xf32>, vector<16x128xf32>, vector<128x128xf32> -> vector<128x128xf32>
    %124 = arith.addf %123, %0 : vector<128x128xf32>
    %cst_57 = arith.constant dense<0xFF800000> : vector<128xf32>
    %125 = vector.multi_reduction <maximumf>, %124, %cst_57 [1] : vector<128x128xf32> to vector<128xf32>
    %126 = vector.shape_cast %125 : vector<128xf32> to vector<128x1xf32>
    %127 = vector.broadcast %126 : vector<128x1xf32> to vector<128x128xf32>
    %128 = arith.subf %124, %127 : vector<128x128xf32>
    %129 = math.exp %128 : vector<128x128xf32>
    %cst_58 = arith.constant dense<0.000000e+00> : vector<128xf32>
    %130 = vector.multi_reduction <add>, %129, %cst_58 [1] : vector<128x128xf32> to vector<128xf32>
    %131 = vector.shape_cast %130 : vector<128xf32> to vector<128x1xf32>
    %132 = tpu.reciprocal %131 : vector<128x1xf32> -> vector<128x1xf32>
    %133 = vector.broadcast %132 : vector<128x1xf32> to vector<128x128xf32>
    %134 = arith.mulf %129, %133 : vector<128x128xf32>
    %cst_59 = arith.constant dense<0.000000e+00> : vector<16x128xf32>
    %135 = tpu.matmul %105, %134, %cst_59 {dimension_numbers = #tpu.dot_dimension_numbers<[1], [0], [0], [1], [0, 0, 1, 1], [], []>} : vector<16x128xf32>, vector<128x128xf32>, vector<16x128xf32> -> vector<16x128xf32>
    %136 = arith.addf %95, %135 : vector<16x128xf32>
    %c1_60 = arith.constant 1 : index
    %c0_61 = arith.constant 0 : index
    %c0_62 = arith.constant 0 : index
    %137 = vector.load %arg2[%c1_60, %c0_61, %c0_62] : memref<2x16x128xf32, #tpu.memory_space<vmem>>, vector<1x16x128xf32>
    %138 = vector.shape_cast %137 : vector<1x16x128xf32> to vector<16x128xf32>
    %c1_63 = arith.constant 1 : index
    %c0_64 = arith.constant 0 : index
    %c0_65 = arith.constant 0 : index
    %139 = vector.load %arg3[%c1_63, %c0_64, %c0_65] : memref<2x48x16xf32, #tpu.memory_space<vmem>>, vector<1x48x16xf32>
    %140 = vector.shape_cast %139 : vector<1x48x16xf32> to vector<48x16xf32>
    %cst_66 = arith.constant dense<0.000000e+00> : vector<48x128xf32>
    %141 = tpu.matmul %140, %138, %cst_66 {dimension_numbers = #tpu.dot_dimension_numbers<[1], [0], [0], [1], [0, 0, 1, 1], [], []>} : vector<48x16xf32>, vector<16x128xf32>, vector<48x128xf32> -> vector<48x128xf32>
    %c1_67 = arith.constant 1 : index
    %c0_68 = arith.constant 0 : index
    %c0_69 = arith.constant 0 : index
    %142 = vector.load %arg4[%c1_67, %c0_68, %c0_69] : memref<2x48x1xf32, #tpu.memory_space<vmem>>, vector<1x48x1xf32>
    %143 = vector.shape_cast %142 : vector<1x48x1xf32> to vector<48x1xf32>
    %144 = vector.broadcast %143 : vector<48x1xf32> to vector<48x128xf32>
    %145 = arith.addf %141, %144 : vector<48x128xf32>
    %146 = vector.extract_strided_slice %145 {offsets = [0, 0], sizes = [16, 128], strides = [1, 1]} : vector<48x128xf32> to vector<16x128xf32>
    %147 = vector.extract_strided_slice %145 {offsets = [16, 0], sizes = [16, 128], strides = [1, 1]} : vector<48x128xf32> to vector<16x128xf32>
    %148 = vector.extract_strided_slice %145 {offsets = [32, 0], sizes = [16, 128], strides = [1, 1]} : vector<48x128xf32> to vector<16x128xf32>
    %149 = tpu.transpose %146, [1, 0] : vector<16x128xf32> -> vector<128x16xf32>
    %cst_70 = arith.constant dense<0.000000e+00> : vector<128x128xf32>
    %150 = tpu.matmul %149, %147, %cst_70 {dimension_numbers = #tpu.dot_dimension_numbers<[1], [0], [0], [1], [0, 0, 1, 1], [], []>} : vector<128x16xf32>, vector<16x128xf32>, vector<128x128xf32> -> vector<128x128xf32>
    %151 = arith.addf %150, %0 : vector<128x128xf32>
    %cst_71 = arith.constant dense<0xFF800000> : vector<128xf32>
    %152 = vector.multi_reduction <maximumf>, %151, %cst_71 [1] : vector<128x128xf32> to vector<128xf32>
    %153 = vector.shape_cast %152 : vector<128xf32> to vector<128x1xf32>
    %154 = vector.broadcast %153 : vector<128x1xf32> to vector<128x128xf32>
    %155 = arith.subf %151, %154 : vector<128x128xf32>
    %156 = math.exp %155 : vector<128x128xf32>
    %cst_72 = arith.constant dense<0.000000e+00> : vector<128xf32>
    %157 = vector.multi_reduction <add>, %156, %cst_72 [1] : vector<128x128xf32> to vector<128xf32>
    %158 = vector.shape_cast %157 : vector<128xf32> to vector<128x1xf32>
    %159 = tpu.reciprocal %158 : vector<128x1xf32> -> vector<128x1xf32>
    %160 = vector.broadcast %159 : vector<128x1xf32> to vector<128x128xf32>
    %161 = arith.mulf %156, %160 : vector<128x128xf32>
    %cst_73 = arith.constant dense<0.000000e+00> : vector<16x128xf32>
    %162 = tpu.matmul %148, %161, %cst_73 {dimension_numbers = #tpu.dot_dimension_numbers<[1], [1], [0], [0], [0, 0, 1, 0], [], []>} : vector<16x128xf32>, vector<128x128xf32>, vector<16x128xf32> -> vector<16x128xf32>
    %163 = arith.addf %122, %162 : vector<16x128xf32>
    %cst_74 = arith.constant dense<0.000000e+00> : vector<128x128xf32>
    %164 = tpu.matmul %149, %148, %cst_74 {dimension_numbers = #tpu.dot_dimension_numbers<[1], [0], [0], [1], [0, 0, 1, 1], [], []>} : vector<128x16xf32>, vector<16x128xf32>, vector<128x128xf32> -> vector<128x128xf32>
    %165 = arith.addf %164, %0 : vector<128x128xf32>
    %cst_75 = arith.constant dense<0xFF800000> : vector<128xf32>
    %166 = vector.multi_reduction <maximumf>, %165, %cst_75 [1] : vector<128x128xf32> to vector<128xf32>
    %167 = vector.shape_cast %166 : vector<128xf32> to vector<128x1xf32>
    %168 = vector.broadcast %167 : vector<128x1xf32> to vector<128x128xf32>
    %169 = arith.subf %165, %168 : vector<128x128xf32>
    %170 = math.exp %169 : vector<128x128xf32>
    %cst_76 = arith.constant dense<0.000000e+00> : vector<128xf32>
    %171 = vector.multi_reduction <add>, %170, %cst_76 [1] : vector<128x128xf32> to vector<128xf32>
    %172 = vector.shape_cast %171 : vector<128xf32> to vector<128x1xf32>
    %173 = tpu.reciprocal %172 : vector<128x1xf32> -> vector<128x1xf32>
    %174 = vector.broadcast %173 : vector<128x1xf32> to vector<128x128xf32>
    %175 = arith.mulf %170, %174 : vector<128x128xf32>
    %cst_77 = arith.constant dense<0.000000e+00> : vector<16x128xf32>
    %176 = tpu.matmul %146, %175, %cst_77 {dimension_numbers = #tpu.dot_dimension_numbers<[1], [0], [0], [1], [0, 0, 1, 1], [], []>} : vector<16x128xf32>, vector<128x128xf32>, vector<16x128xf32> -> vector<16x128xf32>
    %177 = arith.addf %136, %176 : vector<16x128xf32>
    %178 = tpu.transpose %177, [1, 0] : vector<16x128xf32> -> vector<128x16xf32>
    %179 = vector.shape_cast %178 : vector<128x16xf32> to vector<8x16x16xf32>
    %180 = tpu.transpose %179, [0, 2, 1] : vector<8x16x16xf32> -> vector<8x16x16xf32>
    %181 = vector.shape_cast %180 : vector<8x16x16xf32> to vector<128x16xf32>
    %182 = tpu.transpose %181, [1, 0] : vector<128x16xf32> -> vector<16x128xf32>
    %183 = arith.addf %163, %182 : vector<16x128xf32>
    %c1_78 = arith.constant 1 : index
    %c0_79 = arith.constant 0 : index
    %c0_80 = arith.constant 0 : index
    %184 = vector.load %arg6[%c1_78, %c0_79, %c0_80] : memref<2x16x128xf32, #tpu.memory_space<vmem>>, vector<1x16x128xf32>
    %185 = vector.shape_cast %184 : vector<1x16x128xf32> to vector<16x128xf32>
    %186 = vector.shape_cast %183 : vector<16x128xf32> to vector<1x16x128xf32>
    tpu.vector_store %arg6[%c1_78, %c0_79, %c0_80], %186 {strides = array<i32>} : memref<2x16x128xf32, #tpu.memory_space<vmem>>, vector<1x16x128xf32>,
    return
  }
  func.func @transform_0(%arg0: i32) -> (i32, i32, i32) {
    %c0_i32 = arith.constant 0 : i32
    %c0_i32_0 = arith.constant 0 : i32
    %c0_i32_1 = arith.constant 0 : i32
    %c0_i32_2 = arith.constant 0 : i32
    return %c0_i32, %c0_i32_0, %c0_i32_1 : i32, i32, i32
  }
  func.func @transform_1(%arg0: i32) -> (i32, i32, i32) {
    %c0_i32 = arith.constant 0 : i32
    %c0_i32_0 = arith.constant 0 : i32
    %c0_i32_1 = arith.constant 0 : i32
    %c0_i32_2 = arith.constant 0 : i32
    return %c0_i32, %c0_i32_0, %c0_i32_1 : i32, i32, i32
  }
  func.func @transform_2(%arg0: i32) -> (i32, i32, i32) {
    %c0_i32 = arith.constant 0 : i32
    %c0_i32_0 = arith.constant 0 : i32
    %c0_i32_1 = arith.constant 0 : i32
    %c0_i32_2 = arith.constant 0 : i32
    return %c0_i32, %c0_i32_0, %c0_i32_1 : i32, i32, i32
  }
  func.func @transform_3(%arg0: i32) -> (i32, i32, i32) {
    %c0_i32 = arith.constant 0 : i32
    %c0_i32_0 = arith.constant 0 : i32
    %c0_i32_1 = arith.constant 0 : i32
    %c0_i32_2 = arith.constant 0 : i32
    return %c0_i32, %c0_i32_0, %c0_i32_1 : i32, i32, i32
  }
  func.func @transform_4(%arg0: i32) -> (i32, i32) {
    %c0_i32 = arith.constant 0 : i32
    %c0_i32_0 = arith.constant 0 : i32
    %c0_i32_1 = arith.constant 0 : i32
    return %c0_i32, %c0_i32_0 : i32, i32
  }
  func.func @transform_5(%arg0: i32) -> (i32, i32, i32) {
    %c0_i32 = arith.constant 0 : i32
    %c0_i32_0 = arith.constant 0 : i32
    %c0_i32_1 = arith.constant 0 : i32
    %c0_i32_2 = arith.constant 0 : i32
    return %c0_i32, %c0_i32_0, %c0_i32_1 : i32, i32, i32
  }
}

</mosaic_0001>

<llo_original>
// kernel: tpu_custom_call.1
$region0: #{tpu_custom_call.1}
  #allocation0 [shape = 'u32[]', space=smem, size = 0x4, offset = 0x4, fixed_abs, tag = 'smem constant byte address 0x4 - core index']
  #allocation1 [shape = 'u32[144,128]{1,0:T(1,128)}', space=vmem, size = 0x12000, scoped, tag = 'internal scratch']
  %s0 = inlined_call_operand.vmem [shape: f32[2,16,128], index: 0, kind: input, shape index: {}]
  %s1 = inlined_call_operand.vmem [shape: f32[2,16,128], index: 1, kind: input, shape index: {}]
  %s2 = inlined_call_operand.vmem [shape: f32[2,48,16], index: 2, kind: input, shape index: {}]
  %s3 = inlined_call_operand.vmem [shape: f32[2,48,1], index: 3, kind: input, shape index: {}]
  %s4 = inlined_call_operand.vmem [shape: f32[128,128], index: 4, kind: input, shape index: {}]
  %s5 = inlined_call_operand.hbm [shape: f32[2,16,128], index: 5, kind: output, shape index: {}]
  %s6 = sld [smem:[#allocation0]]
  $region30: #{tpu_custom_call.1} parent=0
    _
  %s8 = ssub.s32 1, %s6
  %s9 = scalar_select 0, %s8, %s6
  $region1: #{tpu_custom_call.1} parent=0
    #allocation2 [shape = 'u8[16384]{0}', space=vmem, size = 0x4000, scoped, tag = 'output window, operand 0, single buffered']
    #allocation3 [shape = 's32[1]{0}', space=sflag, size = 0x4, scoped, tag = 'scoped memory for tpu_custom_call.1']
    %10 = vsyncpa [#allocation3], 0
    // Predicated region
    $region2: #{tpu_custom_call.1} parent=1 // pred_check
      _
    $region3: #{tpu_custom_call.1} parent=1 // pred_check_branch
      %12 = sbr.rel (0) target = $region5
    $region4: #{tpu_custom_call.1} parent=1 // pred_region
      _
    $region5: #{tpu_custom_call.1} parent=1 // pred_fallthru
      _
    // Predicated region
    $region6: #{tpu_custom_call.1} parent=1 // pred_check
      _
    $region7: #{tpu_custom_call.1} parent=1 // pred_check_branch
      %14 = sbr.rel (0) target = $region9
    $region8: #{tpu_custom_call.1} parent=1 // pred_region
      _
    $region9: #{tpu_custom_call.1} parent=1 // pred_fallthru
      _
    // Predicated region
    $region10: #{tpu_custom_call.1} parent=1 // pred_check
      _
    $region11: #{tpu_custom_call.1} parent=1 // pred_check_branch
      %16 = sbr.rel (0) target = $region13
    $region12: #{tpu_custom_call.1} parent=1 // pred_region
      _
    $region13: #{tpu_custom_call.1} parent=1 // pred_fallthru
      _
    // Predicated region
    $region14: #{tpu_custom_call.1} parent=1 // pred_check
      _
    $region15: #{tpu_custom_call.1} parent=1 // pred_check_branch
      %18 = sbr.rel (0) target = $region17
    $region16: #{tpu_custom_call.1} parent=1 // pred_region
      _
    $region17: #{tpu_custom_call.1} parent=1 // pred_fallthru
      _
    // Predicated region
    $region18: #{tpu_custom_call.1} parent=1 // pred_check
      _
    $region19: #{tpu_custom_call.1} parent=1 // pred_check_branch
      %20 = sbr.rel (0) target = $region21
    $region20: #{tpu_custom_call.1} parent=1 // pred_region
      _
    $region21: #{tpu_custom_call.1} parent=1 // pred_fallthru
      _
    %v21 = vld [vmem:[%s4] sm:$0xff]
    %v22 = vld [vmem:[%s4 + $0x8] sm:$0xff]
    %v23 = vld [vmem:[%s4 + $0x10] sm:$0xff]
    %v24 = vld [vmem:[%s4 + $0x18] sm:$0xff]
    %v25 = vld [vmem:[%s4 + $0x20] sm:$0xff]
    %v26 = vld [vmem:[%s4 + $0x28] sm:$0xff]
    %v27 = vld [vmem:[%s4 + $0x30] sm:$0xff]
    %v28 = vld [vmem:[%s4 + $0x38] sm:$0xff]
    %v29 = vld [vmem:[%s4 + $0x40] sm:$0xff]
    %v30 = vld [vmem:[%s4 + $0x48] sm:$0xff]
    %v31 = vld [vmem:[%s4 + $0x50] sm:$0xff]
    %v32 = vld [vmem:[%s4 + $0x58] sm:$0xff]
    %v33 = vld [vmem:[%s4 + $0x60] sm:$0xff]
    %v34 = vld [vmem:[%s4 + $0x68] sm:$0xff]
    %v35 = vld [vmem:[%s4 + $0x70] sm:$0xff]
    %v36 = vld [vmem:[%s4 + $0x78] sm:$0xff]
    %v37 = vld [vmem:[%s0] sm:$0xff]
    %v38 = vld [vmem:[%s0 + $0x8] sm:$0xff]
    %v39 = vld [vmem:[%s2] sm:$0xff]
    %v40 = vld [vmem:[%s2 + $0x8] sm:$0xff]
    %v41 = vld [vmem:[%s2 + $0x10] sm:$0xff]
    %v42 = vld [vmem:[%s2 + $0x18] sm:$0xff]
    %v43 = vld [vmem:[%s2 + $0x20] sm:$0xff]
    %v44 = vld [vmem:[%s2 + $0x28] sm:$0xff]
    %v45 = vld [vmem:[%s3] sm:$0xff]
    %v46 = vld [vmem:[%s3 + $0x8] sm:$0xff]
    %v47 = vld [vmem:[%s3 + $0x10] sm:$0xff]
    %v48 = vld [vmem:[%s3 + $0x18] sm:$0xff]
    %v49 = vld [vmem:[%s3 + $0x20] sm:$0xff]
    %v50 = vld [vmem:[%s3 + $0x28] sm:$0xff]
    %52 = vset.pattern.permute.xlu0 0
    %53 = vperm.xlu0 %52, %v45
    %v54 = vpop.permute.xlu0 %53
    %57 = vset.pattern.permute.xlu0 0
    %58 = vperm.xlu0 %57, %v46
    %v59 = vpop.permute.xlu0 %58
    %62 = vset.pattern.permute.xlu0 0
    %63 = vperm.xlu0 %62, %v47
    %v64 = vpop.permute.xlu0 %63
    %67 = vset.pattern.permute.xlu0 0
    %68 = vperm.xlu0 %67, %v48
    %v69 = vpop.permute.xlu0 %68
    %72 = vset.pattern.permute.xlu0 0
    %73 = vperm.xlu0 %72, %v49
    %v74 = vpop.permute.xlu0 %73
    %77 = vset.pattern.permute.xlu0 0
    %78 = vperm.xlu0 %77, %v50
    %v79 = vpop.permute.xlu0 %78
    %vm81 = vcmask 130048
    %v83 = vsel %vm81, %v39, 0
    %v86 = vsel %vm81, %v40, 0
    %v89 = vsel %vm81, %v41, 0
    %v92 = vsel %vm81, %v42, 0
    %v95 = vsel %vm81, %v43, 0
    %v98 = vsel %vm81, %v44, 0
    %100 = vmatprep.subr.mxu0 0.0
    %101 = vmatpush1.msra.mxu0 %v37
    %102 = vmatprep.subr.mxu0 0.0
    %103 = vmatpush1.msra.mxu0 %v38
    %104 = vmatprep.subr.mxu0 0.0
    %105 = vmatpush1.msra.mxu0 0.0
    %106 = vmatprep.subr.mxu0 0.0
    %107 = vmatpush1.msra.mxu0 0.0
    %108 = vmatprep.subr.mxu0 0.0
    %109 = vmatpush1.msra.mxu0 0.0
    %110 = vmatprep.subr.mxu0 0.0
    %111 = vmatpush1.msra.mxu0 0.0
    %112 = vmatprep.subr.mxu0 0.0
    %113 = vmatpush1.msra.mxu0 0.0
    %114 = vmatprep.subr.mxu0 0.0
    %115 = vmatpush1.msra.mxu0 0.0
    %116 = vmatprep.subr.mxu0 0.0
    %117 = vmatpush1.msra.mxu0 0.0
    %118 = vmatprep.subr.mxu0 0.0
    %119 = vmatpush1.msra.mxu0 0.0
    %120 = vmatprep.subr.mxu0 0.0
    %121 = vmatpush1.msra.mxu0 0.0
    %122 = vmatprep.subr.mxu0 0.0
    %123 = vmatpush1.msra.mxu0 0.0
    %124 = vmatprep.subr.mxu0 0.0
    %125 = vmatpush1.msra.mxu0 0.0
    %126 = vmatprep.subr.mxu0 0.0
    %127 = vmatpush1.msra.mxu0 0.0
    %128 = vmatprep.subr.mxu0 0.0
    %129 = vmatpush1.msra.mxu0 0.0
    %130 = vmatprep.subr.mxu0 0.0
    %131 = vmatpush1.msra.mxu0 0.0
    %132 = vmatprep.subr.mxu0 0.0
    %133 = vmatpush1.msra.mxu0 0.0
    %134 = vmatprep.subr.mxu0 0.0
    %135 = vmatpush1.msra.mxu0 0.0
    %136 = vmatprep.subr.mxu0 0.0
    %137 = vmatpush1.msra.mxu0 0.0
    %138 = vmatprep.subr.mxu0 0.0
    %139 = vmatpush1.msra.mxu0 0.0
    %140 = vmatprep.subr.mxu0 0.0
    %141 = vmatpush1.msra.mxu0 0.0
    %142 = vmatprep.subr.mxu0 0.0
    %143 = vmatpush1.msra.mxu0 0.0
    %144 = vmatprep.subr.mxu0 0.0
    %145 = vmatpush1.msra.mxu0 0.0
    %146 = vmatprep.subr.mxu0 0.0
    %147 = vmatpush1.msra.mxu0 0.0
    %148 = vmatprep.subr.mxu0 0.0
    %149 = vmatpush1.msra.mxu0 0.0
    %150 = vmatprep.subr.mxu0 0.0
    %151 = vmatpush1.msra.mxu0 0.0
    %152 = vmatprep.subr.mxu0 0.0
    %153 = vmatpush1.msra.mxu0 0.0
    %154 = vmatprep.subr.mxu0 0.0
    %155 = vmatpush1.msra.mxu0 0.0
    %156 = vmatprep.subr.mxu0 0.0
    %157 = vmatpush1.msra.mxu0 0.0
    %158 = vmatprep.subr.mxu0 0.0
    %159 = vmatpush1.msra.mxu0 0.0
    %160 = vmatprep.subr.mxu0 0.0
    %161 = vmatpush1.msra.mxu0 0.0
    %162 = vmatprep.subr.mxu0 0.0
    %163 = vmatpush1.msra.mxu0 0.0
    %164 = vmatprep.mubr.f32.mxu0 0.0
    %165 = vmatmul.mubr.f32.gmra.mrb[0].mxu0 %v83
    %v166 = vpop.f32.mrb[0].mxu0
    %v167 = vadd.f32 %v54, %v166
    %v168 = vpop.f32.mrb[0].mxu0
    %169 = vmatprep.mubr.f32.mxu0 0.0
    %170 = vmatmul.mubr.f32.gmra.mrb[0].mxu0 %v86
    %v171 = vpop.f32.mrb[0].mxu0
    %v172 = vadd.f32 %v59, %v171
    %v173 = vpop.f32.mrb[0].mxu0
    %174 = vmatprep.mubr.f32.mxu0 0.0
    %175 = vmatmul.mubr.f32.gmra.mrb[0].mxu0 %v89
    %v176 = vpop.f32.mrb[0].mxu0
    %v177 = vadd.f32 %v64, %v176
    %v178 = vpop.f32.mrb[0].mxu0
    %179 = vmatprep.mubr.f32.mxu0 0.0
    %180 = vmatmul.mubr.f32.gmra.mrb[0].mxu0 %v92
    %v181 = vpop.f32.mrb[0].mxu0
    %v182 = vadd.f32 %v69, %v181
    %v183 = vpop.f32.mrb[0].mxu0
    %184 = vmatprep.mubr.f32.mxu0 0.0
    %185 = vmatmul.mubr.f32.gmra.mrb[0].mxu0 %v95
    %v186 = vpop.f32.mrb[0].mxu0
    %v187 = vadd.f32 %v74, %v186
    %v188 = vpop.f32.mrb[0].mxu0
    %189 = vmatprep.mubr.f32.mxu0 0.0
    %190 = vmatmul.mubr.f32.gmra.mrb[0].mxu0 %v98
    %v191 = vpop.f32.mrb[0].mxu0
    %v192 = vadd.f32 %v79, %v191
    %v193 = vpop.f32.mrb[0].mxu0
    %194 = vdwg.mxu0
    %195 = vxpose.xlu0.b32.start [1/16] %v167, 128
    %196 = vxpose.xlu0.b32.cont [2/16] %v172, 128
    %197 = vxpose.xlu0.b32.cont [3/16] 0.0, 128
    %198 = vxpose.xlu0.b32.cont [4/16] 0.0, 128
    %199 = vxpose.xlu0.b32.cont [5/16] 0.0, 128
    %200 = vxpose.xlu0.b32.cont [6/16] 0.0, 128
    %201 = vxpose.xlu0.b32.cont [7/16] 0.0, 128
    %202 = vxpose.xlu0.b32.cont [8/16] 0.0, 128
    %203 = vxpose.xlu0.b32.cont [9/16] 0.0, 128
    %204 = vxpose.xlu0.b32.cont [10/16] 0.0, 128
    %205 = vxpose.xlu0.b32.cont [11/16] 0.0, 128
    %206 = vxpose.xlu0.b32.cont [12/16] 0.0, 128
    %207 = vxpose.xlu0.b32.cont [13/16] 0.0, 128
    %208 = vxpose.xlu0.b32.cont [14/16] 0.0, 128
    %209 = vxpose.xlu0.b32.cont [15/16] 0.0, 128
    %210 = vxpose.xlu0.b32.end [16/16] 0.0, 128
    %v211 = vpop.trf.xlu0
    %v212 = vpop.trf.xlu0
    %v213 = vpop.trf.xlu0
    %v214 = vpop.trf.xlu0
    %v215 = vpop.trf.xlu0
    %v216 = vpop.trf.xlu0
    %v217 = vpop.trf.xlu0
    %v218 = vpop.trf.xlu0
    %v219 = vpop.trf.xlu0
    %v220 = vpop.trf.xlu0
    %v221 = vpop.trf.xlu0
    %v222 = vpop.trf.xlu0
    %v223 = vpop.trf.xlu0
    %v224 = vpop.trf.xlu0
    %v225 = vpop.trf.xlu0
    %v226 = vpop.trf.xlu0
    %v228 = vsel %vm81, %v211, 0
    %v231 = vsel %vm81, %v212, 0
    %v234 = vsel %vm81, %v213, 0
    %v237 = vsel %vm81, %v214, 0
    %v240 = vsel %vm81, %v215, 0
    %v243 = vsel %vm81, %v216, 0
    %v246 = vsel %vm81, %v217, 0
    %v249 = vsel %vm81, %v218, 0
    %v252 = vsel %vm81, %v219, 0
    %v255 = vsel %vm81, %v220, 0
    %v258 = vsel %vm81, %v221, 0
    %v261 = vsel %vm81, %v222, 0
    %v264 = vsel %vm81, %v223, 0
    %v267 = vsel %vm81, %v224, 0
    %v270 = vsel %vm81, %v225, 0
    %v273 = vsel %vm81, %v226, 0
    %275 = vmatprep.subr.mxu0 0.0
    %276 = vmatpush1.msra.mxu0 %v177
    %277 = vmatprep.subr.mxu0 0.0
    %278 = vmatpush1.msra.mxu0 %v182
    %279 = vmatprep.subr.mxu0 0.0
    %280 = vmatpush1.msra.mxu0 0.0
    %281 = vmatprep.subr.mxu0 0.0
    %282 = vmatpush1.msra.mxu0 0.0
    %283 = vmatprep.subr.mxu0 0.0
    %284 = vmatpush1.msra.mxu0 0.0
    %285 = vmatprep.subr.mxu0 0.0
    %286 = vmatpush1.msra.mxu0 0.0
    %287 = vmatprep.subr.mxu0 0.0
    %288 = vmatpush1.msra.mxu0 0.0
    %289 = vmatprep.subr.mxu0 0.0
    %290 = vmatpush1.msra.mxu0 0.0
    %291 = vmatprep.subr.mxu0 0.0
    %292 = vmatpush1.msra.mxu0 0.0
    %293 = vmatprep.subr.mxu0 0.0
    %294 = vmatpush1.msra.mxu0 0.0
    %295 = vmatprep.subr.mxu0 0.0
    %296 = vmatpush1.msra.mxu0 0.0
    %297 = vmatprep.subr.mxu0 0.0
    %298 = vmatpush1.msra.mxu0 0.0
    %299 = vmatprep.subr.mxu0 0.0
    %300 = vmatpush1.msra.mxu0 0.0
    %301 = vmatprep.subr.mxu0 0.0
    %302 = vmatpush1.msra.mxu0 0.0
    %303 = vmatprep.subr.mxu0 0.0
    %304 = vmatpush1.msra.mxu0 0.0
    %305 = vmatprep.subr.mxu0 0.0
    %306 = vmatpush1.msra.mxu0 0.0
    %307 = vmatprep.subr.mxu0 0.0
    %308 = vmatpush1.msra.mxu0 0.0
    %309 = vmatprep.subr.mxu0 0.0
    %310 = vmatpush1.msra.mxu0 0.0
    %311 = vmatprep.subr.mxu0 0.0
    %312 = vmatpush1.msra.mxu0 0.0
    %313 = vmatprep.subr.mxu0 0.0
    %314 = vmatpush1.msra.mxu0 0.0
    %315 = vmatprep.subr.mxu0 0.0
    %316 = vmatpush1.msra.mxu0 0.0
    %317 = vmatprep.subr.mxu0 0.0
    %318 = vmatpush1.msra.mxu0 0.0
    %319 = vmatprep.subr.mxu0 0.0
    %320 = vmatpush1.msra.mxu0 0.0
    %321 = vmatprep.subr.mxu0 0.0
    %322 = vmatpush1.msra.mxu0 0.0
    %323 = vmatprep.subr.mxu0 0.0
    %324 = vmatpush1.msra.mxu0 0.0
    %325 = vmatprep.subr.mxu0 0.0
    %326 = vmatpush1.msra.mxu0 0.0
    %327 = vmatprep.subr.mxu0 0.0
    %328 = vmatpush1.msra.mxu0 0.0
    %329 = vmatprep.subr.mxu0 0.0
    %330 = vmatpush1.msra.mxu0 0.0
    %331 = vmatprep.subr.mxu0 0.0
    %332 = vmatpush1.msra.mxu0 0.0
    %333 = vmatprep.subr.mxu0 0.0
    %334 = vmatpush1.msra.mxu0 0.0
    %335 = vmatprep.subr.mxu0 0.0
    %336 = vmatpush1.msra.mxu0 0.0
    %337 = vmatprep.subr.mxu0 0.0
    %338 = vmatpush1.msra.mxu0 0.0
    %339 = vmatprep.mubr.f32.mxu0 0.0
    %340 = vmatmul.mubr.f32.gmra.mrb[0].mxu0 %v228
    %v341 = vpop.f32.mrb[0].mxu0
    %v342 = vadd.f32 %v21, %v341
    %v343 = vpop.f32.mrb[0].mxu0
    %344 = vmatprep.mubr.f32.mxu0 0.0
    %345 = vmatmul.mubr.f32.gmra.mrb[0].mxu0 %v231
    %v346 = vpop.f32.mrb[0].mxu0
    %v347 = vadd.f32 %v22, %v346
    %v348 = vpop.f32.mrb[0].mxu0
    %349 = vmatprep.mubr.f32.mxu0 0.0
    %350 = vmatmul.mubr.f32.gmra.mrb[0].mxu0 %v234
    %v351 = vpop.f32.mrb[0].mxu0
    %v352 = vadd.f32 %v23, %v351
    %v353 = vpop.f32.mrb[0].mxu0
    %354 = vmatprep.mubr.f32.mxu0 0.0
    %355 = vmatmul.mubr.f32.gmra.mrb[0].mxu0 %v237
    %v356 = vpop.f32.mrb[0].mxu0
    %v357 = vadd.f32 %v24, %v356
    %v358 = vpop.f32.mrb[0].mxu0
    %359 = vmatprep.mubr.f32.mxu0 0.0
    %360 = vmatmul.mubr.f32.gmra.mrb[0].mxu0 %v240
    %v361 = vpop.f32.mrb[0].mxu0
    %v362 = vadd.f32 %v25, %v361
    %v363 = vpop.f32.mrb[0].mxu0
    %364 = vmatprep.mubr.f32.mxu0 0.0
    %365 = vmatmul.mubr.f32.gmra.mrb[0].mxu0 %v243
    %v366 = vpop.f32.mrb[0].mxu0
    %v367 = vadd.f32 %v26, %v366
    %v368 = vpop.f32.mrb[0].mxu0
    %369 = vmatprep.mubr.f32.mxu0 0.0
    %370 = vmatmul.mubr.f32.gmra.mrb[0].mxu0 %v246
    %v371 = vpop.f32.mrb[0].mxu0
    %v372 = vadd.f32 %v27, %v371
    %v373 = vpop.f32.mrb[0].mxu0
    %374 = vmatprep.mubr.f32.mxu0 0.0
    %375 = vmatmul.mubr.f32.gmra.mrb[0].mxu0 %v249
    %v376 = vpop.f32.mrb[0].mxu0
    %v377 = vadd.f32 %v28, %v376
    %v378 = vpop.f32.mrb[0].mxu0
    %379 = vmatprep.mubr.f32.mxu0 0.0
    %380 = vmatmul.mubr.f32.gmra.mrb[0].mxu0 %v252
    %v381 = vpop.f32.mrb[0].mxu0
    %v382 = vadd.f32 %v29, %v381
    %v383 = vpop.f32.mrb[0].mxu0
    %384 = vmatprep.mubr.f32.mxu0 0.0
    %385 = vmatmul.mubr.f32.gmra.mrb[0].mxu0 %v255
    %v386 = vpop.f32.mrb[0].mxu0
    %v387 = vadd.f32 %v30, %v386
    %v388 = vpop.f32.mrb[0].mxu0
    %389 = vmatprep.mubr.f32.mxu0 0.0
    %390 = vmatmul.mubr.f32.gmra.mrb[0].mxu0 %v258
    %v391 = vpop.f32.mrb[0].mxu0
    %v392 = vadd.f32 %v31, %v391
    %v393 = vpop.f32.mrb[0].mxu0
    %394 = vmatprep.mubr.f32.mxu0 0.0
    %395 = vmatmul.mubr.f32.gmra.mrb[0].mxu0 %v261
    %v396 = vpop.f32.mrb[0].mxu0
    %v397 = vadd.f32 %v32, %v396
    %v398 = vpop.f32.mrb[0].mxu0
    %399 = vmatprep.mubr.f32.mxu0 0.0
    %400 = vmatmul.mubr.f32.gmra.mrb[0].mxu0 %v264
    %v401 = vpop.f32.mrb[0].mxu0
    %v402 = vadd.f32 %v33, %v401
    %v403 = vpop.f32.mrb[0].mxu0
    %404 = vmatprep.mubr.f32.mxu0 0.0
    %405 = vmatmul.mubr.f32.gmra.mrb[0].mxu0 %v267
    %v406 = vpop.f32.mrb[0].mxu0
    %v407 = vadd.f32 %v34, %v406
    %v408 = vpop.f32.mrb[0].mxu0
    %409 = vmatprep.mubr.f32.mxu0 0.0
    %410 = vmatmul.mubr.f32.gmra.mrb[0].mxu0 %v270
    %v411 = vpop.f32.mrb[0].mxu0
    %v412 = vadd.f32 %v35, %v411
    %v413 = vpop.f32.mrb[0].mxu0
    %414 = vmatprep.mubr.f32.mxu0 0.0
    %415 = vmatmul.mubr.f32.gmra.mrb[0].mxu0 %v273
    %v416 = vpop.f32.mrb[0].mxu0
    %v417 = vadd.f32 %v36, %v416
    %v418 = vpop.f32.mrb[0].mxu0
    %419 = vdwg.mxu0
    %420 = vmax.xlane.f32.xlu0 %v342
    %v421 = vpop.xlane.xlu0 %420
    %422 = vmax.xlane.f32.xlu0 %v347
    %v423 = vpop.xlane.xlu0 %422
    %424 = vmax.xlane.f32.xlu0 %v352
    %v425 = vpop.xlane.xlu0 %424
    %426 = vmax.xlane.f32.xlu0 %v357
    %v427 = vpop.xlane.xlu0 %426
    %428 = vmax.xlane.f32.xlu0 %v362
    %v429 = vpop.xlane.xlu0 %428
    %430 = vmax.xlane.f32.xlu0 %v367
    %v431 = vpop.xlane.xlu0 %430
    %432 = vmax.xlane.f32.xlu0 %v372
    %v433 = vpop.xlane.xlu0 %432
    %434 = vmax.xlane.f32.xlu0 %v377
    %v435 = vpop.xlane.xlu0 %434
    %436 = vmax.xlane.f32.xlu0 %v382
    %v437 = vpop.xlane.xlu0 %436
    %438 = vmax.xlane.f32.xlu0 %v387
    %v439 = vpop.xlane.xlu0 %438
    %440 = vmax.xlane.f32.xlu0 %v392
    %v441 = vpop.xlane.xlu0 %440
    %442 = vmax.xlane.f32.xlu0 %v397
    %v443 = vpop.xlane.xlu0 %442
    %444 = vmax.xlane.f32.xlu0 %v402
    %v445 = vpop.xlane.xlu0 %444
    %446 = vmax.xlane.f32.xlu0 %v407
    %v447 = vpop.xlane.xlu0 %446
    %448 = vmax.xlane.f32.xlu0 %v412
    %v449 = vpop.xlane.xlu0 %448
    %450 = vmax.xlane.f32.xlu0 %v417
    %v451 = vpop.xlane.xlu0 %450
    %v452 = vsub.f32 %v342, %v421
    %v453 = vsub.f32 %v347, %v423
    %v454 = vsub.f32 %v352, %v425
    %v455 = vsub.f32 %v357, %v427
    %v456 = vsub.f32 %v362, %v429
    %v457 = vsub.f32 %v367, %v431
    %v458 = vsub.f32 %v372, %v433
    %v459 = vsub.f32 %v377, %v435
    %v460 = vsub.f32 %v382, %v437
    %v461 = vsub.f32 %v387, %v439
    %v462 = vsub.f32 %v392, %v441
    %v463 = vsub.f32 %v397, %v443
    %v464 = vsub.f32 %v402, %v445
    %v465 = vsub.f32 %v407, %v447
    %v466 = vsub.f32 %v412, %v449
    %v467 = vsub.f32 %v417, %v451
    %v468 = vmul.f32 %v452, 1.442695
    %v469 = vpow.pop %v468
    %v470 = vmul.f32 %v453, 1.442695
    %v471 = vpow.pop %v470
    %v472 = vmul.f32 %v454, 1.442695
    %v473 = vpow.pop %v472
    %v474 = vmul.f32 %v455, 1.442695
    %v475 = vpow.pop %v474
    %v476 = vmul.f32 %v456, 1.442695
    %v477 = vpow.pop %v476
    %v478 = vmul.f32 %v457, 1.442695
    %v479 = vpow.pop %v478
    %v480 = vmul.f32 %v458, 1.442695
    %v481 = vpow.pop %v480
    %v482 = vmul.f32 %v459, 1.442695
    %v483 = vpow.pop %v482
    %v484 = vmul.f32 %v460, 1.442695
    %v485 = vpow.pop %v484
    %v486 = vmul.f32 %v461, 1.442695
    %v487 = vpow.pop %v486
    %v488 = vmul.f32 %v462, 1.442695
    %v489 = vpow.pop %v488
    %v490 = vmul.f32 %v463, 1.442695
    %v491 = vpow.pop %v490
    %v492 = vmul.f32 %v464, 1.442695
    %v493 = vpow.pop %v492
    %v494 = vmul.f32 %v465, 1.442695
    %v495 = vpow.pop %v494
    %v496 = vmul.f32 %v466, 1.442695
    %v497 = vpow.pop %v496
    %v498 = vmul.f32 %v467, 1.442695
    %v499 = vpow.pop %v498
    %500 = vadd.xlane.f32.xlu0 %v469
    %v501 = vpop.xlane.xlu0 %500
    %502 = vadd.xlane.f32.xlu0 %v471
    %v503 = vpop.xlane.xlu0 %502
    %504 = vadd.xlane.f32.xlu0 %v473
    %v505 = vpop.xlane.xlu0 %504
    %506 = vadd.xlane.f32.xlu0 %v475
    %v507 = vpop.xlane.xlu0 %506
    %508 = vadd.xlane.f32.xlu0 %v477
    %v509 = vpop.xlane.xlu0 %508
    %510 = vadd.xlane.f32.xlu0 %v479
    %v511 = vpop.xlane.xlu0 %510
    %512 = vadd.xlane.f32.xlu0 %v481
    %v513 = vpop.xlane.xlu0 %512
    %514 = vadd.xlane.f32.xlu0 %v483
    %v515 = vpop.xlane.xlu0 %514
    %516 = vadd.xlane.f32.xlu0 %v485
    %v517 = vpop.xlane.xlu0 %516
    %518 = vadd.xlane.f32.xlu0 %v487
    %v519 = vpop.xlane.xlu0 %518
    %520 = vadd.xlane.f32.xlu0 %v489
    %v521 = vpop.xlane.xlu0 %520
    %522 = vadd.xlane.f32.xlu0 %v491
    %v523 = vpop.xlane.xlu0 %522
    %524 = vadd.xlane.f32.xlu0 %v493
    %v525 = vpop.xlane.xlu0 %524
    %526 = vadd.xlane.f32.xlu0 %v495
    %v527 = vpop.xlane.xlu0 %526
    %528 = vadd.xlane.f32.xlu0 %v497
    %v529 = vpop.xlane.xlu0 %528
    %530 = vadd.xlane.f32.xlu0 %v499
    %v531 = vpop.xlane.xlu0 %530
    %v532 = vrcp.pop %v501
    %v533 = vrcp.pop %v503
    %v534 = vrcp.pop %v505
    %v535 = vrcp.pop %v507
    %v536 = vrcp.pop %v509
    %v537 = vrcp.pop %v511
    %v538 = vrcp.pop %v513
    %v539 = vrcp.pop %v515
    %v540 = vrcp.pop %v517
    %v541 = vrcp.pop %v519
    %v542 = vrcp.pop %v521
    %v543 = vrcp.pop %v523
    %v544 = vrcp.pop %v525
    %v545 = vrcp.pop %v527
    %v546 = vrcp.pop %v529
    %v547 = vrcp.pop %v531
    %v548 = vmul.f32 %v469, %v532
    %v549 = vmul.f32 %v471, %v533
    %v550 = vmul.f32 %v473, %v534
    %v551 = vmul.f32 %v475, %v535
    %v552 = vmul.f32 %v477, %v536
    %v553 = vmul.f32 %v479, %v537
    %v554 = vmul.f32 %v481, %v538
    %v555 = vmul.f32 %v483, %v539
    %v556 = vmul.f32 %v485, %v540
    %v557 = vmul.f32 %v487, %v541
    %v558 = vmul.f32 %v489, %v542
    %v559 = vmul.f32 %v491, %v543
    %v560 = vmul.f32 %v493, %v544
    %v561 = vmul.f32 %v495, %v545
    %v562 = vmul.f32 %v497, %v546
    %v563 = vmul.f32 %v499, %v547
    %564 = vmatprep.subr.mxu0 0.0
    %565 = vmatpush1.msra.mxu0 %v187
    %566 = vmatprep.subr.mxu0 0.0
    %567 = vmatpush1.msra.mxu0 %v192
    %568 = vmatprep.subr.mxu0 0.0
    %569 = vmatpush1.msra.mxu0 0.0
    %570 = vmatprep.subr.mxu0 0.0
    %571 = vmatpush1.msra.mxu0 0.0
    %572 = vmatprep.subr.mxu0 0.0
    %573 = vmatpush1.msra.mxu0 0.0
    %574 = vmatprep.subr.mxu0 0.0
    %575 = vmatpush1.msra.mxu0 0.0
    %576 = vmatprep.subr.mxu0 0.0
    %577 = vmatpush1.msra.mxu0 0.0
    %578 = vmatprep.subr.mxu0 0.0
    %579 = vmatpush1.msra.mxu0 0.0
    %580 = vmatprep.subr.mxu0 0.0
    %581 = vmatpush1.msra.mxu0 0.0
    %582 = vmatprep.subr.mxu0 0.0
    %583 = vmatpush1.msra.mxu0 0.0
    %584 = vmatprep.subr.mxu0 0.0
    %585 = vmatpush1.msra.mxu0 0.0
    %586 = vmatprep.subr.mxu0 0.0
    %587 = vmatpush1.msra.mxu0 0.0
    %588 = vmatprep.subr.mxu0 0.0
    %589 = vmatpush1.msra.mxu0 0.0
    %590 = vmatprep.subr.mxu0 0.0
    %591 = vmatpush1.msra.mxu0 0.0
    %592 = vmatprep.subr.mxu0 0.0
    %593 = vmatpush1.msra.mxu0 0.0
    %594 = vmatprep.subr.mxu0 0.0
    %595 = vmatpush1.msra.mxu0 0.0
    %596 = vmatprep.subr.mxu0 0.0
    %597 = vmatpush1.msra.mxu0 0.0
    %598 = vmatprep.subr.mxu0 0.0
    %599 = vmatpush1.msra.mxu0 0.0
    %600 = vmatprep.subr.mxu0 0.0
    %601 = vmatpush1.msra.mxu0 0.0
    %602 = vmatprep.subr.mxu0 0.0
    %603 = vmatpush1.msra.mxu0 0.0
    %604 = vmatprep.subr.mxu0 0.0
    %605 = vmatpush1.msra.mxu0 0.0
    %606 = vmatprep.subr.mxu0 0.0
    %607 = vmatpush1.msra.mxu0 0.0
    %608 = vmatprep.subr.mxu0 0.0
    %609 = vmatpush1.msra.mxu0 0.0
    %610 = vmatprep.subr.mxu0 0.0
    %611 = vmatpush1.msra.mxu0 0.0
    %612 = vmatprep.subr.mxu0 0.0
    %613 = vmatpush1.msra.mxu0 0.0
    %614 = vmatprep.subr.mxu0 0.0
    %615 = vmatpush1.msra.mxu0 0.0
    %616 = vmatprep.subr.mxu0 0.0
    %617 = vmatpush1.msra.mxu0 0.0
    %618 = vmatprep.subr.mxu0 0.0
    %619 = vmatpush1.msra.mxu0 0.0
    %620 = vmatprep.subr.mxu0 0.0
    %621 = vmatpush1.msra.mxu0 0.0
    %622 = vmatprep.subr.mxu0 0.0
    %623 = vmatpush1.msra.mxu0 0.0
    %624 = vmatprep.subr.mxu0 0.0
    %625 = vmatpush1.msra.mxu0 0.0
    %626 = vmatprep.subr.mxu0 0.0
    %627 = vmatpush1.msra.mxu0 0.0
    %628 = vmatprep.mubr.f32.mxu0 0.0
    %629 = vmatmul.mubr.f32.gmra.mrb[0].mxu0 %v228
    %v630 = vpop.f32.mrb[0].mxu0
    %v631 = vadd.f32 %v21, %v630
    %v632 = vpop.f32.mrb[0].mxu0
    %633 = vmatprep.mubr.f32.mxu0 0.0
    %634 = vmatmul.mubr.f32.gmra.mrb[0].mxu0 %v231
    %v635 = vpop.f32.mrb[0].mxu0
    %v636 = vadd.f32 %v22, %v635
    %v637 = vpop.f32.mrb[0].mxu0
    %638 = vmatprep.mubr.f32.mxu0 0.0
    %639 = vmatmul.mubr.f32.gmra.mrb[0].mxu0 %v234
    %v640 = vpop.f32.mrb[0].mxu0
    %v641 = vadd.f32 %v23, %v640
    %v642 = vpop.f32.mrb[0].mxu0
    %643 = vmatprep.mubr.f32.mxu0 0.0
    %644 = vmatmul.mubr.f32.gmra.mrb[0].mxu0 %v237
    %v645 = vpop.f32.mrb[0].mxu0
    %v646 = vadd.f32 %v24, %v645
    %v647 = vpop.f32.mrb[0].mxu0
    %648 = vmatprep.mubr.f32.mxu0 0.0
    %649 = vmatmul.mubr.f32.gmra.mrb[0].mxu0 %v240
    %v650 = vpop.f32.mrb[0].mxu0
    %v651 = vadd.f32 %v25, %v650
    %v652 = vpop.f32.mrb[0].mxu0
    %653 = vmatprep.mubr.f32.mxu0 0.0
    %654 = vmatmul.mubr.f32.gmra.mrb[0].mxu0 %v243
    %v655 = vpop.f32.mrb[0].mxu0
    %v656 = vadd.f32 %v26, %v655
    %v657 = vpop.f32.mrb[0].mxu0
    %658 = vmatprep.mubr.f32.mxu0 0.0
    %659 = vmatmul.mubr.f32.gmra.mrb[0].mxu0 %v246
    %v660 = vpop.f32.mrb[0].mxu0
    %v661 = vadd.f32 %v27, %v660
    %v662 = vpop.f32.mrb[0].mxu0
    %663 = vmatprep.mubr.f32.mxu0 0.0
    %664 = vmatmul.mubr.f32.gmra.mrb[0].mxu0 %v249
    %v665 = vpop.f32.mrb[0].mxu0
    %v666 = vadd.f32 %v28, %v665
    %v667 = vpop.f32.mrb[0].mxu0
    %668 = vmatprep.mubr.f32.mxu0 0.0
    %669 = vmatmul.mubr.f32.gmra.mrb[0].mxu0 %v252
    %v670 = vpop.f32.mrb[0].mxu0
    %v671 = vadd.f32 %v29, %v670
    %v672 = vpop.f32.mrb[0].mxu0
    %673 = vmatprep.mubr.f32.mxu0 0.0
    %674 = vmatmul.mubr.f32.gmra.mrb[0].mxu0 %v255
    %v675 = vpop.f32.mrb[0].mxu0
    %v676 = vadd.f32 %v30, %v675
    %v677 = vpop.f32.mrb[0].mxu0
    %678 = vmatprep.mubr.f32.mxu0 0.0
    %679 = vmatmul.mubr.f32.gmra.mrb[0].mxu0 %v258
    %v680 = vpop.f32.mrb[0].mxu0
    %v681 = vadd.f32 %v31, %v680
    %v682 = vpop.f32.mrb[0].mxu0
    %683 = vmatprep.mubr.f32.mxu0 0.0
    %684 = vmatmul.mubr.f32.gmra.mrb[0].mxu0 %v261
    %v685 = vpop.f32.mrb[0].mxu0
    %v686 = vadd.f32 %v32, %v685
    %v687 = vpop.f32.mrb[0].mxu0
    %688 = vmatprep.mubr.f32.mxu0 0.0
    %689 = vmatmul.mubr.f32.gmra.mrb[0].mxu0 %v264
    %v690 = vpop.f32.mrb[0].mxu0
    %v691 = vadd.f32 %v33, %v690
    %v692 = vpop.f32.mrb[0].mxu0
    %693 = vmatprep.mubr.f32.mxu0 0.0
    %694 = vmatmul.mubr.f32.gmra.mrb[0].mxu0 %v267
    %v695 = vpop.f32.mrb[0].mxu0
    %v696 = vadd.f32 %v34, %v695
    %v697 = vpop.f32.mrb[0].mxu0
    %698 = vmatprep.mubr.f32.mxu0 0.0
    %699 = vmatmul.mubr.f32.gmra.mrb[0].mxu0 %v270
    %v700 = vpop.f32.mrb[0].mxu0
    %v701 = vadd.f32 %v35, %v700
    %v702 = vpop.f32.mrb[0].mxu0
    %703 = vmatprep.mubr.f32.mxu0 0.0
    %704 = vmatmul.mubr.f32.gmra.mrb[0].mxu0 %v273
    %v705 = vpop.f32.mrb[0].mxu0
    %v706 = vadd.f32 %v36, %v705
    %v707 = vpop.f32.mrb[0].mxu0
    %708 = vdwg.mxu0
    %709 = vmax.xlane.f32.xlu0 %v631
    %v710 = vpop.xlane.xlu0 %709
    %711 = vmax.xlane.f32.xlu0 %v636
    %v712 = vpop.xlane.xlu0 %711
    %713 = vmax.xlane.f32.xlu0 %v641
    %v714 = vpop.xlane.xlu0 %713
    %715 = vmax.xlane.f32.xlu0 %v646
    %v716 = vpop.xlane.xlu0 %715
    %717 = vmax.xlane.f32.xlu0 %v651
    %v718 = vpop.xlane.xlu0 %717
    %719 = vmax.xlane.f32.xlu0 %v656
    %v720 = vpop.xlane.xlu0 %719
    %721 = vmax.xlane.f32.xlu0 %v661
    %v722 = vpop.xlane.xlu0 %721
    %723 = vmax.xlane.f32.xlu0 %v666
    %v724 = vpop.xlane.xlu0 %723
    %725 = vmax.xlane.f32.xlu0 %v671
    %v726 = vpop.xlane.xlu0 %725
    %727 = vmax.xlane.f32.xlu0 %v676
    %v728 = vpop.xlane.xlu0 %727
    %729 = vmax.xlane.f32.xlu0 %v681
    %v730 = vpop.xlane.xlu0 %729
    %731 = vmax.xlane.f32.xlu0 %v686
    %v732 = vpop.xlane.xlu0 %731
    %733 = vmax.xlane.f32.xlu0 %v691
    %v734 = vpop.xlane.xlu0 %733
    %735 = vmax.xlane.f32.xlu0 %v696
    %v736 = vpop.xlane.xlu0 %735
    %737 = vmax.xlane.f32.xlu0 %v701
    %v738 = vpop.xlane.xlu0 %737
    %739 = vmax.xlane.f32.xlu0 %v706
    %v740 = vpop.xlane.xlu0 %739
    %v741 = vsub.f32 %v631, %v710
    %v742 = vsub.f32 %v636, %v712
    %v743 = vsub.f32 %v641, %v714
    %v744 = vsub.f32 %v646, %v716
    %v745 = vsub.f32 %v651, %v718
    %v746 = vsub.f32 %v656, %v720
    %v747 = vsub.f32 %v661, %v722
    %v748 = vsub.f32 %v666, %v724
    %v749 = vsub.f32 %v671, %v726
    %v750 = vsub.f32 %v676, %v728
    %v751 = vsub.f32 %v681, %v730
    %v752 = vsub.f32 %v686, %v732
    %v753 = vsub.f32 %v691, %v734
    %v754 = vsub.f32 %v696, %v736
    %v755 = vsub.f32 %v701, %v738
    %v756 = vsub.f32 %v706, %v740
    %v757 = vmul.f32 %v741, 1.442695
    %v758 = vpow.pop %v757
    %v759 = vmul.f32 %v742, 1.442695
    %v760 = vpow.pop %v759
    %v761 = vmul.f32 %v743, 1.442695
    %v762 = vpow.pop %v761
    %v763 = vmul.f32 %v744, 1.442695
    %v764 = vpow.pop %v763
    %v765 = vmul.f32 %v745, 1.442695
    %v766 = vpow.pop %v765
    %v767 = vmul.f32 %v746, 1.442695
    %v768 = vpow.pop %v767
    %v769 = vmul.f32 %v747, 1.442695
    %v770 = vpow.pop %v769
    %v771 = vmul.f32 %v748, 1.442695
    %v772 = vpow.pop %v771
    %v773 = vmul.f32 %v749, 1.442695
    %v774 = vpow.pop %v773
    %v775 = vmul.f32 %v750, 1.442695
    %v776 = vpow.pop %v775
    %v777 = vmul.f32 %v751, 1.442695
    %v778 = vpow.pop %v777
    %v779 = vmul.f32 %v752, 1.442695
    %v780 = vpow.pop %v779
    %v781 = vmul.f32 %v753, 1.442695
    %v782 = vpow.pop %v781
    %v783 = vmul.f32 %v754, 1.442695
    %v784 = vpow.pop %v783
    %v785 = vmul.f32 %v755, 1.442695
    %v786 = vpow.pop %v785
    %v787 = vmul.f32 %v756, 1.442695
    %v788 = vpow.pop %v787
    %789 = vadd.xlane.f32.xlu0 %v758
    %v790 = vpop.xlane.xlu0 %789
    %791 = vadd.xlane.f32.xlu0 %v760
    %v792 = vpop.xlane.xlu0 %791
    %793 = vadd.xlane.f32.xlu0 %v762
    %v794 = vpop.xlane.xlu0 %793
    %795 = vadd.xlane.f32.xlu0 %v764
    %v796 = vpop.xlane.xlu0 %795
    %797 = vadd.xlane.f32.xlu0 %v766
    %v798 = vpop.xlane.xlu0 %797
    %799 = vadd.xlane.f32.xlu0 %v768
    %v800 = vpop.xlane.xlu0 %799
    %801 = vadd.xlane.f32.xlu0 %v770
    %v802 = vpop.xlane.xlu0 %801
    %803 = vadd.xlane.f32.xlu0 %v772
    %v804 = vpop.xlane.xlu0 %803
    %805 = vadd.xlane.f32.xlu0 %v774
    %v806 = vpop.xlane.xlu0 %805
    %807 = vadd.xlane.f32.xlu0 %v776
    %v808 = vpop.xlane.xlu0 %807
    %809 = vadd.xlane.f32.xlu0 %v778
    %v810 = vpop.xlane.xlu0 %809
    %811 = vadd.xlane.f32.xlu0 %v780
    %v812 = vpop.xlane.xlu0 %811
    %813 = vadd.xlane.f32.xlu0 %v782
    %v814 = vpop.xlane.xlu0 %813
    %815 = vadd.xlane.f32.xlu0 %v784
    %v816 = vpop.xlane.xlu0 %815
    %817 = vadd.xlane.f32.xlu0 %v786
    %v818 = vpop.xlane.xlu0 %817
    %819 = vadd.xlane.f32.xlu0 %v788
    %v820 = vpop.xlane.xlu0 %819
    %v821 = vrcp.pop %v790
    %v822 = vrcp.pop %v792
    %v823 = vrcp.pop %v794
    %v824 = vrcp.pop %v796
    %v825 = vrcp.pop %v798
    %v826 = vrcp.pop %v800
    %v827 = vrcp.pop %v802
    %v828 = vrcp.pop %v804
    %v829 = vrcp.pop %v806
    %v830 = vrcp.pop %v808
    %v831 = vrcp.pop %v810
    %v832 = vrcp.pop %v812
    %v833 = vrcp.pop %v814
    %v834 = vrcp.pop %v816
    %v835 = vrcp.pop %v818
    %v836 = vrcp.pop %v820
    %v837 = vmul.f32 %v758, %v821
    %v838 = vmul.f32 %v760, %v822
    %v839 = vmul.f32 %v762, %v823
    %v840 = vmul.f32 %v764, %v824
    %v841 = vmul.f32 %v766, %v825
    %v842 = vmul.f32 %v768, %v826
    %v843 = vmul.f32 %v770, %v827
    %v844 = vmul.f32 %v772, %v828
    %v845 = vmul.f32 %v774, %v829
    %v846 = vmul.f32 %v776, %v830
    %v847 = vmul.f32 %v778, %v831
    %v848 = vmul.f32 %v780, %v832
    %v849 = vmul.f32 %v782, %v833
    %v850 = vmul.f32 %v784, %v834
    %v851 = vmul.f32 %v786, %v835
    %v852 = vmul.f32 %v788, %v836
    %v853 = vld [vmem:[%s1] sm:$0xff]
    %v854 = vld [vmem:[%s1 + $0x8] sm:$0xff]
    %s855 = scalar_lea.vmem %s2, 48
    %v856 = vld [vmem:[%s855] sm:$0xff]
    %v857 = vld [vmem:[%s855 + $0x8] sm:$0xff]
    %v858 = vld [vmem:[%s855 + $0x10] sm:$0xff]
    %v859 = vld [vmem:[%s855 + $0x18] sm:$0xff]
    %v860 = vld [vmem:[%s855 + $0x20] sm:$0xff]
    %v861 = vld [vmem:[%s855 + $0x28] sm:$0xff]
    %s862 = scalar_lea.vmem %s3, 48
    %v863 = vld [vmem:[%s862] sm:$0xff]
    %v864 = vld [vmem:[%s862 + $0x8] sm:$0xff]
    %v865 = vld [vmem:[%s862 + $0x10] sm:$0xff]
    %v866 = vld [vmem:[%s862 + $0x18] sm:$0xff]
    %v867 = vld [vmem:[%s862 + $0x20] sm:$0xff]
    %v868 = vld [vmem:[%s862 + $0x28] sm:$0xff]
    %870 = vset.pattern.permute.xlu0 0
    %871 = vperm.xlu0 %870, %v863
    %v872 = vpop.permute.xlu0 %871
    %875 = vset.pattern.permute.xlu0 0
    %876 = vperm.xlu0 %875, %v864
    %v877 = vpop.permute.xlu0 %876
    %880 = vset.pattern.permute.xlu0 0
    %881 = vperm.xlu0 %880, %v865
    %v882 = vpop.permute.xlu0 %881
    %885 = vset.pattern.permute.xlu0 0
    %886 = vperm.xlu0 %885, %v866
    %v887 = vpop.permute.xlu0 %886
    %890 = vset.pattern.permute.xlu0 0
    %891 = vperm.xlu0 %890, %v867
    %v892 = vpop.permute.xlu0 %891
    %895 = vset.pattern.permute.xlu0 0
    %896 = vperm.xlu0 %895, %v868
    %v897 = vpop.permute.xlu0 %896
    %v900 = vsel %vm81, %v856, 0
    %v903 = vsel %vm81, %v857, 0
    %v906 = vsel %vm81, %v858, 0
    %v909 = vsel %vm81, %v859, 0
    %v912 = vsel %vm81, %v860, 0
    %v915 = vsel %vm81, %v861, 0
    %917 = vmatprep.subr.mxu0 0.0
    %918 = vmatpush1.msra.mxu0 %v853
    %919 = vmatprep.subr.mxu0 0.0
    %920 = vmatpush1.msra.mxu0 %v854
    %921 = vmatprep.subr.mxu0 0.0
    %922 = vmatpush1.msra.mxu0 0.0
    %923 = vmatprep.subr.mxu0 0.0
    %924 = vmatpush1.msra.mxu0 0.0
    %925 = vmatprep.subr.mxu0 0.0
    %926 = vmatpush1.msra.mxu0 0.0
    %927 = vmatprep.subr.mxu0 0.0
    %928 = vmatpush1.msra.mxu0 0.0
    %929 = vmatprep.subr.mxu0 0.0
    %930 = vmatpush1.msra.mxu0 0.0
    %931 = vmatprep.subr.mxu0 0.0
    %932 = vmatpush1.msra.mxu0 0.0
    %933 = vmatprep.subr.mxu0 0.0
    %934 = vmatpush1.msra.mxu0 0.0
    %935 = vmatprep.subr.mxu0 0.0
    %936 = vmatpush1.msra.mxu0 0.0
    %937 = vmatprep.subr.mxu0 0.0
    %938 = vmatpush1.msra.mxu0 0.0
    %939 = vmatprep.subr.mxu0 0.0
    %940 = vmatpush1.msra.mxu0 0.0
    %941 = vmatprep.subr.mxu0 0.0
    %942 = vmatpush1.msra.mxu0 0.0
    %943 = vmatprep.subr.mxu0 0.0
    %944 = vmatpush1.msra.mxu0 0.0
    %945 = vmatprep.subr.mxu0 0.0
    %946 = vmatpush1.msra.mxu0 0.0
    %947 = vmatprep.subr.mxu0 0.0
    %948 = vmatpush1.msra.mxu0 0.0
    %949 = vmatprep.subr.mxu0 0.0
    %950 = vmatpush1.msra.mxu0 0.0
    %951 = vmatprep.subr.mxu0 0.0
    %952 = vmatpush1.msra.mxu0 0.0
    %953 = vmatprep.subr.mxu0 0.0
    %954 = vmatpush1.msra.mxu0 0.0
    %955 = vmatprep.subr.mxu0 0.0
    %956 = vmatpush1.msra.mxu0 0.0
    %957 = vmatprep.subr.mxu0 0.0
    %958 = vmatpush1.msra.mxu0 0.0
    %959 = vmatprep.subr.mxu0 0.0
    %960 = vmatpush1.msra.mxu0 0.0
    %961 = vmatprep.subr.mxu0 0.0
    %962 = vmatpush1.msra.mxu0 0.0
    %963 = vmatprep.subr.mxu0 0.0
    %964 = vmatpush1.msra.mxu0 0.0
    %965 = vmatprep.subr.mxu0 0.0
    %966 = vmatpush1.msra.mxu0 0.0
    %967 = vmatprep.subr.mxu0 0.0
    %968 = vmatpush1.msra.mxu0 0.0
    %969 = vmatprep.subr.mxu0 0.0
    %970 = vmatpush1.msra.mxu0 0.0
    %971 = vmatprep.subr.mxu0 0.0
    %972 = vmatpush1.msra.mxu0 0.0
    %973 = vmatprep.subr.mxu0 0.0
    %974 = vmatpush1.msra.mxu0 0.0
    %975 = vmatprep.subr.mxu0 0.0
    %976 = vmatpush1.msra.mxu0 0.0
    %977 = vmatprep.subr.mxu0 0.0
    %978 = vmatpush1.msra.mxu0 0.0
    %979 = vmatprep.subr.mxu0 0.0
    %980 = vmatpush1.msra.mxu0 0.0
    %981 = vmatprep.mubr.f32.mxu0 0.0
    %982 = vmatmul.mubr.f32.gmra.mrb[0].mxu0 %v900
    %v983 = vpop.f32.mrb[0].mxu0
    %v984 = vadd.f32 %v872, %v983
    %v985 = vpop.f32.mrb[0].mxu0
    %986 = vmatprep.mubr.f32.mxu0 0.0
    %987 = vmatmul.mubr.f32.gmra.mrb[0].mxu0 %v903
    %v988 = vpop.f32.mrb[0].mxu0
    %v989 = vadd.f32 %v877, %v988
    %v990 = vpop.f32.mrb[0].mxu0
    %991 = vmatprep.mubr.f32.mxu0 0.0
    %992 = vmatmul.mubr.f32.gmra.mrb[0].mxu0 %v906
    %v993 = vpop.f32.mrb[0].mxu0
    %v994 = vadd.f32 %v882, %v993
    %v995 = vpop.f32.mrb[0].mxu0
    %996 = vmatprep.mubr.f32.mxu0 0.0
    %997 = vmatmul.mubr.f32.gmra.mrb[0].mxu0 %v909
    %v998 = vpop.f32.mrb[0].mxu0
    %v999 = vadd.f32 %v887, %v998
    %v1000 = vpop.f32.mrb[0].mxu0
    %1001 = vmatprep.mubr.f32.mxu0 0.0
    %1002 = vmatmul.mubr.f32.gmra.mrb[0].mxu0 %v912
    %v1003 = vpop.f32.mrb[0].mxu0
    %v1004 = vadd.f32 %v892, %v1003
    %v1005 = vpop.f32.mrb[0].mxu0
    %1006 = vmatprep.mubr.f32.mxu0 0.0
    %1007 = vmatmul.mubr.f32.gmra.mrb[0].mxu0 %v915
    %v1008 = vpop.f32.mrb[0].mxu0
    %v1009 = vadd.f32 %v897, %v1008
    %v1010 = vpop.f32.mrb[0].mxu0
    %1011 = vdwg.mxu0
    %1012 = vxpose.xlu0.b32.start [1/16] %v984, 128
    %1013 = vxpose.xlu0.b32.cont [2/16] %v989, 128
    %1014 = vxpose.xlu0.b32.cont [3/16] 0.0, 128
    %1015 = vxpose.xlu0.b32.cont [4/16] 0.0, 128
    %1016 = vxpose.xlu0.b32.cont [5/16] 0.0, 128
    %1017 = vxpose.xlu0.b32.cont [6/16] 0.0, 128
    %1018 = vxpose.xlu0.b32.cont [7/16] 0.0, 128
    %1019 = vxpose.xlu0.b32.cont [8/16] 0.0, 128
    %1020 = vxpose.xlu0.b32.cont [9/16] 0.0, 128
    %1021 = vxpose.xlu0.b32.cont [10/16] 0.0, 128
    %1022 = vxpose.xlu0.b32.cont [11/16] 0.0, 128
    %1023 = vxpose.xlu0.b32.cont [12/16] 0.0, 128
    %1024 = vxpose.xlu0.b32.cont [13/16] 0.0, 128
    %1025 = vxpose.xlu0.b32.cont [14/16] 0.0, 128
    %1026 = vxpose.xlu0.b32.cont [15/16] 0.0, 128
    %1027 = vxpose.xlu0.b32.end [16/16] 0.0, 128
    %v1028 = vpop.trf.xlu0
    %v1029 = vpop.trf.xlu0
    %v1030 = vpop.trf.xlu0
    %v1031 = vpop.trf.xlu0
    %v1032 = vpop.trf.xlu0
    %v1033 = vpop.trf.xlu0
    %v1034 = vpop.trf.xlu0
    %v1035 = vpop.trf.xlu0
    %v1036 = vpop.trf.xlu0
    %v1037 = vpop.trf.xlu0
    %v1038 = vpop.trf.xlu0
    %v1039 = vpop.trf.xlu0
    %v1040 = vpop.trf.xlu0
    %v1041 = vpop.trf.xlu0
    %v1042 = vpop.trf.xlu0
    %v1043 = vpop.trf.xlu0
    %v1045 = vsel %vm81, %v1028, 0
    %v1048 = vsel %vm81, %v1029, 0
    %v1051 = vsel %vm81, %v1030, 0
    %v1054 = vsel %vm81, %v1031, 0
    %v1057 = vsel %vm81, %v1032, 0
    %v1060 = vsel %vm81, %v1033, 0
    %v1063 = vsel %vm81, %v1034, 0
    %v1066 = vsel %vm81, %v1035, 0
    %v1069 = vsel %vm81, %v1036, 0
    %v1072 = vsel %vm81, %v1037, 0
    %v1075 = vsel %vm81, %v1038, 0
    %v1078 = vsel %vm81, %v1039, 0
    %v1081 = vsel %vm81, %v1040, 0
    %v1084 = vsel %vm81, %v1041, 0
    %v1087 = vsel %vm81, %v1042, 0
    %v1090 = vsel %vm81, %v1043, 0
    %1092 = vmatprep.subr.mxu0 0.0
    %1093 = vmatpush1.msra.mxu0 %v994
    %1094 = vmatprep.subr.mxu0 0.0
    %1095 = vmatpush1.msra.mxu0 %v999
    %1096 = vmatprep.subr.mxu0 0.0
    %1097 = vmatpush1.msra.mxu0 0.0
    %1098 = vmatprep.subr.mxu0 0.0
    %1099 = vmatpush1.msra.mxu0 0.0
    %1100 = vmatprep.subr.mxu0 0.0
    %1101 = vmatpush1.msra.mxu0 0.0
    %1102 = vmatprep.subr.mxu0 0.0
    %1103 = vmatpush1.msra.mxu0 0.0
    %1104 = vmatprep.subr.mxu0 0.0
    %1105 = vmatpush1.msra.mxu0 0.0
    %1106 = vmatprep.subr.mxu0 0.0
    %1107 = vmatpush1.msra.mxu0 0.0
    %1108 = vmatprep.subr.mxu0 0.0
    %1109 = vmatpush1.msra.mxu0 0.0
    %1110 = vmatprep.subr.mxu0 0.0
    %1111 = vmatpush1.msra.mxu0 0.0
    %1112 = vmatprep.subr.mxu0 0.0
    %1113 = vmatpush1.msra.mxu0 0.0
    %1114 = vmatprep.subr.mxu0 0.0
    %1115 = vmatpush1.msra.mxu0 0.0
    %1116 = vmatprep.subr.mxu0 0.0
    %1117 = vmatpush1.msra.mxu0 0.0
    %1118 = vmatprep.subr.mxu0 0.0
    %1119 = vmatpush1.msra.mxu0 0.0
    %1120 = vmatprep.subr.mxu0 0.0
    %1121 = vmatpush1.msra.mxu0 0.0
    %1122 = vmatprep.subr.mxu0 0.0
    %1123 = vmatpush1.msra.mxu0 0.0
    %1124 = vmatprep.subr.mxu0 0.0
    %1125 = vmatpush1.msra.mxu0 0.0
    %1126 = vmatprep.subr.mxu0 0.0
    %1127 = vmatpush1.msra.mxu0 0.0
    %1128 = vmatprep.subr.mxu0 0.0
    %1129 = vmatpush1.msra.mxu0 0.0
    %1130 = vmatprep.subr.mxu0 0.0
    %1131 = vmatpush1.msra.mxu0 0.0
    %1132 = vmatprep.subr.mxu0 0.0
    %1133 = vmatpush1.msra.mxu0 0.0
    %1134 = vmatprep.subr.mxu0 0.0
    %1135 = vmatpush1.msra.mxu0 0.0
    %1136 = vmatprep.subr.mxu0 0.0
    %1137 = vmatpush1.msra.mxu0 0.0
    %1138 = vmatprep.subr.mxu0 0.0
    %1139 = vmatpush1.msra.mxu0 0.0
    %1140 = vmatprep.subr.mxu0 0.0
    %1141 = vmatpush1.msra.mxu0 0.0
    %1142 = vmatprep.subr.mxu0 0.0
    %1143 = vmatpush1.msra.mxu0 0.0
    %1144 = vmatprep.subr.mxu0 0.0
    %1145 = vmatpush1.msra.mxu0 0.0
    %1146 = vmatprep.subr.mxu0 0.0
    %1147 = vmatpush1.msra.mxu0 0.0
    %1148 = vmatprep.subr.mxu0 0.0
    %1149 = vmatpush1.msra.mxu0 0.0
    %1150 = vmatprep.subr.mxu0 0.0
    %1151 = vmatpush1.msra.mxu0 0.0
    %1152 = vmatprep.subr.mxu0 0.0
    %1153 = vmatpush1.msra.mxu0 0.0
    %1154 = vmatprep.subr.mxu0 0.0
    %1155 = vmatpush1.msra.mxu0 0.0
    %1156 = vmatprep.mubr.f32.mxu0 0.0
    %1157 = vmatmul.mubr.f32.gmra.mrb[0].mxu0 %v1045
    %v1158 = vpop.f32.mrb[0].mxu0
    %v1159 = vadd.f32 %v21, %v1158
    %v1160 = vpop.f32.mrb[0].mxu0
    %1161 = vmatprep.mubr.f32.mxu0 0.0
    %1162 = vmatmul.mubr.f32.gmra.mrb[0].mxu0 %v1048
    %v1163 = vpop.f32.mrb[0].mxu0
    %v1164 = vadd.f32 %v22, %v1163
    %v1165 = vpop.f32.mrb[0].mxu0
    %1166 = vmatprep.mubr.f32.mxu0 0.0
    %1167 = vmatmul.mubr.f32.gmra.mrb[0].mxu0 %v1051
    %v1168 = vpop.f32.mrb[0].mxu0
    %v1169 = vadd.f32 %v23, %v1168
    %v1170 = vpop.f32.mrb[0].mxu0
    %1171 = vmatprep.mubr.f32.mxu0 0.0
    %1172 = vmatmul.mubr.f32.gmra.mrb[0].mxu0 %v1054
    %v1173 = vpop.f32.mrb[0].mxu0
    %v1174 = vadd.f32 %v24, %v1173
    %v1175 = vpop.f32.mrb[0].mxu0
    %1176 = vmatprep.mubr.f32.mxu0 0.0
    %1177 = vmatmul.mubr.f32.gmra.mrb[0].mxu0 %v1057
    %v1178 = vpop.f32.mrb[0].mxu0
    %v1179 = vadd.f32 %v25, %v1178
    %v1180 = vpop.f32.mrb[0].mxu0
    %1181 = vmatprep.mubr.f32.mxu0 0.0
    %1182 = vmatmul.mubr.f32.gmra.mrb[0].mxu0 %v1060
    %v1183 = vpop.f32.mrb[0].mxu0
    %v1184 = vadd.f32 %v26, %v1183
    %v1185 = vpop.f32.mrb[0].mxu0
    %1186 = vmatprep.mubr.f32.mxu0 0.0
    %1187 = vmatmul.mubr.f32.gmra.mrb[0].mxu0 %v1063
    %v1188 = vpop.f32.mrb[0].mxu0
    %v1189 = vadd.f32 %v27, %v1188
    %v1190 = vpop.f32.mrb[0].mxu0
    %1191 = vmatprep.mubr.f32.mxu0 0.0
    %1192 = vmatmul.mubr.f32.gmra.mrb[0].mxu0 %v1066
    %v1193 = vpop.f32.mrb[0].mxu0
    %v1194 = vadd.f32 %v28, %v1193
    %v1195 = vpop.f32.mrb[0].mxu0
    %1196 = vmatprep.mubr.f32.mxu0 0.0
    %1197 = vmatmul.mubr.f32.gmra.mrb[0].mxu0 %v1069
    %v1198 = vpop.f32.mrb[0].mxu0
    %v1199 = vadd.f32 %v29, %v1198
    %v1200 = vpop.f32.mrb[0].mxu0
    %1201 = vmatprep.mubr.f32.mxu0 0.0
    %1202 = vmatmul.mubr.f32.gmra.mrb[0].mxu0 %v1072
    %v1203 = vpop.f32.mrb[0].mxu0
    %v1204 = vadd.f32 %v30, %v1203
    %v1205 = vpop.f32.mrb[0].mxu0
    %1206 = vmatprep.mubr.f32.mxu0 0.0
    %1207 = vmatmul.mubr.f32.gmra.mrb[0].mxu0 %v1075
    %v1208 = vpop.f32.mrb[0].mxu0
    %v1209 = vadd.f32 %v31, %v1208
    %v1210 = vpop.f32.mrb[0].mxu0
    %1211 = vmatprep.mubr.f32.mxu0 0.0
    %1212 = vmatmul.mubr.f32.gmra.mrb[0].mxu0 %v1078
    %v1213 = vpop.f32.mrb[0].mxu0
    %v1214 = vadd.f32 %v32, %v1213
    %v1215 = vpop.f32.mrb[0].mxu0
    %1216 = vmatprep.mubr.f32.mxu0 0.0
    %1217 = vmatmul.mubr.f32.gmra.mrb[0].mxu0 %v1081
    %v1218 = vpop.f32.mrb[0].mxu0
    %v1219 = vadd.f32 %v33, %v1218
    %v1220 = vpop.f32.mrb[0].mxu0
    %1221 = vmatprep.mubr.f32.mxu0 0.0
    %1222 = vmatmul.mubr.f32.gmra.mrb[0].mxu0 %v1084
    %v1223 = vpop.f32.mrb[0].mxu0
    %v1224 = vadd.f32 %v34, %v1223
    %v1225 = vpop.f32.mrb[0].mxu0
    %1226 = vmatprep.mubr.f32.mxu0 0.0
    %1227 = vmatmul.mubr.f32.gmra.mrb[0].mxu0 %v1087
    %v1228 = vpop.f32.mrb[0].mxu0
    %v1229 = vadd.f32 %v35, %v1228
    %v1230 = vpop.f32.mrb[0].mxu0
    %1231 = vmatprep.mubr.f32.mxu0 0.0
    %1232 = vmatmul.mubr.f32.gmra.mrb[0].mxu0 %v1090
    %v1233 = vpop.f32.mrb[0].mxu0
    %v1234 = vadd.f32 %v36, %v1233
    %v1235 = vpop.f32.mrb[0].mxu0
    %1236 = vdwg.mxu0
    %1237 = vmax.xlane.f32.xlu0 %v1159
    %v1238 = vpop.xlane.xlu0 %1237
    %1239 = vmax.xlane.f32.xlu0 %v1164
    %v1240 = vpop.xlane.xlu0 %1239
    %1241 = vmax.xlane.f32.xlu0 %v1169
    %v1242 = vpop.xlane.xlu0 %1241
    %1243 = vmax.xlane.f32.xlu0 %v1174
    %v1244 = vpop.xlane.xlu0 %1243
    %1245 = vmax.xlane.f32.xlu0 %v1179
    %v1246 = vpop.xlane.xlu0 %1245
    %1247 = vmax.xlane.f32.xlu0 %v1184
    %v1248 = vpop.xlane.xlu0 %1247
    %1249 = vmax.xlane.f32.xlu0 %v1189
    %v1250 = vpop.xlane.xlu0 %1249
    %1251 = vmax.xlane.f32.xlu0 %v1194
    %v1252 = vpop.xlane.xlu0 %1251
    %1253 = vmax.xlane.f32.xlu0 %v1199
    %v1254 = vpop.xlane.xlu0 %1253
    %1255 = vmax.xlane.f32.xlu0 %v1204
    %v1256 = vpop.xlane.xlu0 %1255
    %1257 = vmax.xlane.f32.xlu0 %v1209
    %v1258 = vpop.xlane.xlu0 %1257
    %1259 = vmax.xlane.f32.xlu0 %v1214
    %v1260 = vpop.xlane.xlu0 %1259
    %1261 = vmax.xlane.f32.xlu0 %v1219
    %v1262 = vpop.xlane.xlu0 %1261
    %1263 = vmax.xlane.f32.xlu0 %v1224
    %v1264 = vpop.xlane.xlu0 %1263
    %1265 = vmax.xlane.f32.xlu0 %v1229
    %v1266 = vpop.xlane.xlu0 %1265
    %1267 = vmax.xlane.f32.xlu0 %v1234
    %v1268 = vpop.xlane.xlu0 %1267
    %v1269 = vsub.f32 %v1159, %v1238
    %v1270 = vsub.f32 %v1164, %v1240
    %v1271 = vsub.f32 %v1169, %v1242
    %v1272 = vsub.f32 %v1174, %v1244
    %v1273 = vsub.f32 %v1179, %v1246
    %v1274 = vsub.f32 %v1184, %v1248
    %v1275 = vsub.f32 %v1189, %v1250
    %v1276 = vsub.f32 %v1194, %v1252
    %v1277 = vsub.f32 %v1199, %v1254
    %v1278 = vsub.f32 %v1204, %v1256
    %v1279 = vsub.f32 %v1209, %v1258
    %v1280 = vsub.f32 %v1214, %v1260
    %v1281 = vsub.f32 %v1219, %v1262
    %v1282 = vsub.f32 %v1224, %v1264
    %v1283 = vsub.f32 %v1229, %v1266
    %v1284 = vsub.f32 %v1234, %v1268
    %v1285 = vmul.f32 %v1269, 1.442695
    %v1286 = vpow.pop %v1285
    %v1287 = vmul.f32 %v1270, 1.442695
    %v1288 = vpow.pop %v1287
    %v1289 = vmul.f32 %v1271, 1.442695
    %v1290 = vpow.pop %v1289
    %v1291 = vmul.f32 %v1272, 1.442695
    %v1292 = vpow.pop %v1291
    %v1293 = vmul.f32 %v1273, 1.442695
    %v1294 = vpow.pop %v1293
    %v1295 = vmul.f32 %v1274, 1.442695
    %v1296 = vpow.pop %v1295
    %v1297 = vmul.f32 %v1275, 1.442695
    %v1298 = vpow.pop %v1297
    %v1299 = vmul.f32 %v1276, 1.442695
    %v1300 = vpow.pop %v1299
    %v1301 = vmul.f32 %v1277, 1.442695
    %v1302 = vpow.pop %v1301
    %v1303 = vmul.f32 %v1278, 1.442695
    %v1304 = vpow.pop %v1303
    %v1305 = vmul.f32 %v1279, 1.442695
    %v1306 = vpow.pop %v1305
    %v1307 = vmul.f32 %v1280, 1.442695
    %v1308 = vpow.pop %v1307
    %v1309 = vmul.f32 %v1281, 1.442695
    %v1310 = vpow.pop %v1309
    %v1311 = vmul.f32 %v1282, 1.442695
    %v1312 = vpow.pop %v1311
    %v1313 = vmul.f32 %v1283, 1.442695
    %v1314 = vpow.pop %v1313
    %v1315 = vmul.f32 %v1284, 1.442695
    %v1316 = vpow.pop %v1315
    %1317 = vadd.xlane.f32.xlu0 %v1286
    %v1318 = vpop.xlane.xlu0 %1317
    %1319 = vadd.xlane.f32.xlu0 %v1288
    %v1320 = vpop.xlane.xlu0 %1319
    %1321 = vadd.xlane.f32.xlu0 %v1290
    %v1322 = vpop.xlane.xlu0 %1321
    %1323 = vadd.xlane.f32.xlu0 %v1292
    %v1324 = vpop.xlane.xlu0 %1323
    %1325 = vadd.xlane.f32.xlu0 %v1294
    %v1326 = vpop.xlane.xlu0 %1325
    %1327 = vadd.xlane.f32.xlu0 %v1296
    %v1328 = vpop.xlane.xlu0 %1327
    %1329 = vadd.xlane.f32.xlu0 %v1298
    %v1330 = vpop.xlane.xlu0 %1329
    %1331 = vadd.xlane.f32.xlu0 %v1300
    %v1332 = vpop.xlane.xlu0 %1331
    %1333 = vadd.xlane.f32.xlu0 %v1302
    %v1334 = vpop.xlane.xlu0 %1333
    %1335 = vadd.xlane.f32.xlu0 %v1304
    %v1336 = vpop.xlane.xlu0 %1335
    %1337 = vadd.xlane.f32.xlu0 %v1306
    %v1338 = vpop.xlane.xlu0 %1337
    %1339 = vadd.xlane.f32.xlu0 %v1308
    %v1340 = vpop.xlane.xlu0 %1339
    %1341 = vadd.xlane.f32.xlu0 %v1310
    %v1342 = vpop.xlane.xlu0 %1341
    %1343 = vadd.xlane.f32.xlu0 %v1312
    %v1344 = vpop.xlane.xlu0 %1343
    %1345 = vadd.xlane.f32.xlu0 %v1314
    %v1346 = vpop.xlane.xlu0 %1345
    %1347 = vadd.xlane.f32.xlu0 %v1316
    %v1348 = vpop.xlane.xlu0 %1347
    %v1349 = vrcp.pop %v1318
    %v1350 = vrcp.pop %v1320
    %v1351 = vrcp.pop %v1322
    %v1352 = vrcp.pop %v1324
    %v1353 = vrcp.pop %v1326
    %v1354 = vrcp.pop %v1328
    %v1355 = vrcp.pop %v1330
    %v1356 = vrcp.pop %v1332
    %v1357 = vrcp.pop %v1334
    %v1358 = vrcp.pop %v1336
    %v1359 = vrcp.pop %v1338
    %v1360 = vrcp.pop %v1340
    %v1361 = vrcp.pop %v1342
    %v1362 = vrcp.pop %v1344
    %v1363 = vrcp.pop %v1346
    %v1364 = vrcp.pop %v1348
    %v1365 = vmul.f32 %v1286, %v1349
    %v1366 = vmul.f32 %v1288, %v1350
    %v1367 = vmul.f32 %v1290, %v1351
    %v1368 = vmul.f32 %v1292, %v1352
    %v1369 = vmul.f32 %v1294, %v1353
    %v1370 = vmul.f32 %v1296, %v1354
    %v1371 = vmul.f32 %v1298, %v1355
    %v1372 = vmul.f32 %v1300, %v1356
    %v1373 = vmul.f32 %v1302, %v1357
    %v1374 = vmul.f32 %v1304, %v1358
    %v1375 = vmul.f32 %v1306, %v1359
    %v1376 = vmul.f32 %v1308, %v1360
    %v1377 = vmul.f32 %v1310, %v1361
    %v1378 = vmul.f32 %v1312, %v1362
    %v1379 = vmul.f32 %v1314, %v1363
    %v1380 = vmul.f32 %v1316, %v1364
    %1381 = vmatprep.subr.mxu0 0.0
    %1382 = vmatpush1.xpose.msra.mxu0 %v1365
    %1383 = vmatprep.subr.mxu0 0.0
    %1384 = vmatpush1.xpose.msra.mxu0 %v1366
    %1385 = vmatprep.subr.mxu0 0.0
    %1386 = vmatpush1.xpose.msra.mxu0 %v1367
    %1387 = vmatprep.subr.mxu0 0.0
    %1388 = vmatpush1.xpose.msra.mxu0 %v1368
    %1389 = vmatprep.subr.mxu0 0.0
    %1390 = vmatpush1.xpose.msra.mxu0 %v1369
    %1391 = vmatprep.subr.mxu0 0.0
    %1392 = vmatpush1.xpose.msra.mxu0 %v1370
    %1393 = vmatprep.subr.mxu0 0.0
    %1394 = vmatpush1.xpose.msra.mxu0 %v1371
    %1395 = vmatprep.subr.mxu0 0.0
    %1396 = vmatpush1.xpose.msra.mxu0 %v1372
    %1397 = vmatprep.subr.mxu0 0.0
    %1398 = vmatpush1.xpose.msra.mxu0 %v1373
    %1399 = vmatprep.subr.mxu0 0.0
    %1400 = vmatpush1.xpose.msra.mxu0 %v1374
    %1401 = vmatprep.subr.mxu0 0.0
    %1402 = vmatpush1.xpose.msra.mxu0 %v1375
    %1403 = vmatprep.subr.mxu0 0.0
    %1404 = vmatpush1.xpose.msra.mxu0 %v1376
    %1405 = vmatprep.subr.mxu0 0.0
    %1406 = vmatpush1.xpose.msra.mxu0 %v1377
    %1407 = vmatprep.subr.mxu0 0.0
    %1408 = vmatpush1.xpose.msra.mxu0 %v1378
    %1409 = vmatprep.subr.mxu0 0.0
    %1410 = vmatpush1.xpose.msra.mxu0 %v1379
    %1411 = vmatprep.subr.mxu0 0.0
    %1412 = vmatpush1.xpose.msra.mxu0 %v1380
    %1413 = vmatprep.subr.mxu0 0.0
    %1414 = vmatpush1.xpose.msra.mxu0 0.0
    %1415 = vmatprep.subr.mxu0 0.0
    %1416 = vmatpush1.xpose.msra.mxu0 0.0
    %1417 = vmatprep.subr.mxu0 0.0
    %1418 = vmatpush1.xpose.msra.mxu0 0.0
    %1419 = vmatprep.subr.mxu0 0.0
    %1420 = vmatpush1.xpose.msra.mxu0 0.0
    %1421 = vmatprep.subr.mxu0 0.0
    %1422 = vmatpush1.xpose.msra.mxu0 0.0
    %1423 = vmatprep.subr.mxu0 0.0
    %1424 = vmatpush1.xpose.msra.mxu0 0.0
    %1425 = vmatprep.subr.mxu0 0.0
    %1426 = vmatpush1.xpose.msra.mxu0 0.0
    %1427 = vmatprep.subr.mxu0 0.0
    %1428 = vmatpush1.xpose.msra.mxu0 0.0
    %1429 = vmatprep.subr.mxu0 0.0
    %1430 = vmatpush1.xpose.msra.mxu0 0.0
    %1431 = vmatprep.subr.mxu0 0.0
    %1432 = vmatpush1.xpose.msra.mxu0 0.0
    %1433 = vmatprep.subr.mxu0 0.0
    %1434 = vmatpush1.xpose.msra.mxu0 0.0
    %1435 = vmatprep.subr.mxu0 0.0
    %1436 = vmatpush1.xpose.msra.mxu0 0.0
    %1437 = vmatprep.subr.mxu0 0.0
    %1438 = vmatpush1.xpose.msra.mxu0 0.0
    %1439 = vmatprep.subr.mxu0 0.0
    %1440 = vmatpush1.xpose.msra.mxu0 0.0
    %1441 = vmatprep.subr.mxu0 0.0
    %1442 = vmatpush1.xpose.msra.mxu0 0.0
    %1443 = vmatprep.subr.mxu0 0.0
    %1444 = vmatpush1.xpose.msra.mxu0 0.0
    %1445 = vmatprep.mubr.f32.mxu0 0.0
    %1446 = vmatmul.mubr.f32.gmra.mrb[0].mxu0 %v1004
    %v1447 = vpop.f32.mrb[0].mxu0
    %v1448 = vadd.f32 0.0, %v1447
    %v1449 = vpop.f32.mrb[0].mxu0
    %1450 = vmatprep.mubr.f32.mxu0 0.0
    %1451 = vmatmul.mubr.f32.gmra.mrb[0].mxu0 %v1009
    %v1452 = vpop.f32.mrb[0].mxu0
    %v1453 = vadd.f32 0.0, %v1452
    %v1454 = vpop.f32.mrb[0].mxu0
    %1455 = vdwg.mxu0
    %1456 = vmatprep.subr.mxu0 0.0
    %1457 = vmatpush1.xpose.msra.mxu0 %v548
    %1458 = vmatprep.subr.mxu0 0.0
    %1459 = vmatpush1.xpose.msra.mxu0 %v549
    %1460 = vmatprep.subr.mxu0 0.0
    %1461 = vmatpush1.xpose.msra.mxu0 %v550
    %1462 = vmatprep.subr.mxu0 0.0
    %1463 = vmatpush1.xpose.msra.mxu0 %v551
    %1464 = vmatprep.subr.mxu0 0.0
    %1465 = vmatpush1.xpose.msra.mxu0 %v552
    %1466 = vmatprep.subr.mxu0 0.0
    %1467 = vmatpush1.xpose.msra.mxu0 %v553
    %1468 = vmatprep.subr.mxu0 0.0
    %1469 = vmatpush1.xpose.msra.mxu0 %v554
    %1470 = vmatprep.subr.mxu0 0.0
    %1471 = vmatpush1.xpose.msra.mxu0 %v555
    %1472 = vmatprep.subr.mxu0 0.0
    %1473 = vmatpush1.xpose.msra.mxu0 %v556
    %1474 = vmatprep.subr.mxu0 0.0
    %1475 = vmatpush1.xpose.msra.mxu0 %v557
    %1476 = vmatprep.subr.mxu0 0.0
    %1477 = vmatpush1.xpose.msra.mxu0 %v558
    %1478 = vmatprep.subr.mxu0 0.0
    %1479 = vmatpush1.xpose.msra.mxu0 %v559
    %1480 = vmatprep.subr.mxu0 0.0
    %1481 = vmatpush1.xpose.msra.mxu0 %v560
    %1482 = vmatprep.subr.mxu0 0.0
    %1483 = vmatpush1.xpose.msra.mxu0 %v561
    %1484 = vmatprep.subr.mxu0 0.0
    %1485 = vmatpush1.xpose.msra.mxu0 %v562
    %1486 = vmatprep.subr.mxu0 0.0
    %1487 = vmatpush1.xpose.msra.mxu0 %v563
    %1488 = vmatprep.subr.mxu0 0.0
    %1489 = vmatpush1.xpose.msra.mxu0 0.0
    %1490 = vmatprep.subr.mxu0 0.0
    %1491 = vmatpush1.xpose.msra.mxu0 0.0
    %1492 = vmatprep.subr.mxu0 0.0
    %1493 = vmatpush1.xpose.msra.mxu0 0.0
    %1494 = vmatprep.subr.mxu0 0.0
    %1495 = vmatpush1.xpose.msra.mxu0 0.0
    %1496 = vmatprep.subr.mxu0 0.0
    %1497 = vmatpush1.xpose.msra.mxu0 0.0
    %1498 = vmatprep.subr.mxu0 0.0
    %1499 = vmatpush1.xpose.msra.mxu0 0.0
    %1500 = vmatprep.subr.mxu0 0.0
    %1501 = vmatpush1.xpose.msra.mxu0 0.0
    %1502 = vmatprep.subr.mxu0 0.0
    %1503 = vmatpush1.xpose.msra.mxu0 0.0
    %1504 = vmatprep.subr.mxu0 0.0
    %1505 = vmatpush1.xpose.msra.mxu0 0.0
    %1506 = vmatprep.subr.mxu0 0.0
    %1507 = vmatpush1.xpose.msra.mxu0 0.0
    %1508 = vmatprep.subr.mxu0 0.0
    %1509 = vmatpush1.xpose.msra.mxu0 0.0
    %1510 = vmatprep.subr.mxu0 0.0
    %1511 = vmatpush1.xpose.msra.mxu0 0.0
    %1512 = vmatprep.subr.mxu0 0.0
    %1513 = vmatpush1.xpose.msra.mxu0 0.0
    %1514 = vmatprep.subr.mxu0 0.0
    %1515 = vmatpush1.xpose.msra.mxu0 0.0
    %1516 = vmatprep.subr.mxu0 0.0
    %1517 = vmatpush1.xpose.msra.mxu0 0.0
    %1518 = vmatprep.subr.mxu0 0.0
    %1519 = vmatpush1.xpose.msra.mxu0 0.0
    %1520 = vmatprep.mubr.f32.mxu0 0.0
    %1521 = vmatmul.mubr.f32.gmra.mrb[0].mxu0 %v187
    %v1522 = vpop.f32.mrb[0].mxu0
    %v1523 = vadd.f32 %v1448, %v1522
    %v1524 = vpop.f32.mrb[0].mxu0
    %1525 = vmatprep.mubr.f32.mxu0 0.0
    %1526 = vmatmul.mubr.f32.gmra.mrb[0].mxu0 %v192
    %v1527 = vpop.f32.mrb[0].mxu0
    %v1528 = vadd.f32 %v1453, %v1527
    %v1529 = vpop.f32.mrb[0].mxu0
    %1530 = vdwg.mxu0
    %1531 = vmatprep.subr.mxu0 0.0
    %1532 = vmatpush1.msra.mxu0 %v1004
    %1533 = vmatprep.subr.mxu0 0.0
    %1534 = vmatpush1.msra.mxu0 %v1009
    %1535 = vmatprep.subr.mxu0 0.0
    %1536 = vmatpush1.msra.mxu0 0.0
    %1537 = vmatprep.subr.mxu0 0.0
    %1538 = vmatpush1.msra.mxu0 0.0
    %1539 = vmatprep.subr.mxu0 0.0
    %1540 = vmatpush1.msra.mxu0 0.0
    %1541 = vmatprep.subr.mxu0 0.0
    %1542 = vmatpush1.msra.mxu0 0.0
    %1543 = vmatprep.subr.mxu0 0.0
    %1544 = vmatpush1.msra.mxu0 0.0
    %1545 = vmatprep.subr.mxu0 0.0
    %1546 = vmatpush1.msra.mxu0 0.0
    %1547 = vmatprep.subr.mxu0 0.0
    %1548 = vmatpush1.msra.mxu0 0.0
    %1549 = vmatprep.subr.mxu0 0.0
    %1550 = vmatpush1.msra.mxu0 0.0
    %1551 = vmatprep.subr.mxu0 0.0
    %1552 = vmatpush1.msra.mxu0 0.0
    %1553 = vmatprep.subr.mxu0 0.0
    %1554 = vmatpush1.msra.mxu0 0.0
    %1555 = vmatprep.subr.mxu0 0.0
    %1556 = vmatpush1.msra.mxu0 0.0
    %1557 = vmatprep.subr.mxu0 0.0
    %1558 = vmatpush1.msra.mxu0 0.0
    %1559 = vmatprep.subr.mxu0 0.0
    %1560 = vmatpush1.msra.mxu0 0.0
    %1561 = vmatprep.subr.mxu0 0.0
    %1562 = vmatpush1.msra.mxu0 0.0
    %1563 = vmatprep.subr.mxu0 0.0
    %1564 = vmatpush1.msra.mxu0 0.0
    %1565 = vmatprep.subr.mxu0 0.0
    %1566 = vmatpush1.msra.mxu0 0.0
    %1567 = vmatprep.subr.mxu0 0.0
    %1568 = vmatpush1.msra.mxu0 0.0
    %1569 = vmatprep.subr.mxu0 0.0
    %1570 = vmatpush1.msra.mxu0 0.0
    %1571 = vmatprep.subr.mxu0 0.0
    %1572 = vmatpush1.msra.mxu0 0.0
    %1573 = vmatprep.subr.mxu0 0.0
    %1574 = vmatpush1.msra.mxu0 0.0
    %1575 = vmatprep.subr.mxu0 0.0
    %1576 = vmatpush1.msra.mxu0 0.0
    %1577 = vmatprep.subr.mxu0 0.0
    %1578 = vmatpush1.msra.mxu0 0.0
    %1579 = vmatprep.subr.mxu0 0.0
    %1580 = vmatpush1.msra.mxu0 0.0
    %1581 = vmatprep.subr.mxu0 0.0
    %1582 = vmatpush1.msra.mxu0 0.0
    %1583 = vmatprep.subr.mxu0 0.0
    %1584 = vmatpush1.msra.mxu0 0.0
    %1585 = vmatprep.subr.mxu0 0.0
    %1586 = vmatpush1.msra.mxu0 0.0
    %1587 = vmatprep.subr.mxu0 0.0
    %1588 = vmatpush1.msra.mxu0 0.0
    %1589 = vmatprep.subr.mxu0 0.0
    %1590 = vmatpush1.msra.mxu0 0.0
    %1591 = vmatprep.subr.mxu0 0.0
    %1592 = vmatpush1.msra.mxu0 0.0
    %1593 = vmatprep.subr.mxu0 0.0
    %1594 = vmatpush1.msra.mxu0 0.0
    %1595 = vmatprep.mubr.f32.mxu0 0.0
    %1596 = vmatmul.mubr.f32.gmra.mrb[0].mxu0 %v1045
    %v1597 = vpop.f32.mrb[0].mxu0
    %v1598 = vadd.f32 %v21, %v1597
    %v1599 = vpop.f32.mrb[0].mxu0
    %1600 = vmatprep.mubr.f32.mxu0 0.0
    %1601 = vmatmul.mubr.f32.gmra.mrb[0].mxu0 %v1048
    %v1602 = vpop.f32.mrb[0].mxu0
    %v1603 = vadd.f32 %v22, %v1602
    %v1604 = vpop.f32.mrb[0].mxu0
    %1605 = vmatprep.mubr.f32.mxu0 0.0
    %1606 = vmatmul.mubr.f32.gmra.mrb[0].mxu0 %v1051
    %v1607 = vpop.f32.mrb[0].mxu0
    %v1608 = vadd.f32 %v23, %v1607
    %v1609 = vpop.f32.mrb[0].mxu0
    %1610 = vmatprep.mubr.f32.mxu0 0.0
    %1611 = vmatmul.mubr.f32.gmra.mrb[0].mxu0 %v1054
    %v1612 = vpop.f32.mrb[0].mxu0
    %v1613 = vadd.f32 %v24, %v1612
    %v1614 = vpop.f32.mrb[0].mxu0
    %1615 = vmatprep.mubr.f32.mxu0 0.0
    %1616 = vmatmul.mubr.f32.gmra.mrb[0].mxu0 %v1057
    %v1617 = vpop.f32.mrb[0].mxu0
    %v1618 = vadd.f32 %v25, %v1617
    %v1619 = vpop.f32.mrb[0].mxu0
    %1620 = vmatprep.mubr.f32.mxu0 0.0
    %1621 = vmatmul.mubr.f32.gmra.mrb[0].mxu0 %v1060
    %v1622 = vpop.f32.mrb[0].mxu0
    %v1623 = vadd.f32 %v26, %v1622
    %v1624 = vpop.f32.mrb[0].mxu0
    %1625 = vmatprep.mubr.f32.mxu0 0.0
    %1626 = vmatmul.mubr.f32.gmra.mrb[0].mxu0 %v1063
    %v1627 = vpop.f32.mrb[0].mxu0
    %v1628 = vadd.f32 %v27, %v1627
    %v1629 = vpop.f32.mrb[0].mxu0
    %1630 = vmatprep.mubr.f32.mxu0 0.0
    %1631 = vmatmul.mubr.f32.gmra.mrb[0].mxu0 %v1066
    %v1632 = vpop.f32.mrb[0].mxu0
    %v1633 = vadd.f32 %v28, %v1632
    %v1634 = vpop.f32.mrb[0].mxu0
    %1635 = vmatprep.mubr.f32.mxu0 0.0
    %1636 = vmatmul.mubr.f32.gmra.mrb[0].mxu0 %v1069
    %v1637 = vpop.f32.mrb[0].mxu0
    %v1638 = vadd.f32 %v29, %v1637
    %v1639 = vpop.f32.mrb[0].mxu0
    %1640 = vmatprep.mubr.f32.mxu0 0.0
    %1641 = vmatmul.mubr.f32.gmra.mrb[0].mxu0 %v1072
    %v1642 = vpop.f32.mrb[0].mxu0
    %v1643 = vadd.f32 %v30, %v1642
    %v1644 = vpop.f32.mrb[0].mxu0
    %1645 = vmatprep.mubr.f32.mxu0 0.0
    %1646 = vmatmul.mubr.f32.gmra.mrb[0].mxu0 %v1075
    %v1647 = vpop.f32.mrb[0].mxu0
    %v1648 = vadd.f32 %v31, %v1647
    %v1649 = vpop.f32.mrb[0].mxu0
    %1650 = vmatprep.mubr.f32.mxu0 0.0
    %1651 = vmatmul.mubr.f32.gmra.mrb[0].mxu0 %v1078
    %v1652 = vpop.f32.mrb[0].mxu0
    %v1653 = vadd.f32 %v32, %v1652
    %v1654 = vpop.f32.mrb[0].mxu0
    %1655 = vmatprep.mubr.f32.mxu0 0.0
    %1656 = vmatmul.mubr.f32.gmra.mrb[0].mxu0 %v1081
    %v1657 = vpop.f32.mrb[0].mxu0
    %v1658 = vadd.f32 %v33, %v1657
    %v1659 = vpop.f32.mrb[0].mxu0
    %1660 = vmatprep.mubr.f32.mxu0 0.0
    %1661 = vmatmul.mubr.f32.gmra.mrb[0].mxu0 %v1084
    %v1662 = vpop.f32.mrb[0].mxu0
    %v1663 = vadd.f32 %v34, %v1662
    %v1664 = vpop.f32.mrb[0].mxu0
    %1665 = vmatprep.mubr.f32.mxu0 0.0
    %1666 = vmatmul.mubr.f32.gmra.mrb[0].mxu0 %v1087
    %v1667 = vpop.f32.mrb[0].mxu0
    %v1668 = vadd.f32 %v35, %v1667
    %v1669 = vpop.f32.mrb[0].mxu0
    %1670 = vmatprep.mubr.f32.mxu0 0.0
    %1671 = vmatmul.mubr.f32.gmra.mrb[0].mxu0 %v1090
    %v1672 = vpop.f32.mrb[0].mxu0
    %v1673 = vadd.f32 %v36, %v1672
    %v1674 = vpop.f32.mrb[0].mxu0
    %1675 = vdwg.mxu0
    %1676 = vmax.xlane.f32.xlu0 %v1598
    %v1677 = vpop.xlane.xlu0 %1676
    %1678 = vmax.xlane.f32.xlu0 %v1603
    %v1679 = vpop.xlane.xlu0 %1678
    %1680 = vmax.xlane.f32.xlu0 %v1608
    %v1681 = vpop.xlane.xlu0 %1680
    %1682 = vmax.xlane.f32.xlu0 %v1613
    %v1683 = vpop.xlane.xlu0 %1682
    %1684 = vmax.xlane.f32.xlu0 %v1618
    %v1685 = vpop.xlane.xlu0 %1684
    %1686 = vmax.xlane.f32.xlu0 %v1623
    %v1687 = vpop.xlane.xlu0 %1686
    %1688 = vmax.xlane.f32.xlu0 %v1628
    %v1689 = vpop.xlane.xlu0 %1688
    %1690 = vmax.xlane.f32.xlu0 %v1633
    %v1691 = vpop.xlane.xlu0 %1690
    %1692 = vmax.xlane.f32.xlu0 %v1638
    %v1693 = vpop.xlane.xlu0 %1692
    %1694 = vmax.xlane.f32.xlu0 %v1643
    %v1695 = vpop.xlane.xlu0 %1694
    %1696 = vmax.xlane.f32.xlu0 %v1648
    %v1697 = vpop.xlane.xlu0 %1696
    %1698 = vmax.xlane.f32.xlu0 %v1653
    %v1699 = vpop.xlane.xlu0 %1698
    %1700 = vmax.xlane.f32.xlu0 %v1658
    %v1701 = vpop.xlane.xlu0 %1700
    %1702 = vmax.xlane.f32.xlu0 %v1663
    %v1703 = vpop.xlane.xlu0 %1702
    %1704 = vmax.xlane.f32.xlu0 %v1668
    %v1705 = vpop.xlane.xlu0 %1704
    %1706 = vmax.xlane.f32.xlu0 %v1673
    %v1707 = vpop.xlane.xlu0 %1706
    %v1708 = vsub.f32 %v1598, %v1677
    %v1709 = vsub.f32 %v1603, %v1679
    %v1710 = vsub.f32 %v1608, %v1681
    %v1711 = vsub.f32 %v1613, %v1683
    %v1712 = vsub.f32 %v1618, %v1685
    %v1713 = vsub.f32 %v1623, %v1687
    %v1714 = vsub.f32 %v1628, %v1689
    %v1715 = vsub.f32 %v1633, %v1691
    %v1716 = vsub.f32 %v1638, %v1693
    %v1717 = vsub.f32 %v1643, %v1695
    %v1718 = vsub.f32 %v1648, %v1697
    %v1719 = vsub.f32 %v1653, %v1699
    %v1720 = vsub.f32 %v1658, %v1701
    %v1721 = vsub.f32 %v1663, %v1703
    %v1722 = vsub.f32 %v1668, %v1705
    %v1723 = vsub.f32 %v1673, %v1707
    %v1724 = vmul.f32 %v1708, 1.442695
    %v1725 = vpow.pop %v1724
    %v1726 = vmul.f32 %v1709, 1.442695
    %v1727 = vpow.pop %v1726
    %v1728 = vmul.f32 %v1710, 1.442695
    %v1729 = vpow.pop %v1728
    %v1730 = vmul.f32 %v1711, 1.442695
    %v1731 = vpow.pop %v1730
    %v1732 = vmul.f32 %v1712, 1.442695
    %v1733 = vpow.pop %v1732
    %v1734 = vmul.f32 %v1713, 1.442695
    %v1735 = vpow.pop %v1734
    %v1736 = vmul.f32 %v1714, 1.442695
    %v1737 = vpow.pop %v1736
    %v1738 = vmul.f32 %v1715, 1.442695
    %v1739 = vpow.pop %v1738
    %v1740 = vmul.f32 %v1716, 1.442695
    %v1741 = vpow.pop %v1740
    %v1742 = vmul.f32 %v1717, 1.442695
    %v1743 = vpow.pop %v1742
    %v1744 = vmul.f32 %v1718, 1.442695
    %v1745 = vpow.pop %v1744
    %v1746 = vmul.f32 %v1719, 1.442695
    %v1747 = vpow.pop %v1746
    %v1748 = vmul.f32 %v1720, 1.442695
    %v1749 = vpow.pop %v1748
    %v1750 = vmul.f32 %v1721, 1.442695
    %v1751 = vpow.pop %v1750
    %v1752 = vmul.f32 %v1722, 1.442695
    %v1753 = vpow.pop %v1752
    %v1754 = vmul.f32 %v1723, 1.442695
    %v1755 = vpow.pop %v1754
    %1756 = vadd.xlane.f32.xlu0 %v1725
    %v1757 = vpop.xlane.xlu0 %1756
    %1758 = vadd.xlane.f32.xlu0 %v1727
    %v1759 = vpop.xlane.xlu0 %1758
    %1760 = vadd.xlane.f32.xlu0 %v1729
    %v1761 = vpop.xlane.xlu0 %1760
    %1762 = vadd.xlane.f32.xlu0 %v1731
    %v1763 = vpop.xlane.xlu0 %1762
    %1764 = vadd.xlane.f32.xlu0 %v1733
    %v1765 = vpop.xlane.xlu0 %1764
    %1766 = vadd.xlane.f32.xlu0 %v1735
    %v1767 = vpop.xlane.xlu0 %1766
    %1768 = vadd.xlane.f32.xlu0 %v1737
    %v1769 = vpop.xlane.xlu0 %1768
    %1770 = vadd.xlane.f32.xlu0 %v1739
    %v1771 = vpop.xlane.xlu0 %1770
    %1772 = vadd.xlane.f32.xlu0 %v1741
    %v1773 = vpop.xlane.xlu0 %1772
    %1774 = vadd.xlane.f32.xlu0 %v1743
    %v1775 = vpop.xlane.xlu0 %1774
    %1776 = vadd.xlane.f32.xlu0 %v1745
    %v1777 = vpop.xlane.xlu0 %1776
    %1778 = vadd.xlane.f32.xlu0 %v1747
    %v1779 = vpop.xlane.xlu0 %1778
    %1780 = vadd.xlane.f32.xlu0 %v1749
    %v1781 = vpop.xlane.xlu0 %1780
    %1782 = vadd.xlane.f32.xlu0 %v1751
    %v1783 = vpop.xlane.xlu0 %1782
    %1784 = vadd.xlane.f32.xlu0 %v1753
    %v1785 = vpop.xlane.xlu0 %1784
    %1786 = vadd.xlane.f32.xlu0 %v1755
    %v1787 = vpop.xlane.xlu0 %1786
    %v1788 = vrcp.pop %v1757
    %v1789 = vrcp.pop %v1759
    %v1790 = vrcp.pop %v1761
    %v1791 = vrcp.pop %v1763
    %v1792 = vrcp.pop %v1765
    %v1793 = vrcp.pop %v1767
    %v1794 = vrcp.pop %v1769
    %v1795 = vrcp.pop %v1771
    %v1796 = vrcp.pop %v1773
    %v1797 = vrcp.pop %v1775
    %v1798 = vrcp.pop %v1777
    %v1799 = vrcp.pop %v1779
    %v1800 = vrcp.pop %v1781
    %v1801 = vrcp.pop %v1783
    %v1802 = vrcp.pop %v1785
    %v1803 = vrcp.pop %v1787
    %v1804 = vmul.f32 %v1725, %v1788
    %v1805 = vmul.f32 %v1727, %v1789
    %v1806 = vmul.f32 %v1729, %v1790
    %v1807 = vmul.f32 %v1731, %v1791
    %v1808 = vmul.f32 %v1733, %v1792
    %v1809 = vmul.f32 %v1735, %v1793
    %v1810 = vmul.f32 %v1737, %v1794
    %v1811 = vmul.f32 %v1739, %v1795
    %v1812 = vmul.f32 %v1741, %v1796
    %v1813 = vmul.f32 %v1743, %v1797
    %v1814 = vmul.f32 %v1745, %v1798
    %v1815 = vmul.f32 %v1747, %v1799
    %v1816 = vmul.f32 %v1749, %v1800
    %v1817 = vmul.f32 %v1751, %v1801
    %v1818 = vmul.f32 %v1753, %v1802
    %v1819 = vmul.f32 %v1755, %v1803
    %1820 = vmatprep.subr.mxu0 0.0
    %1821 = vmatpush1.msra.mxu0 %v1804
    %1822 = vmatprep.subr.mxu0 0.0
    %1823 = vmatpush1.msra.mxu0 %v1805
    %1824 = vmatprep.subr.mxu0 0.0
    %1825 = vmatpush1.msra.mxu0 %v1806
    %1826 = vmatprep.subr.mxu0 0.0
    %1827 = vmatpush1.msra.mxu0 %v1807
    %1828 = vmatprep.subr.mxu0 0.0
    %1829 = vmatpush1.msra.mxu0 %v1808
    %1830 = vmatprep.subr.mxu0 0.0
    %1831 = vmatpush1.msra.mxu0 %v1809
    %1832 = vmatprep.subr.mxu0 0.0
    %1833 = vmatpush1.msra.mxu0 %v1810
    %1834 = vmatprep.subr.mxu0 0.0
    %1835 = vmatpush1.msra.mxu0 %v1811
    %1836 = vmatprep.subr.mxu0 0.0
    %1837 = vmatpush1.msra.mxu0 %v1812
    %1838 = vmatprep.subr.mxu0 0.0
    %1839 = vmatpush1.msra.mxu0 %v1813
    %1840 = vmatprep.subr.mxu0 0.0
    %1841 = vmatpush1.msra.mxu0 %v1814
    %1842 = vmatprep.subr.mxu0 0.0
    %1843 = vmatpush1.msra.mxu0 %v1815
    %1844 = vmatprep.subr.mxu0 0.0
    %1845 = vmatpush1.msra.mxu0 %v1816
    %1846 = vmatprep.subr.mxu0 0.0
    %1847 = vmatpush1.msra.mxu0 %v1817
    %1848 = vmatprep.subr.mxu0 0.0
    %1849 = vmatpush1.msra.mxu0 %v1818
    %1850 = vmatprep.subr.mxu0 0.0
    %1851 = vmatpush1.msra.mxu0 %v1819
    %1852 = vmatprep.subr.mxu0 0.0
    %1853 = vmatpush1.msra.mxu0 0.0
    %1854 = vmatprep.subr.mxu0 0.0
    %1855 = vmatpush1.msra.mxu0 0.0
    %1856 = vmatprep.subr.mxu0 0.0
    %1857 = vmatpush1.msra.mxu0 0.0
    %1858 = vmatprep.subr.mxu0 0.0
    %1859 = vmatpush1.msra.mxu0 0.0
    %1860 = vmatprep.subr.mxu0 0.0
    %1861 = vmatpush1.msra.mxu0 0.0
    %1862 = vmatprep.subr.mxu0 0.0
    %1863 = vmatpush1.msra.mxu0 0.0
    %1864 = vmatprep.subr.mxu0 0.0
    %1865 = vmatpush1.msra.mxu0 0.0
    %1866 = vmatprep.subr.mxu0 0.0
    %1867 = vmatpush1.msra.mxu0 0.0
    %1868 = vmatprep.subr.mxu0 0.0
    %1869 = vmatpush1.msra.mxu0 0.0
    %1870 = vmatprep.subr.mxu0 0.0
    %1871 = vmatpush1.msra.mxu0 0.0
    %1872 = vmatprep.subr.mxu0 0.0
    %1873 = vmatpush1.msra.mxu0 0.0
    %1874 = vmatprep.subr.mxu0 0.0
    %1875 = vmatpush1.msra.mxu0 0.0
    %1876 = vmatprep.subr.mxu0 0.0
    %1877 = vmatpush1.msra.mxu0 0.0
    %1878 = vmatprep.subr.mxu0 0.0
    %1879 = vmatpush1.msra.mxu0 0.0
    %1880 = vmatprep.subr.mxu0 0.0
    %1881 = vmatpush1.msra.mxu0 0.0
    %1882 = vmatprep.subr.mxu0 0.0
    %1883 = vmatpush1.msra.mxu0 0.0
    %1884 = vmatprep.mubr.f32.mxu0 0.0
    %1885 = vmatmul.mubr.f32.gmra.mrb[0].mxu0 %v984
    %v1886 = vpop.f32.mrb[0].mxu0
    %v1887 = vadd.f32 0.0, %v1886
    %v1888 = vpop.f32.mrb[0].mxu0
    %1889 = vmatprep.mubr.f32.mxu0 0.0
    %1890 = vmatmul.mubr.f32.gmra.mrb[0].mxu0 %v989
    %v1891 = vpop.f32.mrb[0].mxu0
    %v1892 = vadd.f32 0.0, %v1891
    %v1893 = vpop.f32.mrb[0].mxu0
    %1894 = vdwg.mxu0
    %1895 = vmatprep.subr.mxu0 0.0
    %1896 = vmatpush1.msra.mxu0 %v837
    %1897 = vmatprep.subr.mxu0 0.0
    %1898 = vmatpush1.msra.mxu0 %v838
    %1899 = vmatprep.subr.mxu0 0.0
    %1900 = vmatpush1.msra.mxu0 %v839
    %1901 = vmatprep.subr.mxu0 0.0
    %1902 = vmatpush1.msra.mxu0 %v840
    %1903 = vmatprep.subr.mxu0 0.0
    %1904 = vmatpush1.msra.mxu0 %v841
    %1905 = vmatprep.subr.mxu0 0.0
    %1906 = vmatpush1.msra.mxu0 %v842
    %1907 = vmatprep.subr.mxu0 0.0
    %1908 = vmatpush1.msra.mxu0 %v843
    %1909 = vmatprep.subr.mxu0 0.0
    %1910 = vmatpush1.msra.mxu0 %v844
    %1911 = vmatprep.subr.mxu0 0.0
    %1912 = vmatpush1.msra.mxu0 %v845
    %1913 = vmatprep.subr.mxu0 0.0
    %1914 = vmatpush1.msra.mxu0 %v846
    %1915 = vmatprep.subr.mxu0 0.0
    %1916 = vmatpush1.msra.mxu0 %v847
    %1917 = vmatprep.subr.mxu0 0.0
    %1918 = vmatpush1.msra.mxu0 %v848
    %1919 = vmatprep.subr.mxu0 0.0
    %1920 = vmatpush1.msra.mxu0 %v849
    %1921 = vmatprep.subr.mxu0 0.0
    %1922 = vmatpush1.msra.mxu0 %v850
    %1923 = vmatprep.subr.mxu0 0.0
    %1924 = vmatpush1.msra.mxu0 %v851
    %1925 = vmatprep.subr.mxu0 0.0
    %1926 = vmatpush1.msra.mxu0 %v852
    %1927 = vmatprep.subr.mxu0 0.0
    %1928 = vmatpush1.msra.mxu0 0.0
    %1929 = vmatprep.subr.mxu0 0.0
    %1930 = vmatpush1.msra.mxu0 0.0
    %1931 = vmatprep.subr.mxu0 0.0
    %1932 = vmatpush1.msra.mxu0 0.0
    %1933 = vmatprep.subr.mxu0 0.0
    %1934 = vmatpush1.msra.mxu0 0.0
    %1935 = vmatprep.subr.mxu0 0.0
    %1936 = vmatpush1.msra.mxu0 0.0
    %1937 = vmatprep.subr.mxu0 0.0
    %1938 = vmatpush1.msra.mxu0 0.0
    %1939 = vmatprep.subr.mxu0 0.0
    %1940 = vmatpush1.msra.mxu0 0.0
    %1941 = vmatprep.subr.mxu0 0.0
    %1942 = vmatpush1.msra.mxu0 0.0
    %1943 = vmatprep.subr.mxu0 0.0
    %1944 = vmatpush1.msra.mxu0 0.0
    %1945 = vmatprep.subr.mxu0 0.0
    %1946 = vmatpush1.msra.mxu0 0.0
    %1947 = vmatprep.subr.mxu0 0.0
    %1948 = vmatpush1.msra.mxu0 0.0
    %1949 = vmatprep.subr.mxu0 0.0
    %1950 = vmatpush1.msra.mxu0 0.0
    %1951 = vmatprep.subr.mxu0 0.0
    %1952 = vmatpush1.msra.mxu0 0.0
    %1953 = vmatprep.subr.mxu0 0.0
    %1954 = vmatpush1.msra.mxu0 0.0
    %1955 = vmatprep.subr.mxu0 0.0
    %1956 = vmatpush1.msra.mxu0 0.0
    %1957 = vmatprep.subr.mxu0 0.0
    %1958 = vmatpush1.msra.mxu0 0.0
    %1959 = vmatprep.mubr.f32.mxu0 0.0
    %1960 = vmatmul.mubr.f32.gmra.mrb[0].mxu0 %v167
    %v1961 = vpop.f32.mrb[0].mxu0
    %v1962 = vadd.f32 %v1887, %v1961
    %v1963 = vpop.f32.mrb[0].mxu0
    %1964 = vmatprep.mubr.f32.mxu0 0.0
    %1965 = vmatmul.mubr.f32.gmra.mrb[0].mxu0 %v172
    %v1966 = vpop.f32.mrb[0].mxu0
    %v1967 = vadd.f32 %v1892, %v1966
    %v1968 = vpop.f32.mrb[0].mxu0
    %1969 = vdwg.mxu0
    %1970 = vxpose.xlu0.b32.start [1/16] %v1962, 128
    %1971 = vxpose.xlu0.b32.cont [2/16] %v1967, 128
    %1972 = vxpose.xlu0.b32.cont [3/16] 0.0, 128
    %1973 = vxpose.xlu0.b32.cont [4/16] 0.0, 128
    %1974 = vxpose.xlu0.b32.cont [5/16] 0.0, 128
    %1975 = vxpose.xlu0.b32.cont [6/16] 0.0, 128
    %1976 = vxpose.xlu0.b32.cont [7/16] 0.0, 128
    %1977 = vxpose.xlu0.b32.cont [8/16] 0.0, 128
    %1978 = vxpose.xlu0.b32.cont [9/16] 0.0, 128
    %1979 = vxpose.xlu0.b32.cont [10/16] 0.0, 128
    %1980 = vxpose.xlu0.b32.cont [11/16] 0.0, 128
    %1981 = vxpose.xlu0.b32.cont [12/16] 0.0, 128
    %1982 = vxpose.xlu0.b32.cont [13/16] 0.0, 128
    %1983 = vxpose.xlu0.b32.cont [14/16] 0.0, 128
    %1984 = vxpose.xlu0.b32.cont [15/16] 0.0, 128
    %1985 = vxpose.xlu0.b32.end [16/16] 0.0, 128
    %v1986 = vpop.trf.xlu0
    %v1987 = vpop.trf.xlu0
    %v1988 = vpop.trf.xlu0
    %v1989 = vpop.trf.xlu0
    %v1990 = vpop.trf.xlu0
    %v1991 = vpop.trf.xlu0
    %v1992 = vpop.trf.xlu0
    %v1993 = vpop.trf.xlu0
    %v1994 = vpop.trf.xlu0
    %v1995 = vpop.trf.xlu0
    %v1996 = vpop.trf.xlu0
    %v1997 = vpop.trf.xlu0
    %v1998 = vpop.trf.xlu0
    %v1999 = vpop.trf.xlu0
    %v2000 = vpop.trf.xlu0
    %v2001 = vpop.trf.xlu0
    %2002 = vxpose.xlu0.b32.start [1/16] %v1986, 128
    %2003 = vxpose.xlu0.b32.cont [2/16] %v1987, 128
    %2004 = vxpose.xlu0.b32.cont [3/16] 0.0, 128
    %2005 = vxpose.xlu0.b32.cont [4/16] 0.0, 128
    %2006 = vxpose.xlu0.b32.cont [5/16] 0.0, 128
    %2007 = vxpose.xlu0.b32.cont [6/16] 0.0, 128
    %2008 = vxpose.xlu0.b32.cont [7/16] 0.0, 128
    %2009 = vxpose.xlu0.b32.cont [8/16] 0.0, 128
    %2010 = vxpose.xlu0.b32.cont [9/16] 0.0, 128
    %2011 = vxpose.xlu0.b32.cont [10/16] 0.0, 128
    %2012 = vxpose.xlu0.b32.cont [11/16] 0.0, 128
    %2013 = vxpose.xlu0.b32.cont [12/16] 0.0, 128
    %2014 = vxpose.xlu0.b32.cont [13/16] 0.0, 128
    %2015 = vxpose.xlu0.b32.cont [14/16] 0.0, 128
    %2016 = vxpose.xlu0.b32.cont [15/16] 0.0, 128
    %2017 = vxpose.xlu0.b32.end [16/16] 0.0, 128
    %v2018 = vpop.trf.xlu0
    %v2019 = vpop.trf.xlu0
    %v2020 = vpop.trf.xlu0
    %v2021 = vpop.trf.xlu0
    %v2022 = vpop.trf.xlu0
    %v2023 = vpop.trf.xlu0
    %v2024 = vpop.trf.xlu0
    %v2025 = vpop.trf.xlu0
    %v2026 = vpop.trf.xlu0
    %v2027 = vpop.trf.xlu0
    %v2028 = vpop.trf.xlu0
    %v2029 = vpop.trf.xlu0
    %v2030 = vpop.trf.xlu0
    %v2031 = vpop.trf.xlu0
    %v2032 = vpop.trf.xlu0
    %v2033 = vpop.trf.xlu0
    %2034 = vxpose.xlu0.b32.start [1/16] %v1988, 128
    %2035 = vxpose.xlu0.b32.cont [2/16] %v1989, 128
    %2036 = vxpose.xlu0.b32.cont [3/16] 0.0, 128
    %2037 = vxpose.xlu0.b32.cont [4/16] 0.0, 128
    %2038 = vxpose.xlu0.b32.cont [5/16] 0.0, 128
    %2039 = vxpose.xlu0.b32.cont [6/16] 0.0, 128
    %2040 = vxpose.xlu0.b32.cont [7/16] 0.0, 128
    %2041 = vxpose.xlu0.b32.cont [8/16] 0.0, 128
    %2042 = vxpose.xlu0.b32.cont [9/16] 0.0, 128
    %2043 = vxpose.xlu0.b32.cont [10/16] 0.0, 128
    %2044 = vxpose.xlu0.b32.cont [11/16] 0.0, 128
    %2045 = vxpose.xlu0.b32.cont [12/16] 0.0, 128
    %2046 = vxpose.xlu0.b32.cont [13/16] 0.0, 128
    %2047 = vxpose.xlu0.b32.cont [14/16] 0.0, 128
    %2048 = vxpose.xlu0.b32.cont [15/16] 0.0, 128
    %2049 = vxpose.xlu0.b32.end [16/16] 0.0, 128
    %v2050 = vpop.trf.xlu0
    %v2051 = vpop.trf.xlu0
    %v2052 = vpop.trf.xlu0
    %v2053 = vpop.trf.xlu0
    %v2054 = vpop.trf.xlu0
    %v2055 = vpop.trf.xlu0
    %v2056 = vpop.trf.xlu0
    %v2057 = vpop.trf.xlu0
    %v2058 = vpop.trf.xlu0
    %v2059 = vpop.trf.xlu0
    %v2060 = vpop.trf.xlu0
    %v2061 = vpop.trf.xlu0
    %v2062 = vpop.trf.xlu0
    %v2063 = vpop.trf.xlu0
    %v2064 = vpop.trf.xlu0
    %v2065 = vpop.trf.xlu0
    %2066 = vxpose.xlu0.b32.start [1/16] %v1990, 128
    %2067 = vxpose.xlu0.b32.cont [2/16] %v1991, 128
    %2068 = vxpose.xlu0.b32.cont [3/16] 0.0, 128
    %2069 = vxpose.xlu0.b32.cont [4/16] 0.0, 128
    %2070 = vxpose.xlu0.b32.cont [5/16] 0.0, 128
    %2071 = vxpose.xlu0.b32.cont [6/16] 0.0, 128
    %2072 = vxpose.xlu0.b32.cont [7/16] 0.0, 128
    %2073 = vxpose.xlu0.b32.cont [8/16] 0.0, 128
    %2074 = vxpose.xlu0.b32.cont [9/16] 0.0, 128
    %2075 = vxpose.xlu0.b32.cont [10/16] 0.0, 128
    %2076 = vxpose.xlu0.b32.cont [11/16] 0.0, 128
    %2077 = vxpose.xlu0.b32.cont [12/16] 0.0, 128
    %2078 = vxpose.xlu0.b32.cont [13/16] 0.0, 128
    %2079 = vxpose.xlu0.b32.cont [14/16] 0.0, 128
    %2080 = vxpose.xlu0.b32.cont [15/16] 0.0, 128
    %2081 = vxpose.xlu0.b32.end [16/16] 0.0, 128
    %v2082 = vpop.trf.xlu0
    %v2083 = vpop.trf.xlu0
    %v2084 = vpop.trf.xlu0
    %v2085 = vpop.trf.xlu0
    %v2086 = vpop.trf.xlu0
    %v2087 = vpop.trf.xlu0
    %v2088 = vpop.trf.xlu0
    %v2089 = vpop.trf.xlu0
    %v2090 = vpop.trf.xlu0
    %v2091 = vpop.trf.xlu0
    %v2092 = vpop.trf.xlu0
    %v2093 = vpop.trf.xlu0
    %v2094 = vpop.trf.xlu0
    %v2095 = vpop.trf.xlu0
    %v2096 = vpop.trf.xlu0
    %v2097 = vpop.trf.xlu0
    %2098 = vxpose.xlu0.b32.start [1/16] %v1992, 128
    %2099 = vxpose.xlu0.b32.cont [2/16] %v1993, 128
    %2100 = vxpose.xlu0.b32.cont [3/16] 0.0, 128
    %2101 = vxpose.xlu0.b32.cont [4/16] 0.0, 128
    %2102 = vxpose.xlu0.b32.cont [5/16] 0.0, 128
    %2103 = vxpose.xlu0.b32.cont [6/16] 0.0, 128
    %2104 = vxpose.xlu0.b32.cont [7/16] 0.0, 128
    %2105 = vxpose.xlu0.b32.cont [8/16] 0.0, 128
    %2106 = vxpose.xlu0.b32.cont [9/16] 0.0, 128
    %2107 = vxpose.xlu0.b32.cont [10/16] 0.0, 128
    %2108 = vxpose.xlu0.b32.cont [11/16] 0.0, 128
    %2109 = vxpose.xlu0.b32.cont [12/16] 0.0, 128
    %2110 = vxpose.xlu0.b32.cont [13/16] 0.0, 128
    %2111 = vxpose.xlu0.b32.cont [14/16] 0.0, 128
    %2112 = vxpose.xlu0.b32.cont [15/16] 0.0, 128
    %2113 = vxpose.xlu0.b32.end [16/16] 0.0, 128
    %v2114 = vpop.trf.xlu0
    %v2115 = vpop.trf.xlu0
    %v2116 = vpop.trf.xlu0
    %v2117 = vpop.trf.xlu0
    %v2118 = vpop.trf.xlu0
    %v2119 = vpop.trf.xlu0
    %v2120 = vpop.trf.xlu0
    %v2121 = vpop.trf.xlu0
    %v2122 = vpop.trf.xlu0
    %v2123 = vpop.trf.xlu0
    %v2124 = vpop.trf.xlu0
    %v2125 = vpop.trf.xlu0
    %v2126 = vpop.trf.xlu0
    %v2127 = vpop.trf.xlu0
    %v2128 = vpop.trf.xlu0
    %v2129 = vpop.trf.xlu0
    %2130 = vxpose.xlu0.b32.start [1/16] %v1994, 128
    %2131 = vxpose.xlu0.b32.cont [2/16] %v1995, 128
    %2132 = vxpose.xlu0.b32.cont [3/16] 0.0, 128
    %2133 = vxpose.xlu0.b32.cont [4/16] 0.0, 128
    %2134 = vxpose.xlu0.b32.cont [5/16] 0.0, 128
    %2135 = vxpose.xlu0.b32.cont [6/16] 0.0, 128
    %2136 = vxpose.xlu0.b32.cont [7/16] 0.0, 128
    %2137 = vxpose.xlu0.b32.cont [8/16] 0.0, 128
    %2138 = vxpose.xlu0.b32.cont [9/16] 0.0, 128
    %2139 = vxpose.xlu0.b32.cont [10/16] 0.0, 128
    %2140 = vxpose.xlu0.b32.cont [11/16] 0.0, 128
    %2141 = vxpose.xlu0.b32.cont [12/16] 0.0, 128
    %2142 = vxpose.xlu0.b32.cont [13/16] 0.0, 128
    %2143 = vxpose.xlu0.b32.cont [14/16] 0.0, 128
    %2144 = vxpose.xlu0.b32.cont [15/16] 0.0, 128
    %2145 = vxpose.xlu0.b32.end [16/16] 0.0, 128
    %v2146 = vpop.trf.xlu0
    %v2147 = vpop.trf.xlu0
    %v2148 = vpop.trf.xlu0
    %v2149 = vpop.trf.xlu0
    %v2150 = vpop.trf.xlu0
    %v2151 = vpop.trf.xlu0
    %v2152 = vpop.trf.xlu0
    %v2153 = vpop.trf.xlu0
    %v2154 = vpop.trf.xlu0
    %v2155 = vpop.trf.xlu0
    %v2156 = vpop.trf.xlu0
    %v2157 = vpop.trf.xlu0
    %v2158 = vpop.trf.xlu0
    %v2159 = vpop.trf.xlu0
    %v2160 = vpop.trf.xlu0
    %v2161 = vpop.trf.xlu0
    %2162 = vxpose.xlu0.b32.start [1/16] %v1996, 128
    %2163 = vxpose.xlu0.b32.cont [2/16] %v1997, 128
    %2164 = vxpose.xlu0.b32.cont [3/16] 0.0, 128
    %2165 = vxpose.xlu0.b32.cont [4/16] 0.0, 128
    %2166 = vxpose.xlu0.b32.cont [5/16] 0.0, 128
    %2167 = vxpose.xlu0.b32.cont [6/16] 0.0, 128
    %2168 = vxpose.xlu0.b32.cont [7/16] 0.0, 128
    %2169 = vxpose.xlu0.b32.cont [8/16] 0.0, 128
    %2170 = vxpose.xlu0.b32.cont [9/16] 0.0, 128
    %2171 = vxpose.xlu0.b32.cont [10/16] 0.0, 128
    %2172 = vxpose.xlu0.b32.cont [11/16] 0.0, 128
    %2173 = vxpose.xlu0.b32.cont [12/16] 0.0, 128
    %2174 = vxpose.xlu0.b32.cont [13/16] 0.0, 128
    %2175 = vxpose.xlu0.b32.cont [14/16] 0.0, 128
    %2176 = vxpose.xlu0.b32.cont [15/16] 0.0, 128
    %2177 = vxpose.xlu0.b32.end [16/16] 0.0, 128
    %v2178 = vpop.trf.xlu0
    %v2179 = vpop.trf.xlu0
    %v2180 = vpop.trf.xlu0
    %v2181 = vpop.trf.xlu0
    %v2182 = vpop.trf.xlu0
    %v2183 = vpop.trf.xlu0
    %v2184 = vpop.trf.xlu0
    %v2185 = vpop.trf.xlu0
    %v2186 = vpop.trf.xlu0
    %v2187 = vpop.trf.xlu0
    %v2188 = vpop.trf.xlu0
    %v2189 = vpop.trf.xlu0
    %v2190 = vpop.trf.xlu0
    %v2191 = vpop.trf.xlu0
    %v2192 = vpop.trf.xlu0
    %v2193 = vpop.trf.xlu0
    %2194 = vxpose.xlu0.b32.start [1/16] %v1998, 128
    %2195 = vxpose.xlu0.b32.cont [2/16] %v1999, 128
    %2196 = vxpose.xlu0.b32.cont [3/16] 0.0, 128
    %2197 = vxpose.xlu0.b32.cont [4/16] 0.0, 128
    %2198 = vxpose.xlu0.b32.cont [5/16] 0.0, 128
    %2199 = vxpose.xlu0.b32.cont [6/16] 0.0, 128
    %2200 = vxpose.xlu0.b32.cont [7/16] 0.0, 128
    %2201 = vxpose.xlu0.b32.cont [8/16] 0.0, 128
    %2202 = vxpose.xlu0.b32.cont [9/16] 0.0, 128
    %2203 = vxpose.xlu0.b32.cont [10/16] 0.0, 128
    %2204 = vxpose.xlu0.b32.cont [11/16] 0.0, 128
    %2205 = vxpose.xlu0.b32.cont [12/16] 0.0, 128
    %2206 = vxpose.xlu0.b32.cont [13/16] 0.0, 128
    %2207 = vxpose.xlu0.b32.cont [14/16] 0.0, 128
    %2208 = vxpose.xlu0.b32.cont [15/16] 0.0, 128
    %2209 = vxpose.xlu0.b32.end [16/16] 0.0, 128
    %v2210 = vpop.trf.xlu0
    %v2211 = vpop.trf.xlu0
    %v2212 = vpop.trf.xlu0
    %v2213 = vpop.trf.xlu0
    %v2214 = vpop.trf.xlu0
    %v2215 = vpop.trf.xlu0
    %v2216 = vpop.trf.xlu0
    %v2217 = vpop.trf.xlu0
    %v2218 = vpop.trf.xlu0
    %v2219 = vpop.trf.xlu0
    %v2220 = vpop.trf.xlu0
    %v2221 = vpop.trf.xlu0
    %v2222 = vpop.trf.xlu0
    %v2223 = vpop.trf.xlu0
    %v2224 = vpop.trf.xlu0
    %v2225 = vpop.trf.xlu0
    %2226 = vxpose.xlu0.b32.start [1/16] %v2000, 128
    %2227 = vxpose.xlu0.b32.cont [2/16] %v2001, 128
    %2228 = vxpose.xlu0.b32.cont [3/16] 0.0, 128
    %2229 = vxpose.xlu0.b32.cont [4/16] 0.0, 128
    %2230 = vxpose.xlu0.b32.cont [5/16] 0.0, 128
    %2231 = vxpose.xlu0.b32.cont [6/16] 0.0, 128
    %2232 = vxpose.xlu0.b32.cont [7/16] 0.0, 128
    %2233 = vxpose.xlu0.b32.cont [8/16] 0.0, 128
    %2234 = vxpose.xlu0.b32.cont [9/16] 0.0, 128
    %2235 = vxpose.xlu0.b32.cont [10/16] 0.0, 128
    %2236 = vxpose.xlu0.b32.cont [11/16] 0.0, 128
    %2237 = vxpose.xlu0.b32.cont [12/16] 0.0, 128
    %2238 = vxpose.xlu0.b32.cont [13/16] 0.0, 128
    %2239 = vxpose.xlu0.b32.cont [14/16] 0.0, 128
    %2240 = vxpose.xlu0.b32.cont [15/16] 0.0, 128
    %2241 = vxpose.xlu0.b32.end [16/16] 0.0, 128
    %v2242 = vpop.trf.xlu0
    %v2243 = vpop.trf.xlu0
    %v2244 = vpop.trf.xlu0
    %v2245 = vpop.trf.xlu0
    %v2246 = vpop.trf.xlu0
    %v2247 = vpop.trf.xlu0
    %v2248 = vpop.trf.xlu0
    %v2249 = vpop.trf.xlu0
    %v2250 = vpop.trf.xlu0
    %v2251 = vpop.trf.xlu0
    %v2252 = vpop.trf.xlu0
    %v2253 = vpop.trf.xlu0
    %v2254 = vpop.trf.xlu0
    %v2255 = vpop.trf.xlu0
    %v2256 = vpop.trf.xlu0
    %v2257 = vpop.trf.xlu0
    %2258 = vxpose.xlu0.b32.start [1/16] %v2018, 128
    %2259 = vxpose.xlu0.b32.cont [2/16] %v2019, 128
    %2260 = vxpose.xlu0.b32.cont [3/16] %v2050, 128
    %2261 = vxpose.xlu0.b32.cont [4/16] %v2051, 128
    %2262 = vxpose.xlu0.b32.cont [5/16] %v2082, 128
    %2263 = vxpose.xlu0.b32.cont [6/16] %v2083, 128
    %2264 = vxpose.xlu0.b32.cont [7/16] %v2114, 128
    %2265 = vxpose.xlu0.b32.cont [8/16] %v2115, 128
    %2266 = vxpose.xlu0.b32.cont [9/16] %v2146, 128
    %2267 = vxpose.xlu0.b32.cont [10/16] %v2147, 128
    %2268 = vxpose.xlu0.b32.cont [11/16] %v2178, 128
    %2269 = vxpose.xlu0.b32.cont [12/16] %v2179, 128
    %2270 = vxpose.xlu0.b32.cont [13/16] %v2210, 128
    %2271 = vxpose.xlu0.b32.cont [14/16] %v2211, 128
    %2272 = vxpose.xlu0.b32.cont [15/16] %v2242, 128
    %2273 = vxpose.xlu0.b32.end [16/16] %v2243, 128
    %v2274 = vpop.trf.xlu0
    %v2275 = vpop.trf.xlu0
    %v2276 = vpop.trf.xlu0
    %v2277 = vpop.trf.xlu0
    %v2278 = vpop.trf.xlu0
    %v2279 = vpop.trf.xlu0
    %v2280 = vpop.trf.xlu0
    %v2281 = vpop.trf.xlu0
    %v2282 = vpop.trf.xlu0
    %v2283 = vpop.trf.xlu0
    %v2284 = vpop.trf.xlu0
    %v2285 = vpop.trf.xlu0
    %v2286 = vpop.trf.xlu0
    %v2287 = vpop.trf.xlu0
    %v2288 = vpop.trf.xlu0
    %v2289 = vpop.trf.xlu0
    %v2290 = vadd.f32 %v1523, %v2274
    %v2291 = vadd.f32 %v1528, %v2275
    %2292 = vst [vmem:[#allocation2] sm:$0xff] %v2290
    %2293 = vst [vmem:[#allocation2 + $0x8] sm:$0xff] %v2291
    %s2294 = scalar_lea.vmem %s0, 16
    %v2295 = vld [vmem:[%s2294] sm:$0xff]
    %v2296 = vld [vmem:[%s2294 + $0x8] sm:$0xff]
    %v2297 = vld [vmem:[%s2] sm:$0xff]
    %v2298 = vld [vmem:[%s2 + $0x8] sm:$0xff]
    %v2299 = vld [vmem:[%s2 + $0x10] sm:$0xff]
    %v2300 = vld [vmem:[%s2 + $0x18] sm:$0xff]
    %v2301 = vld [vmem:[%s2 + $0x20] sm:$0xff]
    %v2302 = vld [vmem:[%s2 + $0x28] sm:$0xff]
    %v2303 = vld [vmem:[%s3] sm:$0xff]
    %v2304 = vld [vmem:[%s3 + $0x8] sm:$0xff]
    %v2305 = vld [vmem:[%s3 + $0x10] sm:$0xff]
    %v2306 = vld [vmem:[%s3 + $0x18] sm:$0xff]
    %v2307 = vld [vmem:[%s3 + $0x20] sm:$0xff]
    %v2308 = vld [vmem:[%s3 + $0x28] sm:$0xff]
    %2310 = vset.pattern.permute.xlu0 0
    %2311 = vperm.xlu0 %2310, %v2303
    %v2312 = vpop.permute.xlu0 %2311
    %2315 = vset.pattern.permute.xlu0 0
    %2316 = vperm.xlu0 %2315, %v2304
    %v2317 = vpop.permute.xlu0 %2316
    %2320 = vset.pattern.permute.xlu0 0
    %2321 = vperm.xlu0 %2320, %v2305
    %v2322 = vpop.permute.xlu0 %2321
    %2325 = vset.pattern.permute.xlu0 0
    %2326 = vperm.xlu0 %2325, %v2306
    %v2327 = vpop.permute.xlu0 %2326
    %2330 = vset.pattern.permute.xlu0 0
    %2331 = vperm.xlu0 %2330, %v2307
    %v2332 = vpop.permute.xlu0 %2331
    %2335 = vset.pattern.permute.xlu0 0
    %2336 = vperm.xlu0 %2335, %v2308
    %v2337 = vpop.permute.xlu0 %2336
    %v2340 = vsel %vm81, %v2297, 0
    %v2343 = vsel %vm81, %v2298, 0
    %v2346 = vsel %vm81, %v2299, 0
    %v2349 = vsel %vm81, %v2300, 0
    %v2352 = vsel %vm81, %v2301, 0
    %v2355 = vsel %vm81, %v2302, 0
    %2357 = vmatprep.subr.mxu0 0.0
    %2358 = vmatpush1.msra.mxu0 %v2295
    %2359 = vmatprep.subr.mxu0 0.0
    %2360 = vmatpush1.msra.mxu0 %v2296
    %2361 = vmatprep.subr.mxu0 0.0
    %2362 = vmatpush1.msra.mxu0 0.0
    %2363 = vmatprep.subr.mxu0 0.0
    %2364 = vmatpush1.msra.mxu0 0.0
    %2365 = vmatprep.subr.mxu0 0.0
    %2366 = vmatpush1.msra.mxu0 0.0
    %2367 = vmatprep.subr.mxu0 0.0
    %2368 = vmatpush1.msra.mxu0 0.0
    %2369 = vmatprep.subr.mxu0 0.0
    %2370 = vmatpush1.msra.mxu0 0.0
    %2371 = vmatprep.subr.mxu0 0.0
    %2372 = vmatpush1.msra.mxu0 0.0
    %2373 = vmatprep.subr.mxu0 0.0
    %2374 = vmatpush1.msra.mxu0 0.0
    %2375 = vmatprep.subr.mxu0 0.0
    %2376 = vmatpush1.msra.mxu0 0.0
    %2377 = vmatprep.subr.mxu0 0.0
    %2378 = vmatpush1.msra.mxu0 0.0
    %2379 = vmatprep.subr.mxu0 0.0
    %2380 = vmatpush1.msra.mxu0 0.0
    %2381 = vmatprep.subr.mxu0 0.0
    %2382 = vmatpush1.msra.mxu0 0.0
    %2383 = vmatprep.subr.mxu0 0.0
    %2384 = vmatpush1.msra.mxu0 0.0
    %2385 = vmatprep.subr.mxu0 0.0
    %2386 = vmatpush1.msra.mxu0 0.0
    %2387 = vmatprep.subr.mxu0 0.0
    %2388 = vmatpush1.msra.mxu0 0.0
    %2389 = vmatprep.subr.mxu0 0.0
    %2390 = vmatpush1.msra.mxu0 0.0
    %2391 = vmatprep.subr.mxu0 0.0
    %2392 = vmatpush1.msra.mxu0 0.0
    %2393 = vmatprep.subr.mxu0 0.0
    %2394 = vmatpush1.msra.mxu0 0.0
    %2395 = vmatprep.subr.mxu0 0.0
    %2396 = vmatpush1.msra.mxu0 0.0
    %2397 = vmatprep.subr.mxu0 0.0
    %2398 = vmatpush1.msra.mxu0 0.0
    %2399 = vmatprep.subr.mxu0 0.0
    %2400 = vmatpush1.msra.mxu0 0.0
    %2401 = vmatprep.subr.mxu0 0.0
    %2402 = vmatpush1.msra.mxu0 0.0
    %2403 = vmatprep.subr.mxu0 0.0
    %2404 = vmatpush1.msra.mxu0 0.0
    %2405 = vmatprep.subr.mxu0 0.0
    %2406 = vmatpush1.msra.mxu0 0.0
    %2407 = vmatprep.subr.mxu0 0.0
    %2408 = vmatpush1.msra.mxu0 0.0
    %2409 = vmatprep.subr.mxu0 0.0
    %2410 = vmatpush1.msra.mxu0 0.0
    %2411 = vmatprep.subr.mxu0 0.0
    %2412 = vmatpush1.msra.mxu0 0.0
    %2413 = vmatprep.subr.mxu0 0.0
    %2414 = vmatpush1.msra.mxu0 0.0
    %2415 = vmatprep.subr.mxu0 0.0
    %2416 = vmatpush1.msra.mxu0 0.0
    %2417 = vmatprep.subr.mxu0 0.0
    %2418 = vmatpush1.msra.mxu0 0.0
    %2419 = vmatprep.subr.mxu0 0.0
    %2420 = vmatpush1.msra.mxu0 0.0
    %2421 = vmatprep.mubr.f32.mxu0 0.0
    %2422 = vmatmul.mubr.f32.gmra.mrb[0].mxu0 %v2340
    %v2423 = vpop.f32.mrb[0].mxu0
    %v2424 = vadd.f32 %v2312, %v2423
    %v2425 = vpop.f32.mrb[0].mxu0
    %2426 = vmatprep.mubr.f32.mxu0 0.0
    %2427 = vmatmul.mubr.f32.gmra.mrb[0].mxu0 %v2343
    %v2428 = vpop.f32.mrb[0].mxu0
    %v2429 = vadd.f32 %v2317, %v2428
    %v2430 = vpop.f32.mrb[0].mxu0
    %2431 = vmatprep.mubr.f32.mxu0 0.0
    %2432 = vmatmul.mubr.f32.gmra.mrb[0].mxu0 %v2346
    %v2433 = vpop.f32.mrb[0].mxu0
    %v2434 = vadd.f32 %v2322, %v2433
    %v2435 = vpop.f32.mrb[0].mxu0
    %2436 = vmatprep.mubr.f32.mxu0 0.0
    %2437 = vmatmul.mubr.f32.gmra.mrb[0].mxu0 %v2349
    %v2438 = vpop.f32.mrb[0].mxu0
    %v2439 = vadd.f32 %v2327, %v2438
    %v2440 = vpop.f32.mrb[0].mxu0
    %2441 = vmatprep.mubr.f32.mxu0 0.0
    %2442 = vmatmul.mubr.f32.gmra.mrb[0].mxu0 %v2352
    %v2443 = vpop.f32.mrb[0].mxu0
    %v2444 = vadd.f32 %v2332, %v2443
    %v2445 = vpop.f32.mrb[0].mxu0
    %2446 = vmatprep.mubr.f32.mxu0 0.0
    %2447 = vmatmul.mubr.f32.gmra.mrb[0].mxu0 %v2355
    %v2448 = vpop.f32.mrb[0].mxu0
    %v2449 = vadd.f32 %v2337, %v2448
    %v2450 = vpop.f32.mrb[0].mxu0
    %2451 = vdwg.mxu0
    %2452 = vxpose.xlu0.b32.start [1/16] %v2424, 128
    %2453 = vxpose.xlu0.b32.cont [2/16] %v2429, 128
    %2454 = vxpose.xlu0.b32.cont [3/16] 0.0, 128
    %2455 = vxpose.xlu0.b32.cont [4/16] 0.0, 128
    %2456 = vxpose.xlu0.b32.cont [5/16] 0.0, 128
    %2457 = vxpose.xlu0.b32.cont [6/16] 0.0, 128
    %2458 = vxpose.xlu0.b32.cont [7/16] 0.0, 128
    %2459 = vxpose.xlu0.b32.cont [8/16] 0.0, 128
    %2460 = vxpose.xlu0.b32.cont [9/16] 0.0, 128
    %2461 = vxpose.xlu0.b32.cont [10/16] 0.0, 128
    %2462 = vxpose.xlu0.b32.cont [11/16] 0.0, 128
    %2463 = vxpose.xlu0.b32.cont [12/16] 0.0, 128
    %2464 = vxpose.xlu0.b32.cont [13/16] 0.0, 128
    %2465 = vxpose.xlu0.b32.cont [14/16] 0.0, 128
    %2466 = vxpose.xlu0.b32.cont [15/16] 0.0, 128
    %2467 = vxpose.xlu0.b32.end [16/16] 0.0, 128
    %v2468 = vpop.trf.xlu0
    %v2469 = vpop.trf.xlu0
    %v2470 = vpop.trf.xlu0
    %v2471 = vpop.trf.xlu0
    %v2472 = vpop.trf.xlu0
    %v2473 = vpop.trf.xlu0
    %v2474 = vpop.trf.xlu0
    %v2475 = vpop.trf.xlu0
    %v2476 = vpop.trf.xlu0
    %v2477 = vpop.trf.xlu0
    %v2478 = vpop.trf.xlu0
    %v2479 = vpop.trf.xlu0
    %v2480 = vpop.trf.xlu0
    %v2481 = vpop.trf.xlu0
    %v2482 = vpop.trf.xlu0
    %v2483 = vpop.trf.xlu0
    %v2485 = vsel %vm81, %v2468, 0
    %v2488 = vsel %vm81, %v2469, 0
    %v2491 = vsel %vm81, %v2470, 0
    %v2494 = vsel %vm81, %v2471, 0
    %v2497 = vsel %vm81, %v2472, 0
    %v2500 = vsel %vm81, %v2473, 0
    %v2503 = vsel %vm81, %v2474, 0
    %v2506 = vsel %vm81, %v2475, 0
    %v2509 = vsel %vm81, %v2476, 0
    %v2512 = vsel %vm81, %v2477, 0
    %v2515 = vsel %vm81, %v2478, 0
    %v2518 = vsel %vm81, %v2479, 0
    %v2521 = vsel %vm81, %v2480, 0
    %v2524 = vsel %vm81, %v2481, 0
    %v2527 = vsel %vm81, %v2482, 0
    %v2530 = vsel %vm81, %v2483, 0
    %2532 = vmatprep.subr.mxu0 0.0
    %2533 = vmatpush1.msra.mxu0 %v2434
    %2534 = vmatprep.subr.mxu0 0.0
    %2535 = vmatpush1.msra.mxu0 %v2439
    %2536 = vmatprep.subr.mxu0 0.0
    %2537 = vmatpush1.msra.mxu0 0.0
    %2538 = vmatprep.subr.mxu0 0.0
    %2539 = vmatpush1.msra.mxu0 0.0
    %2540 = vmatprep.subr.mxu0 0.0
    %2541 = vmatpush1.msra.mxu0 0.0
    %2542 = vmatprep.subr.mxu0 0.0
    %2543 = vmatpush1.msra.mxu0 0.0
    %2544 = vmatprep.subr.mxu0 0.0
    %2545 = vmatpush1.msra.mxu0 0.0
    %2546 = vmatprep.subr.mxu0 0.0
    %2547 = vmatpush1.msra.mxu0 0.0
    %2548 = vmatprep.subr.mxu0 0.0
    %2549 = vmatpush1.msra.mxu0 0.0
    %2550 = vmatprep.subr.mxu0 0.0
    %2551 = vmatpush1.msra.mxu0 0.0
    %2552 = vmatprep.subr.mxu0 0.0
    %2553 = vmatpush1.msra.mxu0 0.0
    %2554 = vmatprep.subr.mxu0 0.0
    %2555 = vmatpush1.msra.mxu0 0.0
    %2556 = vmatprep.subr.mxu0 0.0
    %2557 = vmatpush1.msra.mxu0 0.0
    %2558 = vmatprep.subr.mxu0 0.0
    %2559 = vmatpush1.msra.mxu0 0.0
    %2560 = vmatprep.subr.mxu0 0.0
    %2561 = vmatpush1.msra.mxu0 0.0
    %2562 = vmatprep.subr.mxu0 0.0
    %2563 = vmatpush1.msra.mxu0 0.0
    %2564 = vmatprep.subr.mxu0 0.0
    %2565 = vmatpush1.msra.mxu0 0.0
    %2566 = vmatprep.subr.mxu0 0.0
    %2567 = vmatpush1.msra.mxu0 0.0
    %2568 = vmatprep.subr.mxu0 0.0
    %2569 = vmatpush1.msra.mxu0 0.0
    %2570 = vmatprep.subr.mxu0 0.0
    %2571 = vmatpush1.msra.mxu0 0.0
    %2572 = vmatprep.subr.mxu0 0.0
    %2573 = vmatpush1.msra.mxu0 0.0
    %2574 = vmatprep.subr.mxu0 0.0
    %2575 = vmatpush1.msra.mxu0 0.0
    %2576 = vmatprep.subr.mxu0 0.0
    %2577 = vmatpush1.msra.mxu0 0.0
    %2578 = vmatprep.subr.mxu0 0.0
    %2579 = vmatpush1.msra.mxu0 0.0
    %2580 = vmatprep.subr.mxu0 0.0
    %2581 = vmatpush1.msra.mxu0 0.0
    %2582 = vmatprep.subr.mxu0 0.0
    %2583 = vmatpush1.msra.mxu0 0.0
    %2584 = vmatprep.subr.mxu0 0.0
    %2585 = vmatpush1.msra.mxu0 0.0
    %2586 = vmatprep.subr.mxu0 0.0
    %2587 = vmatpush1.msra.mxu0 0.0
    %2588 = vmatprep.subr.mxu0 0.0
    %2589 = vmatpush1.msra.mxu0 0.0
    %2590 = vmatprep.subr.mxu0 0.0
    %2591 = vmatpush1.msra.mxu0 0.0
    %2592 = vmatprep.subr.mxu0 0.0
    %2593 = vmatpush1.msra.mxu0 0.0
    %2594 = vmatprep.subr.mxu0 0.0
    %2595 = vmatpush1.msra.mxu0 0.0
    %2596 = vmatprep.mubr.f32.mxu0 0.0
    %2597 = vmatmul.mubr.f32.gmra.mrb[0].mxu0 %v2485
    %v2598 = vpop.f32.mrb[0].mxu0
    %v2599 = vadd.f32 %v21, %v2598
    %v2600 = vpop.f32.mrb[0].mxu0
    %2601 = vmatprep.mubr.f32.mxu0 0.0
    %2602 = vmatmul.mubr.f32.gmra.mrb[0].mxu0 %v2488
    %v2603 = vpop.f32.mrb[0].mxu0
    %v2604 = vadd.f32 %v22, %v2603
    %v2605 = vpop.f32.mrb[0].mxu0
    %2606 = vmatprep.mubr.f32.mxu0 0.0
    %2607 = vmatmul.mubr.f32.gmra.mrb[0].mxu0 %v2491
    %v2608 = vpop.f32.mrb[0].mxu0
    %v2609 = vadd.f32 %v23, %v2608
    %v2610 = vpop.f32.mrb[0].mxu0
    %2611 = vmatprep.mubr.f32.mxu0 0.0
    %2612 = vmatmul.mubr.f32.gmra.mrb[0].mxu0 %v2494
    %v2613 = vpop.f32.mrb[0].mxu0
    %v2614 = vadd.f32 %v24, %v2613
    %v2615 = vpop.f32.mrb[0].mxu0
    %2616 = vmatprep.mubr.f32.mxu0 0.0
    %2617 = vmatmul.mubr.f32.gmra.mrb[0].mxu0 %v2497
    %v2618 = vpop.f32.mrb[0].mxu0
    %v2619 = vadd.f32 %v25, %v2618
    %v2620 = vpop.f32.mrb[0].mxu0
    %2621 = vmatprep.mubr.f32.mxu0 0.0
    %2622 = vmatmul.mubr.f32.gmra.mrb[0].mxu0 %v2500
    %v2623 = vpop.f32.mrb[0].mxu0
    %v2624 = vadd.f32 %v26, %v2623
    %v2625 = vpop.f32.mrb[0].mxu0
    %2626 = vmatprep.mubr.f32.mxu0 0.0
    %2627 = vmatmul.mubr.f32.gmra.mrb[0].mxu0 %v2503
    %v2628 = vpop.f32.mrb[0].mxu0
    %v2629 = vadd.f32 %v27, %v2628
    %v2630 = vpop.f32.mrb[0].mxu0
    %2631 = vmatprep.mubr.f32.mxu0 0.0
    %2632 = vmatmul.mubr.f32.gmra.mrb[0].mxu0 %v2506
    %v2633 = vpop.f32.mrb[0].mxu0
    %v2634 = vadd.f32 %v28, %v2633
    %v2635 = vpop.f32.mrb[0].mxu0
    %2636 = vmatprep.mubr.f32.mxu0 0.0
    %2637 = vmatmul.mubr.f32.gmra.mrb[0].mxu0 %v2509
    %v2638 = vpop.f32.mrb[0].mxu0
    %v2639 = vadd.f32 %v29, %v2638
    %v2640 = vpop.f32.mrb[0].mxu0
    %2641 = vmatprep.mubr.f32.mxu0 0.0
    %2642 = vmatmul.mubr.f32.gmra.mrb[0].mxu0 %v2512
    %v2643 = vpop.f32.mrb[0].mxu0
    %v2644 = vadd.f32 %v30, %v2643
    %v2645 = vpop.f32.mrb[0].mxu0
    %2646 = vmatprep.mubr.f32.mxu0 0.0
    %2647 = vmatmul.mubr.f32.gmra.mrb[0].mxu0 %v2515
    %v2648 = vpop.f32.mrb[0].mxu0
    %v2649 = vadd.f32 %v31, %v2648
    %v2650 = vpop.f32.mrb[0].mxu0
    %2651 = vmatprep.mubr.f32.mxu0 0.0
    %2652 = vmatmul.mubr.f32.gmra.mrb[0].mxu0 %v2518
    %v2653 = vpop.f32.mrb[0].mxu0
    %v2654 = vadd.f32 %v32, %v2653
    %v2655 = vpop.f32.mrb[0].mxu0
    %2656 = vmatprep.mubr.f32.mxu0 0.0
    %2657 = vmatmul.mubr.f32.gmra.mrb[0].mxu0 %v2521
    %v2658 = vpop.f32.mrb[0].mxu0
    %v2659 = vadd.f32 %v33, %v2658
    %v2660 = vpop.f32.mrb[0].mxu0
    %2661 = vmatprep.mubr.f32.mxu0 0.0
    %2662 = vmatmul.mubr.f32.gmra.mrb[0].mxu0 %v2524
    %v2663 = vpop.f32.mrb[0].mxu0
    %v2664 = vadd.f32 %v34, %v2663
    %v2665 = vpop.f32.mrb[0].mxu0
    %2666 = vmatprep.mubr.f32.mxu0 0.0
    %2667 = vmatmul.mubr.f32.gmra.mrb[0].mxu0 %v2527
    %v2668 = vpop.f32.mrb[0].mxu0
    %v2669 = vadd.f32 %v35, %v2668
    %v2670 = vpop.f32.mrb[0].mxu0
    %2671 = vmatprep.mubr.f32.mxu0 0.0
    %2672 = vmatmul.mubr.f32.gmra.mrb[0].mxu0 %v2530
    %v2673 = vpop.f32.mrb[0].mxu0
    %v2674 = vadd.f32 %v36, %v2673
    %v2675 = vpop.f32.mrb[0].mxu0
    %2676 = vdwg.mxu0
    %2677 = vmax.xlane.f32.xlu0 %v2599
    %v2678 = vpop.xlane.xlu0 %2677
    %2679 = vmax.xlane.f32.xlu0 %v2604
    %v2680 = vpop.xlane.xlu0 %2679
    %2681 = vmax.xlane.f32.xlu0 %v2609
    %v2682 = vpop.xlane.xlu0 %2681
    %2683 = vmax.xlane.f32.xlu0 %v2614
    %v2684 = vpop.xlane.xlu0 %2683
    %2685 = vmax.xlane.f32.xlu0 %v2619
    %v2686 = vpop.xlane.xlu0 %2685
    %2687 = vmax.xlane.f32.xlu0 %v2624
    %v2688 = vpop.xlane.xlu0 %2687
    %2689 = vmax.xlane.f32.xlu0 %v2629
    %v2690 = vpop.xlane.xlu0 %2689
    %2691 = vmax.xlane.f32.xlu0 %v2634
    %v2692 = vpop.xlane.xlu0 %2691
    %2693 = vmax.xlane.f32.xlu0 %v2639
    %v2694 = vpop.xlane.xlu0 %2693
    %2695 = vmax.xlane.f32.xlu0 %v2644
    %v2696 = vpop.xlane.xlu0 %2695
    %2697 = vmax.xlane.f32.xlu0 %v2649
    %v2698 = vpop.xlane.xlu0 %2697
    %2699 = vmax.xlane.f32.xlu0 %v2654
    %v2700 = vpop.xlane.xlu0 %2699
    %2701 = vmax.xlane.f32.xlu0 %v2659
    %v2702 = vpop.xlane.xlu0 %2701
    %2703 = vmax.xlane.f32.xlu0 %v2664
    %v2704 = vpop.xlane.xlu0 %2703
    %2705 = vmax.xlane.f32.xlu0 %v2669
    %v2706 = vpop.xlane.xlu0 %2705
    %2707 = vmax.xlane.f32.xlu0 %v2674
    %v2708 = vpop.xlane.xlu0 %2707
    %v2709 = vsub.f32 %v2599, %v2678
    %v2710 = vsub.f32 %v2604, %v2680
    %v2711 = vsub.f32 %v2609, %v2682
    %v2712 = vsub.f32 %v2614, %v2684
    %v2713 = vsub.f32 %v2619, %v2686
    %v2714 = vsub.f32 %v2624, %v2688
    %v2715 = vsub.f32 %v2629, %v2690
    %v2716 = vsub.f32 %v2634, %v2692
    %v2717 = vsub.f32 %v2639, %v2694
    %v2718 = vsub.f32 %v2644, %v2696
    %v2719 = vsub.f32 %v2649, %v2698
    %v2720 = vsub.f32 %v2654, %v2700
    %v2721 = vsub.f32 %v2659, %v2702
    %v2722 = vsub.f32 %v2664, %v2704
    %v2723 = vsub.f32 %v2669, %v2706
    %v2724 = vsub.f32 %v2674, %v2708
    %v2725 = vmul.f32 %v2709, 1.442695
    %v2726 = vpow.pop %v2725
    %v2727 = vmul.f32 %v2710, 1.442695
    %v2728 = vpow.pop %v2727
    %v2729 = vmul.f32 %v2711, 1.442695
    %v2730 = vpow.pop %v2729
    %v2731 = vmul.f32 %v2712, 1.442695
    %v2732 = vpow.pop %v2731
    %v2733 = vmul.f32 %v2713, 1.442695
    %v2734 = vpow.pop %v2733
    %v2735 = vmul.f32 %v2714, 1.442695
    %v2736 = vpow.pop %v2735
    %v2737 = vmul.f32 %v2715, 1.442695
    %v2738 = vpow.pop %v2737
    %v2739 = vmul.f32 %v2716, 1.442695
    %v2740 = vpow.pop %v2739
    %v2741 = vmul.f32 %v2717, 1.442695
    %v2742 = vpow.pop %v2741
    %v2743 = vmul.f32 %v2718, 1.442695
    %v2744 = vpow.pop %v2743
    %v2745 = vmul.f32 %v2719, 1.442695
    %v2746 = vpow.pop %v2745
    %v2747 = vmul.f32 %v2720, 1.442695
    %v2748 = vpow.pop %v2747
    %v2749 = vmul.f32 %v2721, 1.442695
    %v2750 = vpow.pop %v2749
    %v2751 = vmul.f32 %v2722, 1.442695
    %v2752 = vpow.pop %v2751
    %v2753 = vmul.f32 %v2723, 1.442695
    %v2754 = vpow.pop %v2753
    %v2755 = vmul.f32 %v2724, 1.442695
    %v2756 = vpow.pop %v2755
    %2757 = vadd.xlane.f32.xlu0 %v2726
    %v2758 = vpop.xlane.xlu0 %2757
    %2759 = vadd.xlane.f32.xlu0 %v2728
    %v2760 = vpop.xlane.xlu0 %2759
    %2761 = vadd.xlane.f32.xlu0 %v2730
    %v2762 = vpop.xlane.xlu0 %2761
    %2763 = vadd.xlane.f32.xlu0 %v2732
    %v2764 = vpop.xlane.xlu0 %2763
    %2765 = vadd.xlane.f32.xlu0 %v2734
    %v2766 = vpop.xlane.xlu0 %2765
    %2767 = vadd.xlane.f32.xlu0 %v2736
    %v2768 = vpop.xlane.xlu0 %2767
    %2769 = vadd.xlane.f32.xlu0 %v2738
    %v2770 = vpop.xlane.xlu0 %2769
    %2771 = vadd.xlane.f32.xlu0 %v2740
    %v2772 = vpop.xlane.xlu0 %2771
    %2773 = vadd.xlane.f32.xlu0 %v2742
    %v2774 = vpop.xlane.xlu0 %2773
    %2775 = vadd.xlane.f32.xlu0 %v2744
    %v2776 = vpop.xlane.xlu0 %2775
    %2777 = vadd.xlane.f32.xlu0 %v2746
    %v2778 = vpop.xlane.xlu0 %2777
    %2779 = vadd.xlane.f32.xlu0 %v2748
    %v2780 = vpop.xlane.xlu0 %2779
    %2781 = vadd.xlane.f32.xlu0 %v2750
    %v2782 = vpop.xlane.xlu0 %2781
    %2783 = vadd.xlane.f32.xlu0 %v2752
    %v2784 = vpop.xlane.xlu0 %2783
    %2785 = vadd.xlane.f32.xlu0 %v2754
    %v2786 = vpop.xlane.xlu0 %2785
    %2787 = vadd.xlane.f32.xlu0 %v2756
    %v2788 = vpop.xlane.xlu0 %2787
    %v2789 = vrcp.pop %v2758
    %v2790 = vrcp.pop %v2760
    %v2791 = vrcp.pop %v2762
    %v2792 = vrcp.pop %v2764
    %v2793 = vrcp.pop %v2766
    %v2794 = vrcp.pop %v2768
    %v2795 = vrcp.pop %v2770
    %v2796 = vrcp.pop %v2772
    %v2797 = vrcp.pop %v2774
    %v2798 = vrcp.pop %v2776
    %v2799 = vrcp.pop %v2778
    %v2800 = vrcp.pop %v2780
    %v2801 = vrcp.pop %v2782
    %v2802 = vrcp.pop %v2784
    %v2803 = vrcp.pop %v2786
    %v2804 = vrcp.pop %v2788
    %v2805 = vmul.f32 %v2726, %v2789
    %v2806 = vmul.f32 %v2728, %v2790
    %v2807 = vmul.f32 %v2730, %v2791
    %v2808 = vmul.f32 %v2732, %v2792
    %v2809 = vmul.f32 %v2734, %v2793
    %v2810 = vmul.f32 %v2736, %v2794
    %v2811 = vmul.f32 %v2738, %v2795
    %v2812 = vmul.f32 %v2740, %v2796
    %v2813 = vmul.f32 %v2742, %v2797
    %v2814 = vmul.f32 %v2744, %v2798
    %v2815 = vmul.f32 %v2746, %v2799
    %v2816 = vmul.f32 %v2748, %v2800
    %v2817 = vmul.f32 %v2750, %v2801
    %v2818 = vmul.f32 %v2752, %v2802
    %v2819 = vmul.f32 %v2754, %v2803
    %v2820 = vmul.f32 %v2756, %v2804
    %2821 = vmatprep.subr.mxu0 0.0
    %2822 = vmatpush1.msra.mxu0 %v2444
    %2823 = vmatprep.subr.mxu0 0.0
    %2824 = vmatpush1.msra.mxu0 %v2449
    %2825 = vmatprep.subr.mxu0 0.0
    %2826 = vmatpush1.msra.mxu0 0.0
    %2827 = vmatprep.subr.mxu0 0.0
    %2828 = vmatpush1.msra.mxu0 0.0
    %2829 = vmatprep.subr.mxu0 0.0
    %2830 = vmatpush1.msra.mxu0 0.0
    %2831 = vmatprep.subr.mxu0 0.0
    %2832 = vmatpush1.msra.mxu0 0.0
    %2833 = vmatprep.subr.mxu0 0.0
    %2834 = vmatpush1.msra.mxu0 0.0
    %2835 = vmatprep.subr.mxu0 0.0
    %2836 = vmatpush1.msra.mxu0 0.0
    %2837 = vmatprep.subr.mxu0 0.0
    %2838 = vmatpush1.msra.mxu0 0.0
    %2839 = vmatprep.subr.mxu0 0.0
    %2840 = vmatpush1.msra.mxu0 0.0
    %2841 = vmatprep.subr.mxu0 0.0
    %2842 = vmatpush1.msra.mxu0 0.0
    %2843 = vmatprep.subr.mxu0 0.0
    %2844 = vmatpush1.msra.mxu0 0.0
    %2845 = vmatprep.subr.mxu0 0.0
    %2846 = vmatpush1.msra.mxu0 0.0
    %2847 = vmatprep.subr.mxu0 0.0
    %2848 = vmatpush1.msra.mxu0 0.0
    %2849 = vmatprep.subr.mxu0 0.0
    %2850 = vmatpush1.msra.mxu0 0.0
    %2851 = vmatprep.subr.mxu0 0.0
    %2852 = vmatpush1.msra.mxu0 0.0
    %2853 = vmatprep.subr.mxu0 0.0
    %2854 = vmatpush1.msra.mxu0 0.0
    %2855 = vmatprep.subr.mxu0 0.0
    %2856 = vmatpush1.msra.mxu0 0.0
    %2857 = vmatprep.subr.mxu0 0.0
    %2858 = vmatpush1.msra.mxu0 0.0
    %2859 = vmatprep.subr.mxu0 0.0
    %2860 = vmatpush1.msra.mxu0 0.0
    %2861 = vmatprep.subr.mxu0 0.0
    %2862 = vmatpush1.msra.mxu0 0.0
    %2863 = vmatprep.subr.mxu0 0.0
    %2864 = vmatpush1.msra.mxu0 0.0
    %2865 = vmatprep.subr.mxu0 0.0
    %2866 = vmatpush1.msra.mxu0 0.0
    %2867 = vmatprep.subr.mxu0 0.0
    %2868 = vmatpush1.msra.mxu0 0.0
    %2869 = vmatprep.subr.mxu0 0.0
    %2870 = vmatpush1.msra.mxu0 0.0
    %2871 = vmatprep.subr.mxu0 0.0
    %2872 = vmatpush1.msra.mxu0 0.0
    %2873 = vmatprep.subr.mxu0 0.0
    %2874 = vmatpush1.msra.mxu0 0.0
    %2875 = vmatprep.subr.mxu0 0.0
    %2876 = vmatpush1.msra.mxu0 0.0
    %2877 = vmatprep.subr.mxu0 0.0
    %2878 = vmatpush1.msra.mxu0 0.0
    %2879 = vmatprep.subr.mxu0 0.0
    %2880 = vmatpush1.msra.mxu0 0.0
    %2881 = vmatprep.subr.mxu0 0.0
    %2882 = vmatpush1.msra.mxu0 0.0
    %2883 = vmatprep.subr.mxu0 0.0
    %2884 = vmatpush1.msra.mxu0 0.0
    %2885 = vmatprep.mubr.f32.mxu0 0.0
    %2886 = vmatmul.mubr.f32.gmra.mrb[0].mxu0 %v2485
    %v2887 = vpop.f32.mrb[0].mxu0
    %v2888 = vadd.f32 %v21, %v2887
    %v2889 = vpop.f32.mrb[0].mxu0
    %2890 = vmatprep.mubr.f32.mxu0 0.0
    %2891 = vmatmul.mubr.f32.gmra.mrb[0].mxu0 %v2488
    %v2892 = vpop.f32.mrb[0].mxu0
    %v2893 = vadd.f32 %v22, %v2892
    %v2894 = vpop.f32.mrb[0].mxu0
    %2895 = vmatprep.mubr.f32.mxu0 0.0
    %2896 = vmatmul.mubr.f32.gmra.mrb[0].mxu0 %v2491
    %v2897 = vpop.f32.mrb[0].mxu0
    %v2898 = vadd.f32 %v23, %v2897
    %v2899 = vpop.f32.mrb[0].mxu0
    %2900 = vmatprep.mubr.f32.mxu0 0.0
    %2901 = vmatmul.mubr.f32.gmra.mrb[0].mxu0 %v2494
    %v2902 = vpop.f32.mrb[0].mxu0
    %v2903 = vadd.f32 %v24, %v2902
    %v2904 = vpop.f32.mrb[0].mxu0
    %2905 = vmatprep.mubr.f32.mxu0 0.0
    %2906 = vmatmul.mubr.f32.gmra.mrb[0].mxu0 %v2497
    %v2907 = vpop.f32.mrb[0].mxu0
    %v2908 = vadd.f32 %v25, %v2907
    %v2909 = vpop.f32.mrb[0].mxu0
    %2910 = vmatprep.mubr.f32.mxu0 0.0
    %2911 = vmatmul.mubr.f32.gmra.mrb[0].mxu0 %v2500
    %v2912 = vpop.f32.mrb[0].mxu0
    %v2913 = vadd.f32 %v26, %v2912
    %v2914 = vpop.f32.mrb[0].mxu0
    %2915 = vmatprep.mubr.f32.mxu0 0.0
    %2916 = vmatmul.mubr.f32.gmra.mrb[0].mxu0 %v2503
    %v2917 = vpop.f32.mrb[0].mxu0
    %v2918 = vadd.f32 %v27, %v2917
    %v2919 = vpop.f32.mrb[0].mxu0
    %2920 = vmatprep.mubr.f32.mxu0 0.0
    %2921 = vmatmul.mubr.f32.gmra.mrb[0].mxu0 %v2506
    %v2922 = vpop.f32.mrb[0].mxu0
    %v2923 = vadd.f32 %v28, %v2922
    %v2924 = vpop.f32.mrb[0].mxu0
    %2925 = vmatprep.mubr.f32.mxu0 0.0
    %2926 = vmatmul.mubr.f32.gmra.mrb[0].mxu0 %v2509
    %v2927 = vpop.f32.mrb[0].mxu0
    %v2928 = vadd.f32 %v29, %v2927
    %v2929 = vpop.f32.mrb[0].mxu0
    %2930 = vmatprep.mubr.f32.mxu0 0.0
    %2931 = vmatmul.mubr.f32.gmra.mrb[0].mxu0 %v2512
    %v2932 = vpop.f32.mrb[0].mxu0
    %v2933 = vadd.f32 %v30, %v2932
    %v2934 = vpop.f32.mrb[0].mxu0
    %2935 = vmatprep.mubr.f32.mxu0 0.0
    %2936 = vmatmul.mubr.f32.gmra.mrb[0].mxu0 %v2515
    %v2937 = vpop.f32.mrb[0].mxu0
    %v2938 = vadd.f32 %v31, %v2937
    %v2939 = vpop.f32.mrb[0].mxu0
    %2940 = vmatprep.mubr.f32.mxu0 0.0
    %2941 = vmatmul.mubr.f32.gmra.mrb[0].mxu0 %v2518
    %v2942 = vpop.f32.mrb[0].mxu0
    %v2943 = vadd.f32 %v32, %v2942
    %v2944 = vpop.f32.mrb[0].mxu0
    %2945 = vmatprep.mubr.f32.mxu0 0.0
    %2946 = vmatmul.mubr.f32.gmra.mrb[0].mxu0 %v2521
    %v2947 = vpop.f32.mrb[0].mxu0
    %v2948 = vadd.f32 %v33, %v2947
    %v2949 = vpop.f32.mrb[0].mxu0
    %2950 = vmatprep.mubr.f32.mxu0 0.0
    %2951 = vmatmul.mubr.f32.gmra.mrb[0].mxu0 %v2524
    %v2952 = vpop.f32.mrb[0].mxu0
    %v2953 = vadd.f32 %v34, %v2952
    %v2954 = vpop.f32.mrb[0].mxu0
    %2955 = vmatprep.mubr.f32.mxu0 0.0
    %2956 = vmatmul.mubr.f32.gmra.mrb[0].mxu0 %v2527
    %v2957 = vpop.f32.mrb[0].mxu0
    %v2958 = vadd.f32 %v35, %v2957
    %v2959 = vpop.f32.mrb[0].mxu0
    %2960 = vmatprep.mubr.f32.mxu0 0.0
    %2961 = vmatmul.mubr.f32.gmra.mrb[0].mxu0 %v2530
    %v2962 = vpop.f32.mrb[0].mxu0
    %v2963 = vadd.f32 %v36, %v2962
    %v2964 = vpop.f32.mrb[0].mxu0
    %2965 = vdwg.mxu0
    %2966 = vmax.xlane.f32.xlu0 %v2888
    %v2967 = vpop.xlane.xlu0 %2966
    %2968 = vmax.xlane.f32.xlu0 %v2893
    %v2969 = vpop.xlane.xlu0 %2968
    %2970 = vmax.xlane.f32.xlu0 %v2898
    %v2971 = vpop.xlane.xlu0 %2970
    %2972 = vmax.xlane.f32.xlu0 %v2903
    %v2973 = vpop.xlane.xlu0 %2972
    %2974 = vmax.xlane.f32.xlu0 %v2908
    %v2975 = vpop.xlane.xlu0 %2974
    %2976 = vmax.xlane.f32.xlu0 %v2913
    %v2977 = vpop.xlane.xlu0 %2976
    %2978 = vmax.xlane.f32.xlu0 %v2918
    %v2979 = vpop.xlane.xlu0 %2978
    %2980 = vmax.xlane.f32.xlu0 %v2923
    %v2981 = vpop.xlane.xlu0 %2980
    %2982 = vmax.xlane.f32.xlu0 %v2928
    %v2983 = vpop.xlane.xlu0 %2982
    %2984 = vmax.xlane.f32.xlu0 %v2933
    %v2985 = vpop.xlane.xlu0 %2984
    %2986 = vmax.xlane.f32.xlu0 %v2938
    %v2987 = vpop.xlane.xlu0 %2986
    %2988 = vmax.xlane.f32.xlu0 %v2943
    %v2989 = vpop.xlane.xlu0 %2988
    %2990 = vmax.xlane.f32.xlu0 %v2948
    %v2991 = vpop.xlane.xlu0 %2990
    %2992 = vmax.xlane.f32.xlu0 %v2953
    %v2993 = vpop.xlane.xlu0 %2992
    %2994 = vmax.xlane.f32.xlu0 %v2958
    %v2995 = vpop.xlane.xlu0 %2994
    %2996 = vmax.xlane.f32.xlu0 %v2963
    %v2997 = vpop.xlane.xlu0 %2996
    %v2998 = vsub.f32 %v2888, %v2967
    %v2999 = vsub.f32 %v2893, %v2969
    %v3000 = vsub.f32 %v2898, %v2971
    %v3001 = vsub.f32 %v2903, %v2973
    %v3002 = vsub.f32 %v2908, %v2975
    %v3003 = vsub.f32 %v2913, %v2977
    %v3004 = vsub.f32 %v2918, %v2979
    %v3005 = vsub.f32 %v2923, %v2981
    %v3006 = vsub.f32 %v2928, %v2983
    %v3007 = vsub.f32 %v2933, %v2985
    %v3008 = vsub.f32 %v2938, %v2987
    %v3009 = vsub.f32 %v2943, %v2989
    %v3010 = vsub.f32 %v2948, %v2991
    %v3011 = vsub.f32 %v2953, %v2993
    %v3012 = vsub.f32 %v2958, %v2995
    %v3013 = vsub.f32 %v2963, %v2997
    %v3014 = vmul.f32 %v2998, 1.442695
    %v3015 = vpow.pop %v3014
    %v3016 = vmul.f32 %v2999, 1.442695
    %v3017 = vpow.pop %v3016
    %v3018 = vmul.f32 %v3000, 1.442695
    %v3019 = vpow.pop %v3018
    %v3020 = vmul.f32 %v3001, 1.442695
    %v3021 = vpow.pop %v3020
    %v3022 = vmul.f32 %v3002, 1.442695
    %v3023 = vpow.pop %v3022
    %v3024 = vmul.f32 %v3003, 1.442695
    %v3025 = vpow.pop %v3024
    %v3026 = vmul.f32 %v3004, 1.442695
    %v3027 = vpow.pop %v3026
    %v3028 = vmul.f32 %v3005, 1.442695
    %v3029 = vpow.pop %v3028
    %v3030 = vmul.f32 %v3006, 1.442695
    %v3031 = vpow.pop %v3030
    %v3032 = vmul.f32 %v3007, 1.442695
    %v3033 = vpow.pop %v3032
    %v3034 = vmul.f32 %v3008, 1.442695
    %v3035 = vpow.pop %v3034
    %v3036 = vmul.f32 %v3009, 1.442695
    %v3037 = vpow.pop %v3036
    %v3038 = vmul.f32 %v3010, 1.442695
    %v3039 = vpow.pop %v3038
    %v3040 = vmul.f32 %v3011, 1.442695
    %v3041 = vpow.pop %v3040
    %v3042 = vmul.f32 %v3012, 1.442695
    %v3043 = vpow.pop %v3042
    %v3044 = vmul.f32 %v3013, 1.442695
    %v3045 = vpow.pop %v3044
    %3046 = vadd.xlane.f32.xlu0 %v3015
    %v3047 = vpop.xlane.xlu0 %3046
    %3048 = vadd.xlane.f32.xlu0 %v3017
    %v3049 = vpop.xlane.xlu0 %3048
    %3050 = vadd.xlane.f32.xlu0 %v3019
    %v3051 = vpop.xlane.xlu0 %3050
    %3052 = vadd.xlane.f32.xlu0 %v3021
    %v3053 = vpop.xlane.xlu0 %3052
    %3054 = vadd.xlane.f32.xlu0 %v3023
    %v3055 = vpop.xlane.xlu0 %3054
    %3056 = vadd.xlane.f32.xlu0 %v3025
    %v3057 = vpop.xlane.xlu0 %3056
    %3058 = vadd.xlane.f32.xlu0 %v3027
    %v3059 = vpop.xlane.xlu0 %3058
    %3060 = vadd.xlane.f32.xlu0 %v3029
    %v3061 = vpop.xlane.xlu0 %3060
    %3062 = vadd.xlane.f32.xlu0 %v3031
    %v3063 = vpop.xlane.xlu0 %3062
    %3064 = vadd.xlane.f32.xlu0 %v3033
    %v3065 = vpop.xlane.xlu0 %3064
    %3066 = vadd.xlane.f32.xlu0 %v3035
    %v3067 = vpop.xlane.xlu0 %3066
    %3068 = vadd.xlane.f32.xlu0 %v3037
    %v3069 = vpop.xlane.xlu0 %3068
    %3070 = vadd.xlane.f32.xlu0 %v3039
    %v3071 = vpop.xlane.xlu0 %3070
    %3072 = vadd.xlane.f32.xlu0 %v3041
    %v3073 = vpop.xlane.xlu0 %3072
    %3074 = vadd.xlane.f32.xlu0 %v3043
    %v3075 = vpop.xlane.xlu0 %3074
    %3076 = vadd.xlane.f32.xlu0 %v3045
    %v3077 = vpop.xlane.xlu0 %3076
    %v3078 = vrcp.pop %v3047
    %v3079 = vrcp.pop %v3049
    %v3080 = vrcp.pop %v3051
    %v3081 = vrcp.pop %v3053
    %v3082 = vrcp.pop %v3055
    %v3083 = vrcp.pop %v3057
    %v3084 = vrcp.pop %v3059
    %v3085 = vrcp.pop %v3061
    %v3086 = vrcp.pop %v3063
    %v3087 = vrcp.pop %v3065
    %v3088 = vrcp.pop %v3067
    %v3089 = vrcp.pop %v3069
    %v3090 = vrcp.pop %v3071
    %v3091 = vrcp.pop %v3073
    %v3092 = vrcp.pop %v3075
    %v3093 = vrcp.pop %v3077
    %v3094 = vmul.f32 %v3015, %v3078
    %v3095 = vmul.f32 %v3017, %v3079
    %v3096 = vmul.f32 %v3019, %v3080
    %v3097 = vmul.f32 %v3021, %v3081
    %v3098 = vmul.f32 %v3023, %v3082
    %v3099 = vmul.f32 %v3025, %v3083
    %v3100 = vmul.f32 %v3027, %v3084
    %v3101 = vmul.f32 %v3029, %v3085
    %v3102 = vmul.f32 %v3031, %v3086
    %v3103 = vmul.f32 %v3033, %v3087
    %v3104 = vmul.f32 %v3035, %v3088
    %v3105 = vmul.f32 %v3037, %v3089
    %v3106 = vmul.f32 %v3039, %v3090
    %v3107 = vmul.f32 %v3041, %v3091
    %v3108 = vmul.f32 %v3043, %v3092
    %v3109 = vmul.f32 %v3045, %v3093
    %s3110 = scalar_lea.vmem %s1, 16
    %v3111 = vld [vmem:[%s3110] sm:$0xff]
    %v3112 = vld [vmem:[%s3110 + $0x8] sm:$0xff]
    %v3113 = vld [vmem:[%s855] sm:$0xff]
    %v3114 = vld [vmem:[%s855 + $0x8] sm:$0xff]
    %v3115 = vld [vmem:[%s855 + $0x10] sm:$0xff]
    %v3116 = vld [vmem:[%s855 + $0x18] sm:$0xff]
    %v3117 = vld [vmem:[%s855 + $0x20] sm:$0xff]
    %v3118 = vld [vmem:[%s855 + $0x28] sm:$0xff]
    %v3119 = vld [vmem:[%s862] sm:$0xff]
    %v3120 = vld [vmem:[%s862 + $0x8] sm:$0xff]
    %v3121 = vld [vmem:[%s862 + $0x10] sm:$0xff]
    %v3122 = vld [vmem:[%s862 + $0x18] sm:$0xff]
    %v3123 = vld [vmem:[%s862 + $0x20] sm:$0xff]
    %v3124 = vld [vmem:[%s862 + $0x28] sm:$0xff]
    %3126 = vset.pattern.permute.xlu0 0
    %3127 = vperm.xlu0 %3126, %v3119
    %v3128 = vpop.permute.xlu0 %3127
    %3131 = vset.pattern.permute.xlu0 0
    %3132 = vperm.xlu0 %3131, %v3120
    %v3133 = vpop.permute.xlu0 %3132
    %3136 = vset.pattern.permute.xlu0 0
    %3137 = vperm.xlu0 %3136, %v3121
    %v3138 = vpop.permute.xlu0 %3137
    %3141 = vset.pattern.permute.xlu0 0
    %3142 = vperm.xlu0 %3141, %v3122
    %v3143 = vpop.permute.xlu0 %3142
    %3146 = vset.pattern.permute.xlu0 0
    %3147 = vperm.xlu0 %3146, %v3123
    %v3148 = vpop.permute.xlu0 %3147
    %3151 = vset.pattern.permute.xlu0 0
    %3152 = vperm.xlu0 %3151, %v3124
    %v3153 = vpop.permute.xlu0 %3152
    %v3156 = vsel %vm81, %v3113, 0
    %v3159 = vsel %vm81, %v3114, 0
    %v3162 = vsel %vm81, %v3115, 0
    %v3165 = vsel %vm81, %v3116, 0
    %v3168 = vsel %vm81, %v3117, 0
    %v3171 = vsel %vm81, %v3118, 0
    %3173 = vmatprep.subr.mxu0 0.0
    %3174 = vmatpush1.msra.mxu0 %v3111
    %3175 = vmatprep.subr.mxu0 0.0
    %3176 = vmatpush1.msra.mxu0 %v3112
    %3177 = vmatprep.subr.mxu0 0.0
    %3178 = vmatpush1.msra.mxu0 0.0
    %3179 = vmatprep.subr.mxu0 0.0
    %3180 = vmatpush1.msra.mxu0 0.0
    %3181 = vmatprep.subr.mxu0 0.0
    %3182 = vmatpush1.msra.mxu0 0.0
    %3183 = vmatprep.subr.mxu0 0.0
    %3184 = vmatpush1.msra.mxu0 0.0
    %3185 = vmatprep.subr.mxu0 0.0
    %3186 = vmatpush1.msra.mxu0 0.0
    %3187 = vmatprep.subr.mxu0 0.0
    %3188 = vmatpush1.msra.mxu0 0.0
    %3189 = vmatprep.subr.mxu0 0.0
    %3190 = vmatpush1.msra.mxu0 0.0
    %3191 = vmatprep.subr.mxu0 0.0
    %3192 = vmatpush1.msra.mxu0 0.0
    %3193 = vmatprep.subr.mxu0 0.0
    %3194 = vmatpush1.msra.mxu0 0.0
    %3195 = vmatprep.subr.mxu0 0.0
    %3196 = vmatpush1.msra.mxu0 0.0
    %3197 = vmatprep.subr.mxu0 0.0
    %3198 = vmatpush1.msra.mxu0 0.0
    %3199 = vmatprep.subr.mxu0 0.0
    %3200 = vmatpush1.msra.mxu0 0.0
    %3201 = vmatprep.subr.mxu0 0.0
    %3202 = vmatpush1.msra.mxu0 0.0
    %3203 = vmatprep.subr.mxu0 0.0
    %3204 = vmatpush1.msra.mxu0 0.0
    %3205 = vmatprep.subr.mxu0 0.0
    %3206 = vmatpush1.msra.mxu0 0.0
    %3207 = vmatprep.subr.mxu0 0.0
    %3208 = vmatpush1.msra.mxu0 0.0
    %3209 = vmatprep.subr.mxu0 0.0
    %3210 = vmatpush1.msra.mxu0 0.0
    %3211 = vmatprep.subr.mxu0 0.0
    %3212 = vmatpush1.msra.mxu0 0.0
    %3213 = vmatprep.subr.mxu0 0.0
    %3214 = vmatpush1.msra.mxu0 0.0
    %3215 = vmatprep.subr.mxu0 0.0
    %3216 = vmatpush1.msra.mxu0 0.0
    %3217 = vmatprep.subr.mxu0 0.0
    %3218 = vmatpush1.msra.mxu0 0.0
    %3219 = vmatprep.subr.mxu0 0.0
    %3220 = vmatpush1.msra.mxu0 0.0
    %3221 = vmatprep.subr.mxu0 0.0
    %3222 = vmatpush1.msra.mxu0 0.0
    %3223 = vmatprep.subr.mxu0 0.0
    %3224 = vmatpush1.msra.mxu0 0.0
    %3225 = vmatprep.subr.mxu0 0.0
    %3226 = vmatpush1.msra.mxu0 0.0
    %3227 = vmatprep.subr.mxu0 0.0
    %3228 = vmatpush1.msra.mxu0 0.0
    %3229 = vmatprep.subr.mxu0 0.0
    %3230 = vmatpush1.msra.mxu0 0.0
    %3231 = vmatprep.subr.mxu0 0.0
    %3232 = vmatpush1.msra.mxu0 0.0
    %3233 = vmatprep.subr.mxu0 0.0
    %3234 = vmatpush1.msra.mxu0 0.0
    %3235 = vmatprep.subr.mxu0 0.0
    %3236 = vmatpush1.msra.mxu0 0.0
    %3237 = vmatprep.mubr.f32.mxu0 0.0
    %3238 = vmatmul.mubr.f32.gmra.mrb[0].mxu0 %v3156
    %v3239 = vpop.f32.mrb[0].mxu0
    %v3240 = vadd.f32 %v3128, %v3239
    %v3241 = vpop.f32.mrb[0].mxu0
    %3242 = vmatprep.mubr.f32.mxu0 0.0
    %3243 = vmatmul.mubr.f32.gmra.mrb[0].mxu0 %v3159
    %v3244 = vpop.f32.mrb[0].mxu0
    %v3245 = vadd.f32 %v3133, %v3244
    %v3246 = vpop.f32.mrb[0].mxu0
    %3247 = vmatprep.mubr.f32.mxu0 0.0
    %3248 = vmatmul.mubr.f32.gmra.mrb[0].mxu0 %v3162
    %v3249 = vpop.f32.mrb[0].mxu0
    %v3250 = vadd.f32 %v3138, %v3249
    %v3251 = vpop.f32.mrb[0].mxu0
    %3252 = vmatprep.mubr.f32.mxu0 0.0
    %3253 = vmatmul.mubr.f32.gmra.mrb[0].mxu0 %v3165
    %v3254 = vpop.f32.mrb[0].mxu0
    %v3255 = vadd.f32 %v3143, %v3254
    %v3256 = vpop.f32.mrb[0].mxu0
    %3257 = vmatprep.mubr.f32.mxu0 0.0
    %3258 = vmatmul.mubr.f32.gmra.mrb[0].mxu0 %v3168
    %v3259 = vpop.f32.mrb[0].mxu0
    %v3260 = vadd.f32 %v3148, %v3259
    %v3261 = vpop.f32.mrb[0].mxu0
    %3262 = vmatprep.mubr.f32.mxu0 0.0
    %3263 = vmatmul.mubr.f32.gmra.mrb[0].mxu0 %v3171
    %v3264 = vpop.f32.mrb[0].mxu0
    %v3265 = vadd.f32 %v3153, %v3264
    %v3266 = vpop.f32.mrb[0].mxu0
    %3267 = vdwg.mxu0
    %3268 = vxpose.xlu0.b32.start [1/16] %v3240, 128
    %3269 = vxpose.xlu0.b32.cont [2/16] %v3245, 128
    %3270 = vxpose.xlu0.b32.cont [3/16] 0.0, 128
    %3271 = vxpose.xlu0.b32.cont [4/16] 0.0, 128
    %3272 = vxpose.xlu0.b32.cont [5/16] 0.0, 128
    %3273 = vxpose.xlu0.b32.cont [6/16] 0.0, 128
    %3274 = vxpose.xlu0.b32.cont [7/16] 0.0, 128
    %3275 = vxpose.xlu0.b32.cont [8/16] 0.0, 128
    %3276 = vxpose.xlu0.b32.cont [9/16] 0.0, 128
    %3277 = vxpose.xlu0.b32.cont [10/16] 0.0, 128
    %3278 = vxpose.xlu0.b32.cont [11/16] 0.0, 128
    %3279 = vxpose.xlu0.b32.cont [12/16] 0.0, 128
    %3280 = vxpose.xlu0.b32.cont [13/16] 0.0, 128
    %3281 = vxpose.xlu0.b32.cont [14/16] 0.0, 128
    %3282 = vxpose.xlu0.b32.cont [15/16] 0.0, 128
    %3283 = vxpose.xlu0.b32.end [16/16] 0.0, 128
    %v3284 = vpop.trf.xlu0
    %v3285 = vpop.trf.xlu0
    %v3286 = vpop.trf.xlu0
    %v3287 = vpop.trf.xlu0
    %v3288 = vpop.trf.xlu0
    %v3289 = vpop.trf.xlu0
    %v3290 = vpop.trf.xlu0
    %v3291 = vpop.trf.xlu0
    %v3292 = vpop.trf.xlu0
    %v3293 = vpop.trf.xlu0
    %v3294 = vpop.trf.xlu0
    %v3295 = vpop.trf.xlu0
    %v3296 = vpop.trf.xlu0
    %v3297 = vpop.trf.xlu0
    %v3298 = vpop.trf.xlu0
    %v3299 = vpop.trf.xlu0
    %v3301 = vsel %vm81, %v3284, 0
    %v3304 = vsel %vm81, %v3285, 0
    %v3307 = vsel %vm81, %v3286, 0
    %v3310 = vsel %vm81, %v3287, 0
    %v3313 = vsel %vm81, %v3288, 0
    %v3316 = vsel %vm81, %v3289, 0
    %v3319 = vsel %vm81, %v3290, 0
    %v3322 = vsel %vm81, %v3291, 0
    %v3325 = vsel %vm81, %v3292, 0
    %v3328 = vsel %vm81, %v3293, 0
    %v3331 = vsel %vm81, %v3294, 0
    %v3334 = vsel %vm81, %v3295, 0
    %v3337 = vsel %vm81, %v3296, 0
    %v3340 = vsel %vm81, %v3297, 0
    %v3343 = vsel %vm81, %v3298, 0
    %v3346 = vsel %vm81, %v3299, 0
    %3348 = vmatprep.subr.mxu0 0.0
    %3349 = vmatpush1.msra.mxu0 %v3250
    %3350 = vmatprep.subr.mxu0 0.0
    %3351 = vmatpush1.msra.mxu0 %v3255
    %3352 = vmatprep.subr.mxu0 0.0
    %3353 = vmatpush1.msra.mxu0 0.0
    %3354 = vmatprep.subr.mxu0 0.0
    %3355 = vmatpush1.msra.mxu0 0.0
    %3356 = vmatprep.subr.mxu0 0.0
    %3357 = vmatpush1.msra.mxu0 0.0
    %3358 = vmatprep.subr.mxu0 0.0
    %3359 = vmatpush1.msra.mxu0 0.0
    %3360 = vmatprep.subr.mxu0 0.0
    %3361 = vmatpush1.msra.mxu0 0.0
    %3362 = vmatprep.subr.mxu0 0.0
    %3363 = vmatpush1.msra.mxu0 0.0
    %3364 = vmatprep.subr.mxu0 0.0
    %3365 = vmatpush1.msra.mxu0 0.0
    %3366 = vmatprep.subr.mxu0 0.0
    %3367 = vmatpush1.msra.mxu0 0.0
    %3368 = vmatprep.subr.mxu0 0.0
    %3369 = vmatpush1.msra.mxu0 0.0
    %3370 = vmatprep.subr.mxu0 0.0
    %3371 = vmatpush1.msra.mxu0 0.0
    %3372 = vmatprep.subr.mxu0 0.0
    %3373 = vmatpush1.msra.mxu0 0.0
    %3374 = vmatprep.subr.mxu0 0.0
    %3375 = vmatpush1.msra.mxu0 0.0
    %3376 = vmatprep.subr.mxu0 0.0
    %3377 = vmatpush1.msra.mxu0 0.0
    %3378 = vmatprep.subr.mxu0 0.0
    %3379 = vmatpush1.msra.mxu0 0.0
    %3380 = vmatprep.subr.mxu0 0.0
    %3381 = vmatpush1.msra.mxu0 0.0
    %3382 = vmatprep.subr.mxu0 0.0
    %3383 = vmatpush1.msra.mxu0 0.0
    %3384 = vmatprep.subr.mxu0 0.0
    %3385 = vmatpush1.msra.mxu0 0.0
    %3386 = vmatprep.subr.mxu0 0.0
    %3387 = vmatpush1.msra.mxu0 0.0
    %3388 = vmatprep.subr.mxu0 0.0
    %3389 = vmatpush1.msra.mxu0 0.0
    %3390 = vmatprep.subr.mxu0 0.0
    %3391 = vmatpush1.msra.mxu0 0.0
    %3392 = vmatprep.subr.mxu0 0.0
    %3393 = vmatpush1.msra.mxu0 0.0
    %3394 = vmatprep.subr.mxu0 0.0
    %3395 = vmatpush1.msra.mxu0 0.0
    %3396 = vmatprep.subr.mxu0 0.0
    %3397 = vmatpush1.msra.mxu0 0.0
    %3398 = vmatprep.subr.mxu0 0.0
    %3399 = vmatpush1.msra.mxu0 0.0
    %3400 = vmatprep.subr.mxu0 0.0
    %3401 = vmatpush1.msra.mxu0 0.0
    %3402 = vmatprep.subr.mxu0 0.0
    %3403 = vmatpush1.msra.mxu0 0.0
    %3404 = vmatprep.subr.mxu0 0.0
    %3405 = vmatpush1.msra.mxu0 0.0
    %3406 = vmatprep.subr.mxu0 0.0
    %3407 = vmatpush1.msra.mxu0 0.0
    %3408 = vmatprep.subr.mxu0 0.0
    %3409 = vmatpush1.msra.mxu0 0.0
    %3410 = vmatprep.subr.mxu0 0.0
    %3411 = vmatpush1.msra.mxu0 0.0
    %3412 = vmatprep.mubr.f32.mxu0 0.0
    %3413 = vmatmul.mubr.f32.gmra.mrb[0].mxu0 %v3301
    %v3414 = vpop.f32.mrb[0].mxu0
    %v3415 = vadd.f32 %v21, %v3414
    %v3416 = vpop.f32.mrb[0].mxu0
    %3417 = vmatprep.mubr.f32.mxu0 0.0
    %3418 = vmatmul.mubr.f32.gmra.mrb[0].mxu0 %v3304
    %v3419 = vpop.f32.mrb[0].mxu0
    %v3420 = vadd.f32 %v22, %v3419
    %v3421 = vpop.f32.mrb[0].mxu0
    %3422 = vmatprep.mubr.f32.mxu0 0.0
    %3423 = vmatmul.mubr.f32.gmra.mrb[0].mxu0 %v3307
    %v3424 = vpop.f32.mrb[0].mxu0
    %v3425 = vadd.f32 %v23, %v3424
    %v3426 = vpop.f32.mrb[0].mxu0
    %3427 = vmatprep.mubr.f32.mxu0 0.0
    %3428 = vmatmul.mubr.f32.gmra.mrb[0].mxu0 %v3310
    %v3429 = vpop.f32.mrb[0].mxu0
    %v3430 = vadd.f32 %v24, %v3429
    %v3431 = vpop.f32.mrb[0].mxu0
    %3432 = vmatprep.mubr.f32.mxu0 0.0
    %3433 = vmatmul.mubr.f32.gmra.mrb[0].mxu0 %v3313
    %v3434 = vpop.f32.mrb[0].mxu0
    %v3435 = vadd.f32 %v25, %v3434
    %v3436 = vpop.f32.mrb[0].mxu0
    %3437 = vmatprep.mubr.f32.mxu0 0.0
    %3438 = vmatmul.mubr.f32.gmra.mrb[0].mxu0 %v3316
    %v3439 = vpop.f32.mrb[0].mxu0
    %v3440 = vadd.f32 %v26, %v3439
    %v3441 = vpop.f32.mrb[0].mxu0
    %3442 = vmatprep.mubr.f32.mxu0 0.0
    %3443 = vmatmul.mubr.f32.gmra.mrb[0].mxu0 %v3319
    %v3444 = vpop.f32.mrb[0].mxu0
    %v3445 = vadd.f32 %v27, %v3444
    %v3446 = vpop.f32.mrb[0].mxu0
    %3447 = vmatprep.mubr.f32.mxu0 0.0
    %3448 = vmatmul.mubr.f32.gmra.mrb[0].mxu0 %v3322
    %v3449 = vpop.f32.mrb[0].mxu0
    %v3450 = vadd.f32 %v28, %v3449
    %v3451 = vpop.f32.mrb[0].mxu0
    %3452 = vmatprep.mubr.f32.mxu0 0.0
    %3453 = vmatmul.mubr.f32.gmra.mrb[0].mxu0 %v3325
    %v3454 = vpop.f32.mrb[0].mxu0
    %v3455 = vadd.f32 %v29, %v3454
    %v3456 = vpop.f32.mrb[0].mxu0
    %3457 = vmatprep.mubr.f32.mxu0 0.0
    %3458 = vmatmul.mubr.f32.gmra.mrb[0].mxu0 %v3328
    %v3459 = vpop.f32.mrb[0].mxu0
    %v3460 = vadd.f32 %v30, %v3459
    %v3461 = vpop.f32.mrb[0].mxu0
    %3462 = vmatprep.mubr.f32.mxu0 0.0
    %3463 = vmatmul.mubr.f32.gmra.mrb[0].mxu0 %v3331
    %v3464 = vpop.f32.mrb[0].mxu0
    %v3465 = vadd.f32 %v31, %v3464
    %v3466 = vpop.f32.mrb[0].mxu0
    %3467 = vmatprep.mubr.f32.mxu0 0.0
    %3468 = vmatmul.mubr.f32.gmra.mrb[0].mxu0 %v3334
    %v3469 = vpop.f32.mrb[0].mxu0
    %v3470 = vadd.f32 %v32, %v3469
    %v3471 = vpop.f32.mrb[0].mxu0
    %3472 = vmatprep.mubr.f32.mxu0 0.0
    %3473 = vmatmul.mubr.f32.gmra.mrb[0].mxu0 %v3337
    %v3474 = vpop.f32.mrb[0].mxu0
    %v3475 = vadd.f32 %v33, %v3474
    %v3476 = vpop.f32.mrb[0].mxu0
    %3477 = vmatprep.mubr.f32.mxu0 0.0
    %3478 = vmatmul.mubr.f32.gmra.mrb[0].mxu0 %v3340
    %v3479 = vpop.f32.mrb[0].mxu0
    %v3480 = vadd.f32 %v34, %v3479
    %v3481 = vpop.f32.mrb[0].mxu0
    %3482 = vmatprep.mubr.f32.mxu0 0.0
    %3483 = vmatmul.mubr.f32.gmra.mrb[0].mxu0 %v3343
    %v3484 = vpop.f32.mrb[0].mxu0
    %v3485 = vadd.f32 %v35, %v3484
    %v3486 = vpop.f32.mrb[0].mxu0
    %3487 = vmatprep.mubr.f32.mxu0 0.0
    %3488 = vmatmul.mubr.f32.gmra.mrb[0].mxu0 %v3346
    %v3489 = vpop.f32.mrb[0].mxu0
    %v3490 = vadd.f32 %v36, %v3489
    %v3491 = vpop.f32.mrb[0].mxu0
    %3492 = vdwg.mxu0
    %3493 = vmax.xlane.f32.xlu0 %v3415
    %v3494 = vpop.xlane.xlu0 %3493
    %3495 = vmax.xlane.f32.xlu0 %v3420
    %v3496 = vpop.xlane.xlu0 %3495
    %3497 = vmax.xlane.f32.xlu0 %v3425
    %v3498 = vpop.xlane.xlu0 %3497
    %3499 = vmax.xlane.f32.xlu0 %v3430
    %v3500 = vpop.xlane.xlu0 %3499
    %3501 = vmax.xlane.f32.xlu0 %v3435
    %v3502 = vpop.xlane.xlu0 %3501
    %3503 = vmax.xlane.f32.xlu0 %v3440
    %v3504 = vpop.xlane.xlu0 %3503
    %3505 = vmax.xlane.f32.xlu0 %v3445
    %v3506 = vpop.xlane.xlu0 %3505
    %3507 = vmax.xlane.f32.xlu0 %v3450
    %v3508 = vpop.xlane.xlu0 %3507
    %3509 = vmax.xlane.f32.xlu0 %v3455
    %v3510 = vpop.xlane.xlu0 %3509
    %3511 = vmax.xlane.f32.xlu0 %v3460
    %v3512 = vpop.xlane.xlu0 %3511
    %3513 = vmax.xlane.f32.xlu0 %v3465
    %v3514 = vpop.xlane.xlu0 %3513
    %3515 = vmax.xlane.f32.xlu0 %v3470
    %v3516 = vpop.xlane.xlu0 %3515
    %3517 = vmax.xlane.f32.xlu0 %v3475
    %v3518 = vpop.xlane.xlu0 %3517
    %3519 = vmax.xlane.f32.xlu0 %v3480
    %v3520 = vpop.xlane.xlu0 %3519
    %3521 = vmax.xlane.f32.xlu0 %v3485
    %v3522 = vpop.xlane.xlu0 %3521
    %3523 = vmax.xlane.f32.xlu0 %v3490
    %v3524 = vpop.xlane.xlu0 %3523
    %v3525 = vsub.f32 %v3415, %v3494
    %v3526 = vsub.f32 %v3420, %v3496
    %v3527 = vsub.f32 %v3425, %v3498
    %v3528 = vsub.f32 %v3430, %v3500
    %v3529 = vsub.f32 %v3435, %v3502
    %v3530 = vsub.f32 %v3440, %v3504
    %v3531 = vsub.f32 %v3445, %v3506
    %v3532 = vsub.f32 %v3450, %v3508
    %v3533 = vsub.f32 %v3455, %v3510
    %v3534 = vsub.f32 %v3460, %v3512
    %v3535 = vsub.f32 %v3465, %v3514
    %v3536 = vsub.f32 %v3470, %v3516
    %v3537 = vsub.f32 %v3475, %v3518
    %v3538 = vsub.f32 %v3480, %v3520
    %v3539 = vsub.f32 %v3485, %v3522
    %v3540 = vsub.f32 %v3490, %v3524
    %v3541 = vmul.f32 %v3525, 1.442695
    %v3542 = vpow.pop %v3541
    %v3543 = vmul.f32 %v3526, 1.442695
    %v3544 = vpow.pop %v3543
    %v3545 = vmul.f32 %v3527, 1.442695
    %v3546 = vpow.pop %v3545
    %v3547 = vmul.f32 %v3528, 1.442695
    %v3548 = vpow.pop %v3547
    %v3549 = vmul.f32 %v3529, 1.442695
    %v3550 = vpow.pop %v3549
    %v3551 = vmul.f32 %v3530, 1.442695
    %v3552 = vpow.pop %v3551
    %v3553 = vmul.f32 %v3531, 1.442695
    %v3554 = vpow.pop %v3553
    %v3555 = vmul.f32 %v3532, 1.442695
    %v3556 = vpow.pop %v3555
    %v3557 = vmul.f32 %v3533, 1.442695
    %v3558 = vpow.pop %v3557
    %v3559 = vmul.f32 %v3534, 1.442695
    %v3560 = vpow.pop %v3559
    %v3561 = vmul.f32 %v3535, 1.442695
    %v3562 = vpow.pop %v3561
    %v3563 = vmul.f32 %v3536, 1.442695
    %v3564 = vpow.pop %v3563
    %v3565 = vmul.f32 %v3537, 1.442695
    %v3566 = vpow.pop %v3565
    %v3567 = vmul.f32 %v3538, 1.442695
    %v3568 = vpow.pop %v3567
    %v3569 = vmul.f32 %v3539, 1.442695
    %v3570 = vpow.pop %v3569
    %v3571 = vmul.f32 %v3540, 1.442695
    %v3572 = vpow.pop %v3571
    %3573 = vadd.xlane.f32.xlu0 %v3542
    %v3574 = vpop.xlane.xlu0 %3573
    %3575 = vadd.xlane.f32.xlu0 %v3544
    %v3576 = vpop.xlane.xlu0 %3575
    %3577 = vadd.xlane.f32.xlu0 %v3546
    %v3578 = vpop.xlane.xlu0 %3577
    %3579 = vadd.xlane.f32.xlu0 %v3548
    %v3580 = vpop.xlane.xlu0 %3579
    %3581 = vadd.xlane.f32.xlu0 %v3550
    %v3582 = vpop.xlane.xlu0 %3581
    %3583 = vadd.xlane.f32.xlu0 %v3552
    %v3584 = vpop.xlane.xlu0 %3583
    %3585 = vadd.xlane.f32.xlu0 %v3554
    %v3586 = vpop.xlane.xlu0 %3585
    %3587 = vadd.xlane.f32.xlu0 %v3556
    %v3588 = vpop.xlane.xlu0 %3587
    %3589 = vadd.xlane.f32.xlu0 %v3558
    %v3590 = vpop.xlane.xlu0 %3589
    %3591 = vadd.xlane.f32.xlu0 %v3560
    %v3592 = vpop.xlane.xlu0 %3591
    %3593 = vadd.xlane.f32.xlu0 %v3562
    %v3594 = vpop.xlane.xlu0 %3593
    %3595 = vadd.xlane.f32.xlu0 %v3564
    %v3596 = vpop.xlane.xlu0 %3595
    %3597 = vadd.xlane.f32.xlu0 %v3566
    %v3598 = vpop.xlane.xlu0 %3597
    %3599 = vadd.xlane.f32.xlu0 %v3568
    %v3600 = vpop.xlane.xlu0 %3599
    %3601 = vadd.xlane.f32.xlu0 %v3570
    %v3602 = vpop.xlane.xlu0 %3601
    %3603 = vadd.xlane.f32.xlu0 %v3572
    %v3604 = vpop.xlane.xlu0 %3603
    %v3605 = vrcp.pop %v3574
    %v3606 = vrcp.pop %v3576
    %v3607 = vrcp.pop %v3578
    %v3608 = vrcp.pop %v3580
    %v3609 = vrcp.pop %v3582
    %v3610 = vrcp.pop %v3584
    %v3611 = vrcp.pop %v3586
    %v3612 = vrcp.pop %v3588
    %v3613 = vrcp.pop %v3590
    %v3614 = vrcp.pop %v3592
    %v3615 = vrcp.pop %v3594
    %v3616 = vrcp.pop %v3596
    %v3617 = vrcp.pop %v3598
    %v3618 = vrcp.pop %v3600
    %v3619 = vrcp.pop %v3602
    %v3620 = vrcp.pop %v3604
    %v3621 = vmul.f32 %v3542, %v3605
    %v3622 = vmul.f32 %v3544, %v3606
    %v3623 = vmul.f32 %v3546, %v3607
    %v3624 = vmul.f32 %v3548, %v3608
    %v3625 = vmul.f32 %v3550, %v3609
    %v3626 = vmul.f32 %v3552, %v3610
    %v3627 = vmul.f32 %v3554, %v3611
    %v3628 = vmul.f32 %v3556, %v3612
    %v3629 = vmul.f32 %v3558, %v3613
    %v3630 = vmul.f32 %v3560, %v3614
    %v3631 = vmul.f32 %v3562, %v3615
    %v3632 = vmul.f32 %v3564, %v3616
    %v3633 = vmul.f32 %v3566, %v3617
    %v3634 = vmul.f32 %v3568, %v3618
    %v3635 = vmul.f32 %v3570, %v3619
    %v3636 = vmul.f32 %v3572, %v3620
    %3637 = vmatprep.subr.mxu0 0.0
    %3638 = vmatpush1.xpose.msra.mxu0 %v3621
    %3639 = vmatprep.subr.mxu0 0.0
    %3640 = vmatpush1.xpose.msra.mxu0 %v3622
    %3641 = vmatprep.subr.mxu0 0.0
    %3642 = vmatpush1.xpose.msra.mxu0 %v3623
    %3643 = vmatprep.subr.mxu0 0.0
    %3644 = vmatpush1.xpose.msra.mxu0 %v3624
    %3645 = vmatprep.subr.mxu0 0.0
    %3646 = vmatpush1.xpose.msra.mxu0 %v3625
    %3647 = vmatprep.subr.mxu0 0.0
    %3648 = vmatpush1.xpose.msra.mxu0 %v3626
    %3649 = vmatprep.subr.mxu0 0.0
    %3650 = vmatpush1.xpose.msra.mxu0 %v3627
    %3651 = vmatprep.subr.mxu0 0.0
    %3652 = vmatpush1.xpose.msra.mxu0 %v3628
    %3653 = vmatprep.subr.mxu0 0.0
    %3654 = vmatpush1.xpose.msra.mxu0 %v3629
    %3655 = vmatprep.subr.mxu0 0.0
    %3656 = vmatpush1.xpose.msra.mxu0 %v3630
    %3657 = vmatprep.subr.mxu0 0.0
    %3658 = vmatpush1.xpose.msra.mxu0 %v3631
    %3659 = vmatprep.subr.mxu0 0.0
    %3660 = vmatpush1.xpose.msra.mxu0 %v3632
    %3661 = vmatprep.subr.mxu0 0.0
    %3662 = vmatpush1.xpose.msra.mxu0 %v3633
    %3663 = vmatprep.subr.mxu0 0.0
    %3664 = vmatpush1.xpose.msra.mxu0 %v3634
    %3665 = vmatprep.subr.mxu0 0.0
    %3666 = vmatpush1.xpose.msra.mxu0 %v3635
    %3667 = vmatprep.subr.mxu0 0.0
    %3668 = vmatpush1.xpose.msra.mxu0 %v3636
    %3669 = vmatprep.subr.mxu0 0.0
    %3670 = vmatpush1.xpose.msra.mxu0 0.0
    %3671 = vmatprep.subr.mxu0 0.0
    %3672 = vmatpush1.xpose.msra.mxu0 0.0
    %3673 = vmatprep.subr.mxu0 0.0
    %3674 = vmatpush1.xpose.msra.mxu0 0.0
    %3675 = vmatprep.subr.mxu0 0.0
    %3676 = vmatpush1.xpose.msra.mxu0 0.0
    %3677 = vmatprep.subr.mxu0 0.0
    %3678 = vmatpush1.xpose.msra.mxu0 0.0
    %3679 = vmatprep.subr.mxu0 0.0
    %3680 = vmatpush1.xpose.msra.mxu0 0.0
    %3681 = vmatprep.subr.mxu0 0.0
    %3682 = vmatpush1.xpose.msra.mxu0 0.0
    %3683 = vmatprep.subr.mxu0 0.0
    %3684 = vmatpush1.xpose.msra.mxu0 0.0
    %3685 = vmatprep.subr.mxu0 0.0
    %3686 = vmatpush1.xpose.msra.mxu0 0.0
    %3687 = vmatprep.subr.mxu0 0.0
    %3688 = vmatpush1.xpose.msra.mxu0 0.0
    %3689 = vmatprep.subr.mxu0 0.0
    %3690 = vmatpush1.xpose.msra.mxu0 0.0
    %3691 = vmatprep.subr.mxu0 0.0
    %3692 = vmatpush1.xpose.msra.mxu0 0.0
    %3693 = vmatprep.subr.mxu0 0.0
    %3694 = vmatpush1.xpose.msra.mxu0 0.0
    %3695 = vmatprep.subr.mxu0 0.0
    %3696 = vmatpush1.xpose.msra.mxu0 0.0
    %3697 = vmatprep.subr.mxu0 0.0
    %3698 = vmatpush1.xpose.msra.mxu0 0.0
    %3699 = vmatprep.subr.mxu0 0.0
    %3700 = vmatpush1.xpose.msra.mxu0 0.0
    %3701 = vmatprep.mubr.f32.mxu0 0.0
    %3702 = vmatmul.mubr.f32.gmra.mrb[0].mxu0 %v3260
    %v3703 = vpop.f32.mrb[0].mxu0
    %v3704 = vadd.f32 0.0, %v3703
    %v3705 = vpop.f32.mrb[0].mxu0
    %3706 = vmatprep.mubr.f32.mxu0 0.0
    %3707 = vmatmul.mubr.f32.gmra.mrb[0].mxu0 %v3265
    %v3708 = vpop.f32.mrb[0].mxu0
    %v3709 = vadd.f32 0.0, %v3708
    %v3710 = vpop.f32.mrb[0].mxu0
    %3711 = vdwg.mxu0
    %3712 = vmatprep.subr.mxu0 0.0
    %3713 = vmatpush1.xpose.msra.mxu0 %v2805
    %3714 = vmatprep.subr.mxu0 0.0
    %3715 = vmatpush1.xpose.msra.mxu0 %v2806
    %3716 = vmatprep.subr.mxu0 0.0
    %3717 = vmatpush1.xpose.msra.mxu0 %v2807
    %3718 = vmatprep.subr.mxu0 0.0
    %3719 = vmatpush1.xpose.msra.mxu0 %v2808
    %3720 = vmatprep.subr.mxu0 0.0
    %3721 = vmatpush1.xpose.msra.mxu0 %v2809
    %3722 = vmatprep.subr.mxu0 0.0
    %3723 = vmatpush1.xpose.msra.mxu0 %v2810
    %3724 = vmatprep.subr.mxu0 0.0
    %3725 = vmatpush1.xpose.msra.mxu0 %v2811
    %3726 = vmatprep.subr.mxu0 0.0
    %3727 = vmatpush1.xpose.msra.mxu0 %v2812
    %3728 = vmatprep.subr.mxu0 0.0
    %3729 = vmatpush1.xpose.msra.mxu0 %v2813
    %3730 = vmatprep.subr.mxu0 0.0
    %3731 = vmatpush1.xpose.msra.mxu0 %v2814
    %3732 = vmatprep.subr.mxu0 0.0
    %3733 = vmatpush1.xpose.msra.mxu0 %v2815
    %3734 = vmatprep.subr.mxu0 0.0
    %3735 = vmatpush1.xpose.msra.mxu0 %v2816
    %3736 = vmatprep.subr.mxu0 0.0
    %3737 = vmatpush1.xpose.msra.mxu0 %v2817
    %3738 = vmatprep.subr.mxu0 0.0
    %3739 = vmatpush1.xpose.msra.mxu0 %v2818
    %3740 = vmatprep.subr.mxu0 0.0
    %3741 = vmatpush1.xpose.msra.mxu0 %v2819
    %3742 = vmatprep.subr.mxu0 0.0
    %3743 = vmatpush1.xpose.msra.mxu0 %v2820
    %3744 = vmatprep.subr.mxu0 0.0
    %3745 = vmatpush1.xpose.msra.mxu0 0.0
    %3746 = vmatprep.subr.mxu0 0.0
    %3747 = vmatpush1.xpose.msra.mxu0 0.0
    %3748 = vmatprep.subr.mxu0 0.0
    %3749 = vmatpush1.xpose.msra.mxu0 0.0
    %3750 = vmatprep.subr.mxu0 0.0
    %3751 = vmatpush1.xpose.msra.mxu0 0.0
    %3752 = vmatprep.subr.mxu0 0.0
    %3753 = vmatpush1.xpose.msra.mxu0 0.0
    %3754 = vmatprep.subr.mxu0 0.0
    %3755 = vmatpush1.xpose.msra.mxu0 0.0
    %3756 = vmatprep.subr.mxu0 0.0
    %3757 = vmatpush1.xpose.msra.mxu0 0.0
    %3758 = vmatprep.subr.mxu0 0.0
    %3759 = vmatpush1.xpose.msra.mxu0 0.0
    %3760 = vmatprep.subr.mxu0 0.0
    %3761 = vmatpush1.xpose.msra.mxu0 0.0
    %3762 = vmatprep.subr.mxu0 0.0
    %3763 = vmatpush1.xpose.msra.mxu0 0.0
    %3764 = vmatprep.subr.mxu0 0.0
    %3765 = vmatpush1.xpose.msra.mxu0 0.0
    %3766 = vmatprep.subr.mxu0 0.0
    %3767 = vmatpush1.xpose.msra.mxu0 0.0
    %3768 = vmatprep.subr.mxu0 0.0
    %3769 = vmatpush1.xpose.msra.mxu0 0.0
    %3770 = vmatprep.subr.mxu0 0.0
    %3771 = vmatpush1.xpose.msra.mxu0 0.0
    %3772 = vmatprep.subr.mxu0 0.0
    %3773 = vmatpush1.xpose.msra.mxu0 0.0
    %3774 = vmatprep.subr.mxu0 0.0
    %3775 = vmatpush1.xpose.msra.mxu0 0.0
    %3776 = vmatprep.mubr.f32.mxu0 0.0
    %3777 = vmatmul.mubr.f32.gmra.mrb[0].mxu0 %v2444
    %v3778 = vpop.f32.mrb[0].mxu0
    %v3779 = vadd.f32 %v3704, %v3778
    %v3780 = vpop.f32.mrb[0].mxu0
    %3781 = vmatprep.mubr.f32.mxu0 0.0
    %3782 = vmatmul.mubr.f32.gmra.mrb[0].mxu0 %v2449
    %v3783 = vpop.f32.mrb[0].mxu0
    %v3784 = vadd.f32 %v3709, %v3783
    %v3785 = vpop.f32.mrb[0].mxu0
    %3786 = vdwg.mxu0
    %3787 = vmatprep.subr.mxu0 0.0
    %3788 = vmatpush1.msra.mxu0 %v3260
    %3789 = vmatprep.subr.mxu0 0.0
    %3790 = vmatpush1.msra.mxu0 %v3265
    %3791 = vmatprep.subr.mxu0 0.0
    %3792 = vmatpush1.msra.mxu0 0.0
    %3793 = vmatprep.subr.mxu0 0.0
    %3794 = vmatpush1.msra.mxu0 0.0
    %3795 = vmatprep.subr.mxu0 0.0
    %3796 = vmatpush1.msra.mxu0 0.0
    %3797 = vmatprep.subr.mxu0 0.0
    %3798 = vmatpush1.msra.mxu0 0.0
    %3799 = vmatprep.subr.mxu0 0.0
    %3800 = vmatpush1.msra.mxu0 0.0
    %3801 = vmatprep.subr.mxu0 0.0
    %3802 = vmatpush1.msra.mxu0 0.0
    %3803 = vmatprep.subr.mxu0 0.0
    %3804 = vmatpush1.msra.mxu0 0.0
    %3805 = vmatprep.subr.mxu0 0.0
    %3806 = vmatpush1.msra.mxu0 0.0
    %3807 = vmatprep.subr.mxu0 0.0
    %3808 = vmatpush1.msra.mxu0 0.0
    %3809 = vmatprep.subr.mxu0 0.0
    %3810 = vmatpush1.msra.mxu0 0.0
    %3811 = vmatprep.subr.mxu0 0.0
    %3812 = vmatpush1.msra.mxu0 0.0
    %3813 = vmatprep.subr.mxu0 0.0
    %3814 = vmatpush1.msra.mxu0 0.0
    %3815 = vmatprep.subr.mxu0 0.0
    %3816 = vmatpush1.msra.mxu0 0.0
    %3817 = vmatprep.subr.mxu0 0.0
    %3818 = vmatpush1.msra.mxu0 0.0
    %3819 = vmatprep.subr.mxu0 0.0
    %3820 = vmatpush1.msra.mxu0 0.0
    %3821 = vmatprep.subr.mxu0 0.0
    %3822 = vmatpush1.msra.mxu0 0.0
    %3823 = vmatprep.subr.mxu0 0.0
    %3824 = vmatpush1.msra.mxu0 0.0
    %3825 = vmatprep.subr.mxu0 0.0
    %3826 = vmatpush1.msra.mxu0 0.0
    %3827 = vmatprep.subr.mxu0 0.0
    %3828 = vmatpush1.msra.mxu0 0.0
    %3829 = vmatprep.subr.mxu0 0.0
    %3830 = vmatpush1.msra.mxu0 0.0
    %3831 = vmatprep.subr.mxu0 0.0
    %3832 = vmatpush1.msra.mxu0 0.0
    %3833 = vmatprep.subr.mxu0 0.0
    %3834 = vmatpush1.msra.mxu0 0.0
    %3835 = vmatprep.subr.mxu0 0.0
    %3836 = vmatpush1.msra.mxu0 0.0
    %3837 = vmatprep.subr.mxu0 0.0
    %3838 = vmatpush1.msra.mxu0 0.0
    %3839 = vmatprep.subr.mxu0 0.0
    %3840 = vmatpush1.msra.mxu0 0.0
    %3841 = vmatprep.subr.mxu0 0.0
    %3842 = vmatpush1.msra.mxu0 0.0
    %3843 = vmatprep.subr.mxu0 0.0
    %3844 = vmatpush1.msra.mxu0 0.0
    %3845 = vmatprep.subr.mxu0 0.0
    %3846 = vmatpush1.msra.mxu0 0.0
    %3847 = vmatprep.subr.mxu0 0.0
    %3848 = vmatpush1.msra.mxu0 0.0
    %3849 = vmatprep.subr.mxu0 0.0
    %3850 = vmatpush1.msra.mxu0 0.0
    %3851 = vmatprep.mubr.f32.mxu0 0.0
    %3852 = vmatmul.mubr.f32.gmra.mrb[0].mxu0 %v3301
    %v3853 = vpop.f32.mrb[0].mxu0
    %v3854 = vadd.f32 %v21, %v3853
    %v3855 = vpop.f32.mrb[0].mxu0
    %3856 = vmatprep.mubr.f32.mxu0 0.0
    %3857 = vmatmul.mubr.f32.gmra.mrb[0].mxu0 %v3304
    %v3858 = vpop.f32.mrb[0].mxu0
    %v3859 = vadd.f32 %v22, %v3858
    %v3860 = vpop.f32.mrb[0].mxu0
    %3861 = vmatprep.mubr.f32.mxu0 0.0
    %3862 = vmatmul.mubr.f32.gmra.mrb[0].mxu0 %v3307
    %v3863 = vpop.f32.mrb[0].mxu0
    %v3864 = vadd.f32 %v23, %v3863
    %v3865 = vpop.f32.mrb[0].mxu0
    %3866 = vmatprep.mubr.f32.mxu0 0.0
    %3867 = vmatmul.mubr.f32.gmra.mrb[0].mxu0 %v3310
    %v3868 = vpop.f32.mrb[0].mxu0
    %v3869 = vadd.f32 %v24, %v3868
    %v3870 = vpop.f32.mrb[0].mxu0
    %3871 = vmatprep.mubr.f32.mxu0 0.0
    %3872 = vmatmul.mubr.f32.gmra.mrb[0].mxu0 %v3313
    %v3873 = vpop.f32.mrb[0].mxu0
    %v3874 = vadd.f32 %v25, %v3873
    %v3875 = vpop.f32.mrb[0].mxu0
    %3876 = vmatprep.mubr.f32.mxu0 0.0
    %3877 = vmatmul.mubr.f32.gmra.mrb[0].mxu0 %v3316
    %v3878 = vpop.f32.mrb[0].mxu0
    %v3879 = vadd.f32 %v26, %v3878
    %v3880 = vpop.f32.mrb[0].mxu0
    %3881 = vmatprep.mubr.f32.mxu0 0.0
    %3882 = vmatmul.mubr.f32.gmra.mrb[0].mxu0 %v3319
    %v3883 = vpop.f32.mrb[0].mxu0
    %v3884 = vadd.f32 %v27, %v3883
    %v3885 = vpop.f32.mrb[0].mxu0
    %3886 = vmatprep.mubr.f32.mxu0 0.0
    %3887 = vmatmul.mubr.f32.gmra.mrb[0].mxu0 %v3322
    %v3888 = vpop.f32.mrb[0].mxu0
    %v3889 = vadd.f32 %v28, %v3888
    %v3890 = vpop.f32.mrb[0].mxu0
    %3891 = vmatprep.mubr.f32.mxu0 0.0
    %3892 = vmatmul.mubr.f32.gmra.mrb[0].mxu0 %v3325
    %v3893 = vpop.f32.mrb[0].mxu0
    %v3894 = vadd.f32 %v29, %v3893
    %v3895 = vpop.f32.mrb[0].mxu0
    %3896 = vmatprep.mubr.f32.mxu0 0.0
    %3897 = vmatmul.mubr.f32.gmra.mrb[0].mxu0 %v3328
    %v3898 = vpop.f32.mrb[0].mxu0
    %v3899 = vadd.f32 %v30, %v3898
    %v3900 = vpop.f32.mrb[0].mxu0
    %3901 = vmatprep.mubr.f32.mxu0 0.0
    %3902 = vmatmul.mubr.f32.gmra.mrb[0].mxu0 %v3331
    %v3903 = vpop.f32.mrb[0].mxu0
    %v3904 = vadd.f32 %v31, %v3903
    %v3905 = vpop.f32.mrb[0].mxu0
    %3906 = vmatprep.mubr.f32.mxu0 0.0
    %3907 = vmatmul.mubr.f32.gmra.mrb[0].mxu0 %v3334
    %v3908 = vpop.f32.mrb[0].mxu0
    %v3909 = vadd.f32 %v32, %v3908
    %v3910 = vpop.f32.mrb[0].mxu0
    %3911 = vmatprep.mubr.f32.mxu0 0.0
    %3912 = vmatmul.mubr.f32.gmra.mrb[0].mxu0 %v3337
    %v3913 = vpop.f32.mrb[0].mxu0
    %v3914 = vadd.f32 %v33, %v3913
    %v3915 = vpop.f32.mrb[0].mxu0
    %3916 = vmatprep.mubr.f32.mxu0 0.0
    %3917 = vmatmul.mubr.f32.gmra.mrb[0].mxu0 %v3340
    %v3918 = vpop.f32.mrb[0].mxu0
    %v3919 = vadd.f32 %v34, %v3918
    %v3920 = vpop.f32.mrb[0].mxu0
    %3921 = vmatprep.mubr.f32.mxu0 0.0
    %3922 = vmatmul.mubr.f32.gmra.mrb[0].mxu0 %v3343
    %v3923 = vpop.f32.mrb[0].mxu0
    %v3924 = vadd.f32 %v35, %v3923
    %v3925 = vpop.f32.mrb[0].mxu0
    %3926 = vmatprep.mubr.f32.mxu0 0.0
    %3927 = vmatmul.mubr.f32.gmra.mrb[0].mxu0 %v3346
    %v3928 = vpop.f32.mrb[0].mxu0
    %v3929 = vadd.f32 %v36, %v3928
    %v3930 = vpop.f32.mrb[0].mxu0
    %3931 = vdwg.mxu0
    %3932 = vmax.xlane.f32.xlu0 %v3854
    %v3933 = vpop.xlane.xlu0 %3932
    %3934 = vmax.xlane.f32.xlu0 %v3859
    %v3935 = vpop.xlane.xlu0 %3934
    %3936 = vmax.xlane.f32.xlu0 %v3864
    %v3937 = vpop.xlane.xlu0 %3936
    %3938 = vmax.xlane.f32.xlu0 %v3869
    %v3939 = vpop.xlane.xlu0 %3938
    %3940 = vmax.xlane.f32.xlu0 %v3874
    %v3941 = vpop.xlane.xlu0 %3940
    %3942 = vmax.xlane.f32.xlu0 %v3879
    %v3943 = vpop.xlane.xlu0 %3942
    %3944 = vmax.xlane.f32.xlu0 %v3884
    %v3945 = vpop.xlane.xlu0 %3944
    %3946 = vmax.xlane.f32.xlu0 %v3889
    %v3947 = vpop.xlane.xlu0 %3946
    %3948 = vmax.xlane.f32.xlu0 %v3894
    %v3949 = vpop.xlane.xlu0 %3948
    %3950 = vmax.xlane.f32.xlu0 %v3899
    %v3951 = vpop.xlane.xlu0 %3950
    %3952 = vmax.xlane.f32.xlu0 %v3904
    %v3953 = vpop.xlane.xlu0 %3952
    %3954 = vmax.xlane.f32.xlu0 %v3909
    %v3955 = vpop.xlane.xlu0 %3954
    %3956 = vmax.xlane.f32.xlu0 %v3914
    %v3957 = vpop.xlane.xlu0 %3956
    %3958 = vmax.xlane.f32.xlu0 %v3919
    %v3959 = vpop.xlane.xlu0 %3958
    %3960 = vmax.xlane.f32.xlu0 %v3924
    %v3961 = vpop.xlane.xlu0 %3960
    %3962 = vmax.xlane.f32.xlu0 %v3929
    %v3963 = vpop.xlane.xlu0 %3962
    %v3964 = vsub.f32 %v3854, %v3933
    %v3965 = vsub.f32 %v3859, %v3935
    %v3966 = vsub.f32 %v3864, %v3937
    %v3967 = vsub.f32 %v3869, %v3939
    %v3968 = vsub.f32 %v3874, %v3941
    %v3969 = vsub.f32 %v3879, %v3943
    %v3970 = vsub.f32 %v3884, %v3945
    %v3971 = vsub.f32 %v3889, %v3947
    %v3972 = vsub.f32 %v3894, %v3949
    %v3973 = vsub.f32 %v3899, %v3951
    %v3974 = vsub.f32 %v3904, %v3953
    %v3975 = vsub.f32 %v3909, %v3955
    %v3976 = vsub.f32 %v3914, %v3957
    %v3977 = vsub.f32 %v3919, %v3959
    %v3978 = vsub.f32 %v3924, %v3961
    %v3979 = vsub.f32 %v3929, %v3963
    %v3980 = vmul.f32 %v3964, 1.442695
    %v3981 = vpow.pop %v3980
    %v3982 = vmul.f32 %v3965, 1.442695
    %v3983 = vpow.pop %v3982
    %v3984 = vmul.f32 %v3966, 1.442695
    %v3985 = vpow.pop %v3984
    %v3986 = vmul.f32 %v3967, 1.442695
    %v3987 = vpow.pop %v3986
    %v3988 = vmul.f32 %v3968, 1.442695
    %v3989 = vpow.pop %v3988
    %v3990 = vmul.f32 %v3969, 1.442695
    %v3991 = vpow.pop %v3990
    %v3992 = vmul.f32 %v3970, 1.442695
    %v3993 = vpow.pop %v3992
    %v3994 = vmul.f32 %v3971, 1.442695
    %v3995 = vpow.pop %v3994
    %v3996 = vmul.f32 %v3972, 1.442695
    %v3997 = vpow.pop %v3996
    %v3998 = vmul.f32 %v3973, 1.442695
    %v3999 = vpow.pop %v3998
    %v4000 = vmul.f32 %v3974, 1.442695
    %v4001 = vpow.pop %v4000
    %v4002 = vmul.f32 %v3975, 1.442695
    %v4003 = vpow.pop %v4002
    %v4004 = vmul.f32 %v3976, 1.442695
    %v4005 = vpow.pop %v4004
    %v4006 = vmul.f32 %v3977, 1.442695
    %v4007 = vpow.pop %v4006
    %v4008 = vmul.f32 %v3978, 1.442695
    %v4009 = vpow.pop %v4008
    %v4010 = vmul.f32 %v3979, 1.442695
    %v4011 = vpow.pop %v4010
    %4012 = vadd.xlane.f32.xlu0 %v3981
    %v4013 = vpop.xlane.xlu0 %4012
    %4014 = vadd.xlane.f32.xlu0 %v3983
    %v4015 = vpop.xlane.xlu0 %4014
    %4016 = vadd.xlane.f32.xlu0 %v3985
    %v4017 = vpop.xlane.xlu0 %4016
    %4018 = vadd.xlane.f32.xlu0 %v3987
    %v4019 = vpop.xlane.xlu0 %4018
    %4020 = vadd.xlane.f32.xlu0 %v3989
    %v4021 = vpop.xlane.xlu0 %4020
    %4022 = vadd.xlane.f32.xlu0 %v3991
    %v4023 = vpop.xlane.xlu0 %4022
    %4024 = vadd.xlane.f32.xlu0 %v3993
    %v4025 = vpop.xlane.xlu0 %4024
    %4026 = vadd.xlane.f32.xlu0 %v3995
    %v4027 = vpop.xlane.xlu0 %4026
    %4028 = vadd.xlane.f32.xlu0 %v3997
    %v4029 = vpop.xlane.xlu0 %4028
    %4030 = vadd.xlane.f32.xlu0 %v3999
    %v4031 = vpop.xlane.xlu0 %4030
    %4032 = vadd.xlane.f32.xlu0 %v4001
    %v4033 = vpop.xlane.xlu0 %4032
    %4034 = vadd.xlane.f32.xlu0 %v4003
    %v4035 = vpop.xlane.xlu0 %4034
    %4036 = vadd.xlane.f32.xlu0 %v4005
    %v4037 = vpop.xlane.xlu0 %4036
    %4038 = vadd.xlane.f32.xlu0 %v4007
    %v4039 = vpop.xlane.xlu0 %4038
    %4040 = vadd.xlane.f32.xlu0 %v4009
    %v4041 = vpop.xlane.xlu0 %4040
    %4042 = vadd.xlane.f32.xlu0 %v4011
    %v4043 = vpop.xlane.xlu0 %4042
    %v4044 = vrcp.pop %v4013
    %v4045 = vrcp.pop %v4015
    %v4046 = vrcp.pop %v4017
    %v4047 = vrcp.pop %v4019
    %v4048 = vrcp.pop %v4021
    %v4049 = vrcp.pop %v4023
    %v4050 = vrcp.pop %v4025
    %v4051 = vrcp.pop %v4027
    %v4052 = vrcp.pop %v4029
    %v4053 = vrcp.pop %v4031
    %v4054 = vrcp.pop %v4033
    %v4055 = vrcp.pop %v4035
    %v4056 = vrcp.pop %v4037
    %v4057 = vrcp.pop %v4039
    %v4058 = vrcp.pop %v4041
    %v4059 = vrcp.pop %v4043
    %v4060 = vmul.f32 %v3981, %v4044
    %v4061 = vmul.f32 %v3983, %v4045
    %v4062 = vmul.f32 %v3985, %v4046
    %v4063 = vmul.f32 %v3987, %v4047
    %v4064 = vmul.f32 %v3989, %v4048
    %v4065 = vmul.f32 %v3991, %v4049
    %v4066 = vmul.f32 %v3993, %v4050
    %v4067 = vmul.f32 %v3995, %v4051
    %v4068 = vmul.f32 %v3997, %v4052
    %v4069 = vmul.f32 %v3999, %v4053
    %v4070 = vmul.f32 %v4001, %v4054
    %v4071 = vmul.f32 %v4003, %v4055
    %v4072 = vmul.f32 %v4005, %v4056
    %v4073 = vmul.f32 %v4007, %v4057
    %v4074 = vmul.f32 %v4009, %v4058
    %v4075 = vmul.f32 %v4011, %v4059
    %4076 = vmatprep.subr.mxu0 0.0
    %4077 = vmatpush1.msra.mxu0 %v4060
    %4078 = vmatprep.subr.mxu0 0.0
    %4079 = vmatpush1.msra.mxu0 %v4061
    %4080 = vmatprep.subr.mxu0 0.0
    %4081 = vmatpush1.msra.mxu0 %v4062
    %4082 = vmatprep.subr.mxu0 0.0
    %4083 = vmatpush1.msra.mxu0 %v4063
    %4084 = vmatprep.subr.mxu0 0.0
    %4085 = vmatpush1.msra.mxu0 %v4064
    %4086 = vmatprep.subr.mxu0 0.0
    %4087 = vmatpush1.msra.mxu0 %v4065
    %4088 = vmatprep.subr.mxu0 0.0
    %4089 = vmatpush1.msra.mxu0 %v4066
    %4090 = vmatprep.subr.mxu0 0.0
    %4091 = vmatpush1.msra.mxu0 %v4067
    %4092 = vmatprep.subr.mxu0 0.0
    %4093 = vmatpush1.msra.mxu0 %v4068
    %4094 = vmatprep.subr.mxu0 0.0
    %4095 = vmatpush1.msra.mxu0 %v4069
    %4096 = vmatprep.subr.mxu0 0.0
    %4097 = vmatpush1.msra.mxu0 %v4070
    %4098 = vmatprep.subr.mxu0 0.0
    %4099 = vmatpush1.msra.mxu0 %v4071
    %4100 = vmatprep.subr.mxu0 0.0
    %4101 = vmatpush1.msra.mxu0 %v4072
    %4102 = vmatprep.subr.mxu0 0.0
    %4103 = vmatpush1.msra.mxu0 %v4073
    %4104 = vmatprep.subr.mxu0 0.0
    %4105 = vmatpush1.msra.mxu0 %v4074
    %4106 = vmatprep.subr.mxu0 0.0
    %4107 = vmatpush1.msra.mxu0 %v4075
    %4108 = vmatprep.subr.mxu0 0.0
    %4109 = vmatpush1.msra.mxu0 0.0
    %4110 = vmatprep.subr.mxu0 0.0
    %4111 = vmatpush1.msra.mxu0 0.0
    %4112 = vmatprep.subr.mxu0 0.0
    %4113 = vmatpush1.msra.mxu0 0.0
    %4114 = vmatprep.subr.mxu0 0.0
    %4115 = vmatpush1.msra.mxu0 0.0
    %4116 = vmatprep.subr.mxu0 0.0
    %4117 = vmatpush1.msra.mxu0 0.0
    %4118 = vmatprep.subr.mxu0 0.0
    %4119 = vmatpush1.msra.mxu0 0.0
    %4120 = vmatprep.subr.mxu0 0.0
    %4121 = vmatpush1.msra.mxu0 0.0
    %4122 = vmatprep.subr.mxu0 0.0
    %4123 = vmatpush1.msra.mxu0 0.0
    %4124 = vmatprep.subr.mxu0 0.0
    %4125 = vmatpush1.msra.mxu0 0.0
    %4126 = vmatprep.subr.mxu0 0.0
    %4127 = vmatpush1.msra.mxu0 0.0
    %4128 = vmatprep.subr.mxu0 0.0
    %4129 = vmatpush1.msra.mxu0 0.0
    %4130 = vmatprep.subr.mxu0 0.0
    %4131 = vmatpush1.msra.mxu0 0.0
    %4132 = vmatprep.subr.mxu0 0.0
    %4133 = vmatpush1.msra.mxu0 0.0
    %4134 = vmatprep.subr.mxu0 0.0
    %4135 = vmatpush1.msra.mxu0 0.0
    %4136 = vmatprep.subr.mxu0 0.0
    %4137 = vmatpush1.msra.mxu0 0.0
    %4138 = vmatprep.subr.mxu0 0.0
    %4139 = vmatpush1.msra.mxu0 0.0
    %4140 = vmatprep.mubr.f32.mxu0 0.0
    %4141 = vmatmul.mubr.f32.gmra.mrb[0].mxu0 %v3240
    %v4142 = vpop.f32.mrb[0].mxu0
    %v4143 = vadd.f32 0.0, %v4142
    %v4144 = vpop.f32.mrb[0].mxu0
    %4145 = vmatprep.mubr.f32.mxu0 0.0
    %4146 = vmatmul.mubr.f32.gmra.mrb[0].mxu0 %v3245
    %v4147 = vpop.f32.mrb[0].mxu0
    %v4148 = vadd.f32 0.0, %v4147
    %v4149 = vpop.f32.mrb[0].mxu0
    %4150 = vdwg.mxu0
    %4151 = vmatprep.subr.mxu0 0.0
    %4152 = vmatpush1.msra.mxu0 %v3094
    %4153 = vmatprep.subr.mxu0 0.0
    %4154 = vmatpush1.msra.mxu0 %v3095
    %4155 = vmatprep.subr.mxu0 0.0
    %4156 = vmatpush1.msra.mxu0 %v3096
    %4157 = vmatprep.subr.mxu0 0.0
    %4158 = vmatpush1.msra.mxu0 %v3097
    %4159 = vmatprep.subr.mxu0 0.0
    %4160 = vmatpush1.msra.mxu0 %v3098
    %4161 = vmatprep.subr.mxu0 0.0
    %4162 = vmatpush1.msra.mxu0 %v3099
    %4163 = vmatprep.subr.mxu0 0.0
    %4164 = vmatpush1.msra.mxu0 %v3100
    %4165 = vmatprep.subr.mxu0 0.0
    %4166 = vmatpush1.msra.mxu0 %v3101
    %4167 = vmatprep.subr.mxu0 0.0
    %4168 = vmatpush1.msra.mxu0 %v3102
    %4169 = vmatprep.subr.mxu0 0.0
    %4170 = vmatpush1.msra.mxu0 %v3103
    %4171 = vmatprep.subr.mxu0 0.0
    %4172 = vmatpush1.msra.mxu0 %v3104
    %4173 = vmatprep.subr.mxu0 0.0
    %4174 = vmatpush1.msra.mxu0 %v3105
    %4175 = vmatprep.subr.mxu0 0.0
    %4176 = vmatpush1.msra.mxu0 %v3106
    %4177 = vmatprep.subr.mxu0 0.0
    %4178 = vmatpush1.msra.mxu0 %v3107
    %4179 = vmatprep.subr.mxu0 0.0
    %4180 = vmatpush1.msra.mxu0 %v3108
    %4181 = vmatprep.subr.mxu0 0.0
    %4182 = vmatpush1.msra.mxu0 %v3109
    %4183 = vmatprep.subr.mxu0 0.0
    %4184 = vmatpush1.msra.mxu0 0.0
    %4185 = vmatprep.subr.mxu0 0.0
    %4186 = vmatpush1.msra.mxu0 0.0
    %4187 = vmatprep.subr.mxu0 0.0
    %4188 = vmatpush1.msra.mxu0 0.0
    %4189 = vmatprep.subr.mxu0 0.0
    %4190 = vmatpush1.msra.mxu0 0.0
    %4191 = vmatprep.subr.mxu0 0.0
    %4192 = vmatpush1.msra.mxu0 0.0
    %4193 = vmatprep.subr.mxu0 0.0
    %4194 = vmatpush1.msra.mxu0 0.0
    %4195 = vmatprep.subr.mxu0 0.0
    %4196 = vmatpush1.msra.mxu0 0.0
    %4197 = vmatprep.subr.mxu0 0.0
    %4198 = vmatpush1.msra.mxu0 0.0
    %4199 = vmatprep.subr.mxu0 0.0
    %4200 = vmatpush1.msra.mxu0 0.0
    %4201 = vmatprep.subr.mxu0 0.0
    %4202 = vmatpush1.msra.mxu0 0.0
    %4203 = vmatprep.subr.mxu0 0.0
    %4204 = vmatpush1.msra.mxu0 0.0
    %4205 = vmatprep.subr.mxu0 0.0
    %4206 = vmatpush1.msra.mxu0 0.0
    %4207 = vmatprep.subr.mxu0 0.0
    %4208 = vmatpush1.msra.mxu0 0.0
    %4209 = vmatprep.subr.mxu0 0.0
    %4210 = vmatpush1.msra.mxu0 0.0
    %4211 = vmatprep.subr.mxu0 0.0
    %4212 = vmatpush1.msra.mxu0 0.0
    %4213 = vmatprep.subr.mxu0 0.0
    %4214 = vmatpush1.msra.mxu0 0.0
    %4215 = vmatprep.mubr.f32.mxu0 0.0
    %4216 = vmatmul.mubr.f32.gmra.mrb[0].mxu0 %v2424
    %v4217 = vpop.f32.mrb[0].mxu0
    %v4218 = vadd.f32 %v4143, %v4217
    %v4219 = vpop.f32.mrb[0].mxu0
    %4220 = vmatprep.mubr.f32.mxu0 0.0
    %4221 = vmatmul.mubr.f32.gmra.mrb[0].mxu0 %v2429
    %v4222 = vpop.f32.mrb[0].mxu0
    %v4223 = vadd.f32 %v4148, %v4222
    %v4224 = vpop.f32.mrb[0].mxu0
    %4225 = vdwg.mxu0
    %4226 = vxpose.xlu0.b32.start [1/16] %v4218, 128
    %4227 = vxpose.xlu0.b32.cont [2/16] %v4223, 128
    %4228 = vxpose.xlu0.b32.cont [3/16] 0.0, 128
    %4229 = vxpose.xlu0.b32.cont [4/16] 0.0, 128
    %4230 = vxpose.xlu0.b32.cont [5/16] 0.0, 128
    %4231 = vxpose.xlu0.b32.cont [6/16] 0.0, 128
    %4232 = vxpose.xlu0.b32.cont [7/16] 0.0, 128
    %4233 = vxpose.xlu0.b32.cont [8/16] 0.0, 128
    %4234 = vxpose.xlu0.b32.cont [9/16] 0.0, 128
    %4235 = vxpose.xlu0.b32.cont [10/16] 0.0, 128
    %4236 = vxpose.xlu0.b32.cont [11/16] 0.0, 128
    %4237 = vxpose.xlu0.b32.cont [12/16] 0.0, 128
    %4238 = vxpose.xlu0.b32.cont [13/16] 0.0, 128
    %4239 = vxpose.xlu0.b32.cont [14/16] 0.0, 128
    %4240 = vxpose.xlu0.b32.cont [15/16] 0.0, 128
    %4241 = vxpose.xlu0.b32.end [16/16] 0.0, 128
    %v4242 = vpop.trf.xlu0
    %v4243 = vpop.trf.xlu0
    %v4244 = vpop.trf.xlu0
    %v4245 = vpop.trf.xlu0
    %v4246 = vpop.trf.xlu0
    %v4247 = vpop.trf.xlu0
    %v4248 = vpop.trf.xlu0
    %v4249 = vpop.trf.xlu0
    %v4250 = vpop.trf.xlu0
    %v4251 = vpop.trf.xlu0
    %v4252 = vpop.trf.xlu0
    %v4253 = vpop.trf.xlu0
    %v4254 = vpop.trf.xlu0
    %v4255 = vpop.trf.xlu0
    %v4256 = vpop.trf.xlu0
    %v4257 = vpop.trf.xlu0
    %4258 = vxpose.xlu0.b32.start [1/16] %v4242, 128
    %4259 = vxpose.xlu0.b32.cont [2/16] %v4243, 128
    %4260 = vxpose.xlu0.b32.cont [3/16] 0.0, 128
    %4261 = vxpose.xlu0.b32.cont [4/16] 0.0, 128
    %4262 = vxpose.xlu0.b32.cont [5/16] 0.0, 128
    %4263 = vxpose.xlu0.b32.cont [6/16] 0.0, 128
    %4264 = vxpose.xlu0.b32.cont [7/16] 0.0, 128
    %4265 = vxpose.xlu0.b32.cont [8/16] 0.0, 128
    %4266 = vxpose.xlu0.b32.cont [9/16] 0.0, 128
    %4267 = vxpose.xlu0.b32.cont [10/16] 0.0, 128
    %4268 = vxpose.xlu0.b32.cont [11/16] 0.0, 128
    %4269 = vxpose.xlu0.b32.cont [12/16] 0.0, 128
    %4270 = vxpose.xlu0.b32.cont [13/16] 0.0, 128
    %4271 = vxpose.xlu0.b32.cont [14/16] 0.0, 128
    %4272 = vxpose.xlu0.b32.cont [15/16] 0.0, 128
    %4273 = vxpose.xlu0.b32.end [16/16] 0.0, 128
    %v4274 = vpop.trf.xlu0
    %v4275 = vpop.trf.xlu0
    %v4276 = vpop.trf.xlu0
    %v4277 = vpop.trf.xlu0
    %v4278 = vpop.trf.xlu0
    %v4279 = vpop.trf.xlu0
    %v4280 = vpop.trf.xlu0
    %v4281 = vpop.trf.xlu0
    %v4282 = vpop.trf.xlu0
    %v4283 = vpop.trf.xlu0
    %v4284 = vpop.trf.xlu0
    %v4285 = vpop.trf.xlu0
    %v4286 = vpop.trf.xlu0
    %v4287 = vpop.trf.xlu0
    %v4288 = vpop.trf.xlu0
    %v4289 = vpop.trf.xlu0
    %4290 = vxpose.xlu0.b32.start [1/16] %v4244, 128
    %4291 = vxpose.xlu0.b32.cont [2/16] %v4245, 128
    %4292 = vxpose.xlu0.b32.cont [3/16] 0.0, 128
    %4293 = vxpose.xlu0.b32.cont [4/16] 0.0, 128
    %4294 = vxpose.xlu0.b32.cont [5/16] 0.0, 128
    %4295 = vxpose.xlu0.b32.cont [6/16] 0.0, 128
    %4296 = vxpose.xlu0.b32.cont [7/16] 0.0, 128
    %4297 = vxpose.xlu0.b32.cont [8/16] 0.0, 128
    %4298 = vxpose.xlu0.b32.cont [9/16] 0.0, 128
    %4299 = vxpose.xlu0.b32.cont [10/16] 0.0, 128
    %4300 = vxpose.xlu0.b32.cont [11/16] 0.0, 128
    %4301 = vxpose.xlu0.b32.cont [12/16] 0.0, 128
    %4302 = vxpose.xlu0.b32.cont [13/16] 0.0, 128
    %4303 = vxpose.xlu0.b32.cont [14/16] 0.0, 128
    %4304 = vxpose.xlu0.b32.cont [15/16] 0.0, 128
    %4305 = vxpose.xlu0.b32.end [16/16] 0.0, 128
    %v4306 = vpop.trf.xlu0
    %v4307 = vpop.trf.xlu0
    %v4308 = vpop.trf.xlu0
    %v4309 = vpop.trf.xlu0
    %v4310 = vpop.trf.xlu0
    %v4311 = vpop.trf.xlu0
    %v4312 = vpop.trf.xlu0
    %v4313 = vpop.trf.xlu0
    %v4314 = vpop.trf.xlu0
    %v4315 = vpop.trf.xlu0
    %v4316 = vpop.trf.xlu0
    %v4317 = vpop.trf.xlu0
    %v4318 = vpop.trf.xlu0
    %v4319 = vpop.trf.xlu0
    %v4320 = vpop.trf.xlu0
    %v4321 = vpop.trf.xlu0
    %4322 = vxpose.xlu0.b32.start [1/16] %v4246, 128
    %4323 = vxpose.xlu0.b32.cont [2/16] %v4247, 128
    %4324 = vxpose.xlu0.b32.cont [3/16] 0.0, 128
    %4325 = vxpose.xlu0.b32.cont [4/16] 0.0, 128
    %4326 = vxpose.xlu0.b32.cont [5/16] 0.0, 128
    %4327 = vxpose.xlu0.b32.cont [6/16] 0.0, 128
    %4328 = vxpose.xlu0.b32.cont [7/16] 0.0, 128
    %4329 = vxpose.xlu0.b32.cont [8/16] 0.0, 128
    %4330 = vxpose.xlu0.b32.cont [9/16] 0.0, 128
    %4331 = vxpose.xlu0.b32.cont [10/16] 0.0, 128
    %4332 = vxpose.xlu0.b32.cont [11/16] 0.0, 128
    %4333 = vxpose.xlu0.b32.cont [12/16] 0.0, 128
    %4334 = vxpose.xlu0.b32.cont [13/16] 0.0, 128
    %4335 = vxpose.xlu0.b32.cont [14/16] 0.0, 128
    %4336 = vxpose.xlu0.b32.cont [15/16] 0.0, 128
    %4337 = vxpose.xlu0.b32.end [16/16] 0.0, 128
    %v4338 = vpop.trf.xlu0
    %v4339 = vpop.trf.xlu0
    %v4340 = vpop.trf.xlu0
    %v4341 = vpop.trf.xlu0
    %v4342 = vpop.trf.xlu0
    %v4343 = vpop.trf.xlu0
    %v4344 = vpop.trf.xlu0
    %v4345 = vpop.trf.xlu0
    %v4346 = vpop.trf.xlu0
    %v4347 = vpop.trf.xlu0
    %v4348 = vpop.trf.xlu0
    %v4349 = vpop.trf.xlu0
    %v4350 = vpop.trf.xlu0
    %v4351 = vpop.trf.xlu0
    %v4352 = vpop.trf.xlu0
    %v4353 = vpop.trf.xlu0
    %4354 = vxpose.xlu0.b32.start [1/16] %v4248, 128
    %4355 = vxpose.xlu0.b32.cont [2/16] %v4249, 128
    %4356 = vxpose.xlu0.b32.cont [3/16] 0.0, 128
    %4357 = vxpose.xlu0.b32.cont [4/16] 0.0, 128
    %4358 = vxpose.xlu0.b32.cont [5/16] 0.0, 128
    %4359 = vxpose.xlu0.b32.cont [6/16] 0.0, 128
    %4360 = vxpose.xlu0.b32.cont [7/16] 0.0, 128
    %4361 = vxpose.xlu0.b32.cont [8/16] 0.0, 128
    %4362 = vxpose.xlu0.b32.cont [9/16] 0.0, 128
    %4363 = vxpose.xlu0.b32.cont [10/16] 0.0, 128
    %4364 = vxpose.xlu0.b32.cont [11/16] 0.0, 128
    %4365 = vxpose.xlu0.b32.cont [12/16] 0.0, 128
    %4366 = vxpose.xlu0.b32.cont [13/16] 0.0, 128
    %4367 = vxpose.xlu0.b32.cont [14/16] 0.0, 128
    %4368 = vxpose.xlu0.b32.cont [15/16] 0.0, 128
    %4369 = vxpose.xlu0.b32.end [16/16] 0.0, 128
    %v4370 = vpop.trf.xlu0
    %v4371 = vpop.trf.xlu0
    %v4372 = vpop.trf.xlu0
    %v4373 = vpop.trf.xlu0
    %v4374 = vpop.trf.xlu0
    %v4375 = vpop.trf.xlu0
    %v4376 = vpop.trf.xlu0
    %v4377 = vpop.trf.xlu0
    %v4378 = vpop.trf.xlu0
    %v4379 = vpop.trf.xlu0
    %v4380 = vpop.trf.xlu0
    %v4381 = vpop.trf.xlu0
    %v4382 = vpop.trf.xlu0
    %v4383 = vpop.trf.xlu0
    %v4384 = vpop.trf.xlu0
    %v4385 = vpop.trf.xlu0
    %4386 = vxpose.xlu0.b32.start [1/16] %v4250, 128
    %4387 = vxpose.xlu0.b32.cont [2/16] %v4251, 128
    %4388 = vxpose.xlu0.b32.cont [3/16] 0.0, 128
    %4389 = vxpose.xlu0.b32.cont [4/16] 0.0, 128
    %4390 = vxpose.xlu0.b32.cont [5/16] 0.0, 128
    %4391 = vxpose.xlu0.b32.cont [6/16] 0.0, 128
    %4392 = vxpose.xlu0.b32.cont [7/16] 0.0, 128
    %4393 = vxpose.xlu0.b32.cont [8/16] 0.0, 128
    %4394 = vxpose.xlu0.b32.cont [9/16] 0.0, 128
    %4395 = vxpose.xlu0.b32.cont [10/16] 0.0, 128
    %4396 = vxpose.xlu0.b32.cont [11/16] 0.0, 128
    %4397 = vxpose.xlu0.b32.cont [12/16] 0.0, 128
    %4398 = vxpose.xlu0.b32.cont [13/16] 0.0, 128
    %4399 = vxpose.xlu0.b32.cont [14/16] 0.0, 128
    %4400 = vxpose.xlu0.b32.cont [15/16] 0.0, 128
    %4401 = vxpose.xlu0.b32.end [16/16] 0.0, 128
    %v4402 = vpop.trf.xlu0
    %v4403 = vpop.trf.xlu0
    %v4404 = vpop.trf.xlu0
    %v4405 = vpop.trf.xlu0
    %v4406 = vpop.trf.xlu0
    %v4407 = vpop.trf.xlu0
    %v4408 = vpop.trf.xlu0
    %v4409 = vpop.trf.xlu0
    %v4410 = vpop.trf.xlu0
    %v4411 = vpop.trf.xlu0
    %v4412 = vpop.trf.xlu0
    %v4413 = vpop.trf.xlu0
    %v4414 = vpop.trf.xlu0
    %v4415 = vpop.trf.xlu0
    %v4416 = vpop.trf.xlu0
    %v4417 = vpop.trf.xlu0
    %4418 = vxpose.xlu0.b32.start [1/16] %v4252, 128
    %4419 = vxpose.xlu0.b32.cont [2/16] %v4253, 128
    %4420 = vxpose.xlu0.b32.cont [3/16] 0.0, 128
    %4421 = vxpose.xlu0.b32.cont [4/16] 0.0, 128
    %4422 = vxpose.xlu0.b32.cont [5/16] 0.0, 128
    %4423 = vxpose.xlu0.b32.cont [6/16] 0.0, 128
    %4424 = vxpose.xlu0.b32.cont [7/16] 0.0, 128
    %4425 = vxpose.xlu0.b32.cont [8/16] 0.0, 128
    %4426 = vxpose.xlu0.b32.cont [9/16] 0.0, 128
    %4427 = vxpose.xlu0.b32.cont [10/16] 0.0, 128
    %4428 = vxpose.xlu0.b32.cont [11/16] 0.0, 128
    %4429 = vxpose.xlu0.b32.cont [12/16] 0.0, 128
    %4430 = vxpose.xlu0.b32.cont [13/16] 0.0, 128
    %4431 = vxpose.xlu0.b32.cont [14/16] 0.0, 128
    %4432 = vxpose.xlu0.b32.cont [15/16] 0.0, 128
    %4433 = vxpose.xlu0.b32.end [16/16] 0.0, 128
    %v4434 = vpop.trf.xlu0
    %v4435 = vpop.trf.xlu0
    %v4436 = vpop.trf.xlu0
    %v4437 = vpop.trf.xlu0
    %v4438 = vpop.trf.xlu0
    %v4439 = vpop.trf.xlu0
    %v4440 = vpop.trf.xlu0
    %v4441 = vpop.trf.xlu0
    %v4442 = vpop.trf.xlu0
    %v4443 = vpop.trf.xlu0
    %v4444 = vpop.trf.xlu0
    %v4445 = vpop.trf.xlu0
    %v4446 = vpop.trf.xlu0
    %v4447 = vpop.trf.xlu0
    %v4448 = vpop.trf.xlu0
    %v4449 = vpop.trf.xlu0
    %4450 = vxpose.xlu0.b32.start [1/16] %v4254, 128
    %4451 = vxpose.xlu0.b32.cont [2/16] %v4255, 128
    %4452 = vxpose.xlu0.b32.cont [3/16] 0.0, 128
    %4453 = vxpose.xlu0.b32.cont [4/16] 0.0, 128
    %4454 = vxpose.xlu0.b32.cont [5/16] 0.0, 128
    %4455 = vxpose.xlu0.b32.cont [6/16] 0.0, 128
    %4456 = vxpose.xlu0.b32.cont [7/16] 0.0, 128
    %4457 = vxpose.xlu0.b32.cont [8/16] 0.0, 128
    %4458 = vxpose.xlu0.b32.cont [9/16] 0.0, 128
    %4459 = vxpose.xlu0.b32.cont [10/16] 0.0, 128
    %4460 = vxpose.xlu0.b32.cont [11/16] 0.0, 128
    %4461 = vxpose.xlu0.b32.cont [12/16] 0.0, 128
    %4462 = vxpose.xlu0.b32.cont [13/16] 0.0, 128
    %4463 = vxpose.xlu0.b32.cont [14/16] 0.0, 128
    %4464 = vxpose.xlu0.b32.cont [15/16] 0.0, 128
    %4465 = vxpose.xlu0.b32.end [16/16] 0.0, 128
    %v4466 = vpop.trf.xlu0
    %v4467 = vpop.trf.xlu0
    %v4468 = vpop.trf.xlu0
    %v4469 = vpop.trf.xlu0
    %v4470 = vpop.trf.xlu0
    %v4471 = vpop.trf.xlu0
    %v4472 = vpop.trf.xlu0
    %v4473 = vpop.trf.xlu0
    %v4474 = vpop.trf.xlu0
    %v4475 = vpop.trf.xlu0
    %v4476 = vpop.trf.xlu0
    %v4477 = vpop.trf.xlu0
    %v4478 = vpop.trf.xlu0
    %v4479 = vpop.trf.xlu0
    %v4480 = vpop.trf.xlu0
    %v4481 = vpop.trf.xlu0
    %4482 = vxpose.xlu0.b32.start [1/16] %v4256, 128
    %4483 = vxpose.xlu0.b32.cont [2/16] %v4257, 128
    %4484 = vxpose.xlu0.b32.cont [3/16] 0.0, 128
    %4485 = vxpose.xlu0.b32.cont [4/16] 0.0, 128
    %4486 = vxpose.xlu0.b32.cont [5/16] 0.0, 128
    %4487 = vxpose.xlu0.b32.cont [6/16] 0.0, 128
    %4488 = vxpose.xlu0.b32.cont [7/16] 0.0, 128
    %4489 = vxpose.xlu0.b32.cont [8/16] 0.0, 128
    %4490 = vxpose.xlu0.b32.cont [9/16] 0.0, 128
    %4491 = vxpose.xlu0.b32.cont [10/16] 0.0, 128
    %4492 = vxpose.xlu0.b32.cont [11/16] 0.0, 128
    %4493 = vxpose.xlu0.b32.cont [12/16] 0.0, 128
    %4494 = vxpose.xlu0.b32.cont [13/16] 0.0, 128
    %4495 = vxpose.xlu0.b32.cont [14/16] 0.0, 128
    %4496 = vxpose.xlu0.b32.cont [15/16] 0.0, 128
    %4497 = vxpose.xlu0.b32.end [16/16] 0.0, 128
    %v4498 = vpop.trf.xlu0
    %v4499 = vpop.trf.xlu0
    %v4500 = vpop.trf.xlu0
    %v4501 = vpop.trf.xlu0
    %v4502 = vpop.trf.xlu0
    %v4503 = vpop.trf.xlu0
    %v4504 = vpop.trf.xlu0
    %v4505 = vpop.trf.xlu0
    %v4506 = vpop.trf.xlu0
    %v4507 = vpop.trf.xlu0
    %v4508 = vpop.trf.xlu0
    %v4509 = vpop.trf.xlu0
    %v4510 = vpop.trf.xlu0
    %v4511 = vpop.trf.xlu0
    %v4512 = vpop.trf.xlu0
    %v4513 = vpop.trf.xlu0
    %4514 = vxpose.xlu0.b32.start [1/16] %v4274, 128
    %4515 = vxpose.xlu0.b32.cont [2/16] %v4275, 128
    %4516 = vxpose.xlu0.b32.cont [3/16] %v4306, 128
    %4517 = vxpose.xlu0.b32.cont [4/16] %v4307, 128
    %4518 = vxpose.xlu0.b32.cont [5/16] %v4338, 128
    %4519 = vxpose.xlu0.b32.cont [6/16] %v4339, 128
    %4520 = vxpose.xlu0.b32.cont [7/16] %v4370, 128
    %4521 = vxpose.xlu0.b32.cont [8/16] %v4371, 128
    %4522 = vxpose.xlu0.b32.cont [9/16] %v4402, 128
    %4523 = vxpose.xlu0.b32.cont [10/16] %v4403, 128
    %4524 = vxpose.xlu0.b32.cont [11/16] %v4434, 128
    %4525 = vxpose.xlu0.b32.cont [12/16] %v4435, 128
    %4526 = vxpose.xlu0.b32.cont [13/16] %v4466, 128
    %4527 = vxpose.xlu0.b32.cont [14/16] %v4467, 128
    %4528 = vxpose.xlu0.b32.cont [15/16] %v4498, 128
    %4529 = vxpose.xlu0.b32.end [16/16] %v4499, 128
    %v4530 = vpop.trf.xlu0
    %v4531 = vpop.trf.xlu0
    %v4532 = vpop.trf.xlu0
    %v4533 = vpop.trf.xlu0
    %v4534 = vpop.trf.xlu0
    %v4535 = vpop.trf.xlu0
    %v4536 = vpop.trf.xlu0
    %v4537 = vpop.trf.xlu0
    %v4538 = vpop.trf.xlu0
    %v4539 = vpop.trf.xlu0
    %v4540 = vpop.trf.xlu0
    %v4541 = vpop.trf.xlu0
    %v4542 = vpop.trf.xlu0
    %v4543 = vpop.trf.xlu0
    %v4544 = vpop.trf.xlu0
    %v4545 = vpop.trf.xlu0
    %v4546 = vadd.f32 %v3779, %v4530
    %v4547 = vadd.f32 %v3784, %v4531
    %s4548 = scalar_lea.vmem [#allocation2], 16
    %4549 = vst [vmem:[%s4548] sm:$0xff] %v4546
    %4550 = vst [vmem:[%s4548 + $0x8] sm:$0xff] %v4547
    // Predicated region
    $region22: #{tpu_custom_call.1} parent=1 // pred_check
      _
    $region23: #{tpu_custom_call.1} parent=1 // pred_check_branch
      %4552 = sbr.rel (0) target = $region25
    $region24: #{tpu_custom_call.1} parent=1 // pred_region
      %s4554 = ssub.s32 512, 512
      %4555 = vsyncadd [#allocation3], %s4554
      %s4556 = sshll.u32 [#allocation2], 4
      %s4557 = int_to_ptr.vmem [resolvable:$true] %s4556
      %4562 = dma.vmem_to_hbm [thread:$0]  %s4557, 512, %s5, [#allocation3], 128, 128, 8
    $region25: #{tpu_custom_call.1} parent=1 // pred_fallthru
      _
    // Predicated region
    $region26: #{tpu_custom_call.1} parent=1 // pred_check
      _
    $region27: #{tpu_custom_call.1} parent=1 // pred_check_branch
      %4564 = sbr.rel (0) target = $region29
    $region28: #{tpu_custom_call.1} parent=1 // pred_region
      %4565 = dma.done [#allocation3], 512
    $region29: #{tpu_custom_call.1} parent=1 // pred_fallthru
      _
    %4566 = vsyncpa [#allocation3], 1

</llo_original>
